<compile_context>
chip_gen: v7x
topology: tpu7x:2x2x1
jax: 0.10.0
libtpu: 0.0.40
codegen_flags: <defaults>
</compile_context>

<pallas_src>
import functools

import jax
import jax.numpy as jnp
from jax import lax
from jax.experimental import pallas as pl
from jax.experimental.pallas import tpu as pltpu


def _round_up(v, m):
    return (v + m - 1) // m * m


def _shift2d(x, sh, sw):
    """rolled[h, w] = x[h - sh, w - sw] (jnp.roll semantics).

    Wrap-around values only land in the zero ring / masked region, so they
    never reach a valid output pixel."""
    if sh != 0:
        x = jnp.roll(x, sh, axis=0)
    if sw != 0:
        x = jnp.roll(x, sw, axis=1)
    return x


def _conv3x3_relu(planes, w_ref, b_ref, c_out, mask, *, mask_out):
    """'same' 3x3 conv + bias + ReLU on zero-ringed (Hp, Wp) planes.

    planes : list of c_in planes, each (Hp, Wp) f32, zero outside the image.
    w_ref  : SMEM ref, flattened (c_out, c_in, 3, 3) row-major.
    b_ref  : SMEM ref, shape (c_out,).
    mask   : (Hp, Wp) f32, 1.0 on the image interior, 0.0 elsewhere.
    """
    c_in = len(planes)
    # 9 shifted taps per input channel, shared across all output channels.
    taps = []
    for ci in range(c_in):
        t = []
        for kh in range(3):
            for kw in range(3):
                # tap[h, w] = plane[h + kh - 1, w + kw - 1]
                t.append(_shift2d(planes[ci], 1 - kh, 1 - kw))
        taps.append(t)

    outs = []
    for co in range(c_out):
        acc = jnp.zeros_like(planes[0]) + b_ref[co]
        for ci in range(c_in):
            base = (co * c_in + ci) * 9
            for k in range(9):
                acc = acc + w_ref[base + k] * taps[ci][k]
        acc = jnp.maximum(acc, 0.0)
        if mask_out:
            acc = acc * mask  # re-establish the zero ring for the next conv
        outs.append(acc)
    return outs


def _residual_kernel(w1_ref, b1_ref, w2_ref, b2_ref, w3_ref, b3_ref,
                     xpad_ref, out_ref, *, H, W):
    xp = xpad_ref[0]                      # (Hp, Wp), zero outside the interior
    Hp, Wp = xp.shape

    row = lax.broadcasted_iota(jnp.int32, (Hp, Wp), 0)
    col = lax.broadcasted_iota(jnp.int32, (Hp, Wp), 1)
    interior = (row >= 1) & (row <= H) & (col >= 1) & (col <= W)
    mask = jnp.where(interior, jnp.float32(1.0), jnp.float32(0.0))

    h1 = _conv3x3_relu([xp], w1_ref, b1_ref, 4, mask, mask_out=True)
    h2 = _conv3x3_relu(h1, w2_ref, b2_ref, 4, mask, mask_out=True)
    h3 = _conv3x3_relu(h2, w3_ref, b3_ref, 1, mask, mask_out=False)

    # Residual add; values outside the interior are garbage + 0 and are
    # sliced away by the wrapper.
    out_ref[0] = h3[0] + xp


def residual_network(x, params):
    """x: (batch, H, W) float32 -> (batch, H, W) float32."""
    w1, b1, w2, b2, w3, b3 = params
    batch, H, W = x.shape
    Hp = _round_up(H + 2, 8)     # sublane-aligned, includes the zero ring
    Wp = _round_up(W + 2, 128)   # lane-dense, includes the zero ring

    xpad = jnp.zeros((batch, Hp, Wp), x.dtype).at[:, 1:H + 1, 1:W + 1].set(x)

    kernel = functools.partial(_residual_kernel, H=H, W=W)
    smem_spec = lambda: pl.BlockSpec(memory_space=pltpu.MemorySpace.SMEM)

    out_pad = pl.pallas_call(
        kernel,
        out_shape=jax.ShapeDtypeStruct((batch, Hp, Wp), jnp.float32),
        grid=(batch,),
        in_specs=[smem_spec(), smem_spec(), smem_spec(),
                  smem_spec(), smem_spec(), smem_spec(),
                  pl.BlockSpec((1, Hp, Wp), lambda b: (b, 0, 0))],
        out_specs=pl.BlockSpec((1, Hp, Wp), lambda b: (b, 0, 0)),
        compiler_params=pltpu.CompilerParams(
            dimension_semantics=("parallel",)),
    )(w1.reshape(-1), b1.reshape(-1), w2.reshape(-1),
      b2.reshape(-1), w3.reshape(-1), b3.reshape(-1), xpad)

    return out_pad[:, 1:H + 1, 1:W + 1]


def _reference(x, params):
    """Pure-JAX/XLA reference mirroring ResidualNetwork.forward."""
    w1, b1, w2, b2, w3, b3 = params

    def conv_relu(y, w, b):
        out = lax.conv_general_dilated(
            y, w, window_strides=(1, 1), padding=((1, 1), (1, 1)),
            dimension_numbers=("NCHW", "OIHW", "NCHW"))
        return jax.nn.relu(out + b[None, :, None, None])

    y = x[:, None, :, :]
    y = conv_relu(y, w1, b1)
    y = conv_relu(y, w2, b2)
    y = conv_relu(y, w3, b3)
    return y[:, 0] + x


if __name__ == "__main__":
    batch, H, W = 2, 16, 16
    keys = jax.random.split(jax.random.PRNGKey(0), 7)
    x = jax.random.normal(keys[0], (batch, H, W), dtype=jnp.float32)
    w1 = 0.3 * jax.random.normal(keys[1], (4, 1, 3, 3), dtype=jnp.float32)
    b1 = 0.1 * jax.random.normal(keys[2], (4,), dtype=jnp.float32)
    w2 = 0.3 * jax.random.normal(keys[3], (4, 4, 3, 3), dtype=jnp.float32)
    b2 = 0.1 * jax.random.normal(keys[4], (4,), dtype=jnp.float32)
    w3 = 0.3 * jax.random.normal(keys[5], (1, 4, 3, 3), dtype=jnp.float32)
    b3 = 0.1 * jax.random.normal(keys[6], (1,), dtype=jnp.float32)
    params = (w1, b1, w2, b2, w3, b3)

    out = residual_network(x, params)
    out = jax.block_until_ready(out)

    ref = _reference(x, params)
    assert out.shape == (batch, H, W), out.shape
    assert out.dtype == jnp.float32
    assert bool(jnp.allclose(out, ref, atol=1e-4, rtol=1e-4)), (
        float(jnp.max(jnp.abs(out - ref))))

    print("KERNEL_OK")
</pallas_src>

<mosaic_0001>
module attributes {stable_mosaic.version = 11 : i64} {
  func.func @_residual_kernel(%arg0: i32, %arg1: memref<36xf32, #tpu.memory_space<smem>>, %arg2: memref<4xf32, #tpu.memory_space<smem>>, %arg3: memref<144xf32, #tpu.memory_space<smem>>, %arg4: memref<4xf32, #tpu.memory_space<smem>>, %arg5: memref<36xf32, #tpu.memory_space<smem>>, %arg6: memref<1xf32, #tpu.memory_space<smem>>, %arg7: memref<1x24x128xf32, #tpu.memory_space<vmem>>, %arg8: memref<1x24x128xf32, #tpu.memory_space<vmem>>) attributes {dimension_semantics = [#tpu.dimension_semantics<parallel>], iteration_bounds = array<i64: 2>, scalar_prefetch = 0 : i64, scratch_operands = 0 : i64, tpu.core_type = #tpu.core_type<tc>, window_params = [{transform_indices = @transform_0, window_bounds = array<i64: 36>}, {transform_indices = @transform_1, window_bounds = array<i64: 4>}, {transform_indices = @transform_2, window_bounds = array<i64: 144>}, {transform_indices = @transform_3, window_bounds = array<i64: 4>}, {transform_indices = @transform_4, window_bounds = array<i64: 36>}, {transform_indices = @transform_5, window_bounds = array<i64: 1>}, {transform_indices = @transform_6, window_bounds = array<i64: 1, 24, 128>}, {transform_indices = @transform_7, window_bounds = array<i64: 1, 24, 128>}]} {
    %c0 = arith.constant 0 : index
    %c0_0 = arith.constant 0 : index
    %c0_1 = arith.constant 0 : index
    %0 = vector.load %arg7[%c0, %c0_0, %c0_1] : memref<1x24x128xf32, #tpu.memory_space<vmem>>, vector<1x24x128xf32>
    %1 = vector.shape_cast %0 : vector<1x24x128xf32> to vector<24x128xf32>
    %2 = tpu.iota {dimensions = array<i32: 0>} : vector<24x128xi32>
    %3 = tpu.iota {dimensions = array<i32: 1>} : vector<24x128xi32>
    %c1_i32 = arith.constant 1 : i32
    %4 = vector.broadcast %c1_i32 : i32 to vector<24x128xi32>
    %5 = arith.cmpi sge, %2, %4 : vector<24x128xi32>
    %c16_i32 = arith.constant 16 : i32
    %6 = vector.broadcast %c16_i32 : i32 to vector<24x128xi32>
    %7 = arith.cmpi sle, %2, %6 : vector<24x128xi32>
    %8 = arith.andi %5, %7 : vector<24x128xi1>
    %c1_i32_2 = arith.constant 1 : i32
    %9 = vector.broadcast %c1_i32_2 : i32 to vector<24x128xi32>
    %10 = arith.cmpi sge, %3, %9 : vector<24x128xi32>
    %11 = arith.andi %8, %10 : vector<24x128xi1>
    %c16_i32_3 = arith.constant 16 : i32
    %12 = vector.broadcast %c16_i32_3 : i32 to vector<24x128xi32>
    %13 = arith.cmpi sle, %3, %12 : vector<24x128xi32>
    %14 = arith.andi %11, %13 : vector<24x128xi1>
    %cst = arith.constant 1.000000e+00 : f32
    %cst_4 = arith.constant 0.000000e+00 : f32
    %15 = vector.broadcast %cst : f32 to vector<24x128xf32>
    %16 = vector.broadcast %cst_4 : f32 to vector<24x128xf32>
    %17 = arith.select %14, %15, %16 : vector<24x128xi1>, vector<24x128xf32>
    %18 = vector.extract_strided_slice %1 {offsets = [23, 0], sizes = [1, 128], strides = [1, 1]} : vector<24x128xf32> to vector<1x128xf32>
    %19 = vector.extract_strided_slice %1 {offsets = [0, 0], sizes = [23, 128], strides = [1, 1]} : vector<24x128xf32> to vector<23x128xf32>
    %20 = tpu.concatenate %18, %19 in 0 : vector<1x128xf32>, vector<23x128xf32> -> vector<24x128xf32>
    %21 = vector.extract_strided_slice %20 {offsets = [0, 127], sizes = [24, 1], strides = [1, 1]} : vector<24x128xf32> to vector<24x1xf32>
    %22 = vector.extract_strided_slice %20 {offsets = [0, 0], sizes = [24, 127], strides = [1, 1]} : vector<24x128xf32> to vector<24x127xf32>
    %23 = tpu.concatenate %21, %22 in 1 : vector<24x1xf32>, vector<24x127xf32> -> vector<24x128xf32>
    %24 = vector.extract_strided_slice %1 {offsets = [23, 0], sizes = [1, 128], strides = [1, 1]} : vector<24x128xf32> to vector<1x128xf32>
    %25 = vector.extract_strided_slice %1 {offsets = [0, 0], sizes = [23, 128], strides = [1, 1]} : vector<24x128xf32> to vector<23x128xf32>
    %26 = tpu.concatenate %24, %25 in 0 : vector<1x128xf32>, vector<23x128xf32> -> vector<24x128xf32>
    %27 = vector.extract_strided_slice %1 {offsets = [23, 0], sizes = [1, 128], strides = [1, 1]} : vector<24x128xf32> to vector<1x128xf32>
    %28 = vector.extract_strided_slice %1 {offsets = [0, 0], sizes = [23, 128], strides = [1, 1]} : vector<24x128xf32> to vector<23x128xf32>
    %29 = tpu.concatenate %27, %28 in 0 : vector<1x128xf32>, vector<23x128xf32> -> vector<24x128xf32>
    %30 = vector.extract_strided_slice %29 {offsets = [0, 1], sizes = [24, 127], strides = [1, 1]} : vector<24x128xf32> to vector<24x127xf32>
    %31 = vector.extract_strided_slice %29 {offsets = [0, 0], sizes = [24, 1], strides = [1, 1]} : vector<24x128xf32> to vector<24x1xf32>
    %32 = tpu.concatenate %30, %31 in 1 : vector<24x127xf32>, vector<24x1xf32> -> vector<24x128xf32>
    %33 = vector.extract_strided_slice %1 {offsets = [0, 127], sizes = [24, 1], strides = [1, 1]} : vector<24x128xf32> to vector<24x1xf32>
    %34 = vector.extract_strided_slice %1 {offsets = [0, 0], sizes = [24, 127], strides = [1, 1]} : vector<24x128xf32> to vector<24x127xf32>
    %35 = tpu.concatenate %33, %34 in 1 : vector<24x1xf32>, vector<24x127xf32> -> vector<24x128xf32>
    %36 = vector.extract_strided_slice %1 {offsets = [0, 1], sizes = [24, 127], strides = [1, 1]} : vector<24x128xf32> to vector<24x127xf32>
    %37 = vector.extract_strided_slice %1 {offsets = [0, 0], sizes = [24, 1], strides = [1, 1]} : vector<24x128xf32> to vector<24x1xf32>
    %38 = tpu.concatenate %36, %37 in 1 : vector<24x127xf32>, vector<24x1xf32> -> vector<24x128xf32>
    %39 = vector.extract_strided_slice %1 {offsets = [1, 0], sizes = [23, 128], strides = [1, 1]} : vector<24x128xf32> to vector<23x128xf32>
    %40 = vector.extract_strided_slice %1 {offsets = [0, 0], sizes = [1, 128], strides = [1, 1]} : vector<24x128xf32> to vector<1x128xf32>
    %41 = tpu.concatenate %39, %40 in 0 : vector<23x128xf32>, vector<1x128xf32> -> vector<24x128xf32>
    %42 = vector.extract_strided_slice %41 {offsets = [0, 127], sizes = [24, 1], strides = [1, 1]} : vector<24x128xf32> to vector<24x1xf32>
    %43 = vector.extract_strided_slice %41 {offsets = [0, 0], sizes = [24, 127], strides = [1, 1]} : vector<24x128xf32> to vector<24x127xf32>
    %44 = tpu.concatenate %42, %43 in 1 : vector<24x1xf32>, vector<24x127xf32> -> vector<24x128xf32>
    %45 = vector.extract_strided_slice %1 {offsets = [1, 0], sizes = [23, 128], strides = [1, 1]} : vector<24x128xf32> to vector<23x128xf32>
    %46 = vector.extract_strided_slice %1 {offsets = [0, 0], sizes = [1, 128], strides = [1, 1]} : vector<24x128xf32> to vector<1x128xf32>
    %47 = tpu.concatenate %45, %46 in 0 : vector<23x128xf32>, vector<1x128xf32> -> vector<24x128xf32>
    %48 = vector.extract_strided_slice %1 {offsets = [1, 0], sizes = [23, 128], strides = [1, 1]} : vector<24x128xf32> to vector<23x128xf32>
    %49 = vector.extract_strided_slice %1 {offsets = [0, 0], sizes = [1, 128], strides = [1, 1]} : vector<24x128xf32> to vector<1x128xf32>
    %50 = tpu.concatenate %48, %49 in 0 : vector<23x128xf32>, vector<1x128xf32> -> vector<24x128xf32>
    %51 = vector.extract_strided_slice %50 {offsets = [0, 1], sizes = [24, 127], strides = [1, 1]} : vector<24x128xf32> to vector<24x127xf32>
    %52 = vector.extract_strided_slice %50 {offsets = [0, 0], sizes = [24, 1], strides = [1, 1]} : vector<24x128xf32> to vector<24x1xf32>
    %53 = tpu.concatenate %51, %52 in 1 : vector<24x127xf32>, vector<24x1xf32> -> vector<24x128xf32>
    %cst_5 = arith.constant 0.000000e+00 : f32
    %54 = vector.broadcast %cst_5 : f32 to vector<24x128xf32>
    %c0_6 = arith.constant 0 : index
    %55 = memref.load %arg2[%c0_6] : memref<4xf32, #tpu.memory_space<smem>>
    %56 = vector.broadcast %55 : f32 to vector<24x128xf32>
    %57 = arith.addf %54, %56 : vector<24x128xf32>
    %c0_7 = arith.constant 0 : index
    %58 = memref.load %arg1[%c0_7] : memref<36xf32, #tpu.memory_space<smem>>
    %59 = vector.broadcast %58 : f32 to vector<24x128xf32>
    %60 = arith.mulf %59, %23 : vector<24x128xf32>
    %61 = arith.addf %57, %60 : vector<24x128xf32>
    %c1 = arith.constant 1 : index
    %62 = memref.load %arg1[%c1] : memref<36xf32, #tpu.memory_space<smem>>
    %63 = vector.broadcast %62 : f32 to vector<24x128xf32>
    %64 = arith.mulf %63, %26 : vector<24x128xf32>
    %65 = arith.addf %61, %64 : vector<24x128xf32>
    %c2 = arith.constant 2 : index
    %66 = memref.load %arg1[%c2] : memref<36xf32, #tpu.memory_space<smem>>
    %67 = vector.broadcast %66 : f32 to vector<24x128xf32>
    %68 = arith.mulf %67, %32 : vector<24x128xf32>
    %69 = arith.addf %65, %68 : vector<24x128xf32>
    %c3 = arith.constant 3 : index
    %70 = memref.load %arg1[%c3] : memref<36xf32, #tpu.memory_space<smem>>
    %71 = vector.broadcast %70 : f32 to vector<24x128xf32>
    %72 = arith.mulf %71, %35 : vector<24x128xf32>
    %73 = arith.addf %69, %72 : vector<24x128xf32>
    %c4 = arith.constant 4 : index
    %74 = memref.load %arg1[%c4] : memref<36xf32, #tpu.memory_space<smem>>
    %75 = vector.broadcast %74 : f32 to vector<24x128xf32>
    %76 = arith.mulf %75, %1 : vector<24x128xf32>
    %77 = arith.addf %73, %76 : vector<24x128xf32>
    %c5 = arith.constant 5 : index
    %78 = memref.load %arg1[%c5] : memref<36xf32, #tpu.memory_space<smem>>
    %79 = vector.broadcast %78 : f32 to vector<24x128xf32>
    %80 = arith.mulf %79, %38 : vector<24x128xf32>
    %81 = arith.addf %77, %80 : vector<24x128xf32>
    %c6 = arith.constant 6 : index
    %82 = memref.load %arg1[%c6] : memref<36xf32, #tpu.memory_space<smem>>
    %83 = vector.broadcast %82 : f32 to vector<24x128xf32>
    %84 = arith.mulf %83, %44 : vector<24x128xf32>
    %85 = arith.addf %81, %84 : vector<24x128xf32>
    %c7 = arith.constant 7 : index
    %86 = memref.load %arg1[%c7] : memref<36xf32, #tpu.memory_space<smem>>
    %87 = vector.broadcast %86 : f32 to vector<24x128xf32>
    %88 = arith.mulf %87, %47 : vector<24x128xf32>
    %89 = arith.addf %85, %88 : vector<24x128xf32>
    %c8 = arith.constant 8 : index
    %90 = memref.load %arg1[%c8] : memref<36xf32, #tpu.memory_space<smem>>
    %91 = vector.broadcast %90 : f32 to vector<24x128xf32>
    %92 = arith.mulf %91, %53 : vector<24x128xf32>
    %93 = arith.addf %89, %92 : vector<24x128xf32>
    %cst_8 = arith.constant 0.000000e+00 : f32
    %94 = vector.broadcast %cst_8 : f32 to vector<24x128xf32>
    %95 = arith.maximumf %93, %94 : vector<24x128xf32>
    %96 = arith.mulf %95, %17 : vector<24x128xf32>
    %cst_9 = arith.constant 0.000000e+00 : f32
    %97 = vector.broadcast %cst_9 : f32 to vector<24x128xf32>
    %c1_10 = arith.constant 1 : index
    %98 = memref.load %arg2[%c1_10] : memref<4xf32, #tpu.memory_space<smem>>
    %99 = vector.broadcast %98 : f32 to vector<24x128xf32>
    %100 = arith.addf %97, %99 : vector<24x128xf32>
    %c9 = arith.constant 9 : index
    %101 = memref.load %arg1[%c9] : memref<36xf32, #tpu.memory_space<smem>>
    %102 = vector.broadcast %101 : f32 to vector<24x128xf32>
    %103 = arith.mulf %102, %23 : vector<24x128xf32>
    %104 = arith.addf %100, %103 : vector<24x128xf32>
    %c10 = arith.constant 10 : index
    %105 = memref.load %arg1[%c10] : memref<36xf32, #tpu.memory_space<smem>>
    %106 = vector.broadcast %105 : f32 to vector<24x128xf32>
    %107 = arith.mulf %106, %26 : vector<24x128xf32>
    %108 = arith.addf %104, %107 : vector<24x128xf32>
    %c11 = arith.constant 11 : index
    %109 = memref.load %arg1[%c11] : memref<36xf32, #tpu.memory_space<smem>>
    %110 = vector.broadcast %109 : f32 to vector<24x128xf32>
    %111 = arith.mulf %110, %32 : vector<24x128xf32>
    %112 = arith.addf %108, %111 : vector<24x128xf32>
    %c12 = arith.constant 12 : index
    %113 = memref.load %arg1[%c12] : memref<36xf32, #tpu.memory_space<smem>>
    %114 = vector.broadcast %113 : f32 to vector<24x128xf32>
    %115 = arith.mulf %114, %35 : vector<24x128xf32>
    %116 = arith.addf %112, %115 : vector<24x128xf32>
    %c13 = arith.constant 13 : index
    %117 = memref.load %arg1[%c13] : memref<36xf32, #tpu.memory_space<smem>>
    %118 = vector.broadcast %117 : f32 to vector<24x128xf32>
    %119 = arith.mulf %118, %1 : vector<24x128xf32>
    %120 = arith.addf %116, %119 : vector<24x128xf32>
    %c14 = arith.constant 14 : index
    %121 = memref.load %arg1[%c14] : memref<36xf32, #tpu.memory_space<smem>>
    %122 = vector.broadcast %121 : f32 to vector<24x128xf32>
    %123 = arith.mulf %122, %38 : vector<24x128xf32>
    %124 = arith.addf %120, %123 : vector<24x128xf32>
    %c15 = arith.constant 15 : index
    %125 = memref.load %arg1[%c15] : memref<36xf32, #tpu.memory_space<smem>>
    %126 = vector.broadcast %125 : f32 to vector<24x128xf32>
    %127 = arith.mulf %126, %44 : vector<24x128xf32>
    %128 = arith.addf %124, %127 : vector<24x128xf32>
    %c16 = arith.constant 16 : index
    %129 = memref.load %arg1[%c16] : memref<36xf32, #tpu.memory_space<smem>>
    %130 = vector.broadcast %129 : f32 to vector<24x128xf32>
    %131 = arith.mulf %130, %47 : vector<24x128xf32>
    %132 = arith.addf %128, %131 : vector<24x128xf32>
    %c17 = arith.constant 17 : index
    %133 = memref.load %arg1[%c17] : memref<36xf32, #tpu.memory_space<smem>>
    %134 = vector.broadcast %133 : f32 to vector<24x128xf32>
    %135 = arith.mulf %134, %53 : vector<24x128xf32>
    %136 = arith.addf %132, %135 : vector<24x128xf32>
    %cst_11 = arith.constant 0.000000e+00 : f32
    %137 = vector.broadcast %cst_11 : f32 to vector<24x128xf32>
    %138 = arith.maximumf %136, %137 : vector<24x128xf32>
    %139 = arith.mulf %138, %17 : vector<24x128xf32>
    %cst_12 = arith.constant 0.000000e+00 : f32
    %140 = vector.broadcast %cst_12 : f32 to vector<24x128xf32>
    %c2_13 = arith.constant 2 : index
    %141 = memref.load %arg2[%c2_13] : memref<4xf32, #tpu.memory_space<smem>>
    %142 = vector.broadcast %141 : f32 to vector<24x128xf32>
    %143 = arith.addf %140, %142 : vector<24x128xf32>
    %c18 = arith.constant 18 : index
    %144 = memref.load %arg1[%c18] : memref<36xf32, #tpu.memory_space<smem>>
    %145 = vector.broadcast %144 : f32 to vector<24x128xf32>
    %146 = arith.mulf %145, %23 : vector<24x128xf32>
    %147 = arith.addf %143, %146 : vector<24x128xf32>
    %c19 = arith.constant 19 : index
    %148 = memref.load %arg1[%c19] : memref<36xf32, #tpu.memory_space<smem>>
    %149 = vector.broadcast %148 : f32 to vector<24x128xf32>
    %150 = arith.mulf %149, %26 : vector<24x128xf32>
    %151 = arith.addf %147, %150 : vector<24x128xf32>
    %c20 = arith.constant 20 : index
    %152 = memref.load %arg1[%c20] : memref<36xf32, #tpu.memory_space<smem>>
    %153 = vector.broadcast %152 : f32 to vector<24x128xf32>
    %154 = arith.mulf %153, %32 : vector<24x128xf32>
    %155 = arith.addf %151, %154 : vector<24x128xf32>
    %c21 = arith.constant 21 : index
    %156 = memref.load %arg1[%c21] : memref<36xf32, #tpu.memory_space<smem>>
    %157 = vector.broadcast %156 : f32 to vector<24x128xf32>
    %158 = arith.mulf %157, %35 : vector<24x128xf32>
    %159 = arith.addf %155, %158 : vector<24x128xf32>
    %c22 = arith.constant 22 : index
    %160 = memref.load %arg1[%c22] : memref<36xf32, #tpu.memory_space<smem>>
    %161 = vector.broadcast %160 : f32 to vector<24x128xf32>
    %162 = arith.mulf %161, %1 : vector<24x128xf32>
    %163 = arith.addf %159, %162 : vector<24x128xf32>
    %c23 = arith.constant 23 : index
    %164 = memref.load %arg1[%c23] : memref<36xf32, #tpu.memory_space<smem>>
    %165 = vector.broadcast %164 : f32 to vector<24x128xf32>
    %166 = arith.mulf %165, %38 : vector<24x128xf32>
    %167 = arith.addf %163, %166 : vector<24x128xf32>
    %c24 = arith.constant 24 : index
    %168 = memref.load %arg1[%c24] : memref<36xf32, #tpu.memory_space<smem>>
    %169 = vector.broadcast %168 : f32 to vector<24x128xf32>
    %170 = arith.mulf %169, %44 : vector<24x128xf32>
    %171 = arith.addf %167, %170 : vector<24x128xf32>
    %c25 = arith.constant 25 : index
    %172 = memref.load %arg1[%c25] : memref<36xf32, #tpu.memory_space<smem>>
    %173 = vector.broadcast %172 : f32 to vector<24x128xf32>
    %174 = arith.mulf %173, %47 : vector<24x128xf32>
    %175 = arith.addf %171, %174 : vector<24x128xf32>
    %c26 = arith.constant 26 : index
    %176 = memref.load %arg1[%c26] : memref<36xf32, #tpu.memory_space<smem>>
    %177 = vector.broadcast %176 : f32 to vector<24x128xf32>
    %178 = arith.mulf %177, %53 : vector<24x128xf32>
    %179 = arith.addf %175, %178 : vector<24x128xf32>
    %cst_14 = arith.constant 0.000000e+00 : f32
    %180 = vector.broadcast %cst_14 : f32 to vector<24x128xf32>
    %181 = arith.maximumf %179, %180 : vector<24x128xf32>
    %182 = arith.mulf %181, %17 : vector<24x128xf32>
    %cst_15 = arith.constant 0.000000e+00 : f32
    %183 = vector.broadcast %cst_15 : f32 to vector<24x128xf32>
    %c3_16 = arith.constant 3 : index
    %184 = memref.load %arg2[%c3_16] : memref<4xf32, #tpu.memory_space<smem>>
    %185 = vector.broadcast %184 : f32 to vector<24x128xf32>
    %186 = arith.addf %183, %185 : vector<24x128xf32>
    %c27 = arith.constant 27 : index
    %187 = memref.load %arg1[%c27] : memref<36xf32, #tpu.memory_space<smem>>
    %188 = vector.broadcast %187 : f32 to vector<24x128xf32>
    %189 = arith.mulf %188, %23 : vector<24x128xf32>
    %190 = arith.addf %186, %189 : vector<24x128xf32>
    %c28 = arith.constant 28 : index
    %191 = memref.load %arg1[%c28] : memref<36xf32, #tpu.memory_space<smem>>
    %192 = vector.broadcast %191 : f32 to vector<24x128xf32>
    %193 = arith.mulf %192, %26 : vector<24x128xf32>
    %194 = arith.addf %190, %193 : vector<24x128xf32>
    %c29 = arith.constant 29 : index
    %195 = memref.load %arg1[%c29] : memref<36xf32, #tpu.memory_space<smem>>
    %196 = vector.broadcast %195 : f32 to vector<24x128xf32>
    %197 = arith.mulf %196, %32 : vector<24x128xf32>
    %198 = arith.addf %194, %197 : vector<24x128xf32>
    %c30 = arith.constant 30 : index
    %199 = memref.load %arg1[%c30] : memref<36xf32, #tpu.memory_space<smem>>
    %200 = vector.broadcast %199 : f32 to vector<24x128xf32>
    %201 = arith.mulf %200, %35 : vector<24x128xf32>
    %202 = arith.addf %198, %201 : vector<24x128xf32>
    %c31 = arith.constant 31 : index
    %203 = memref.load %arg1[%c31] : memref<36xf32, #tpu.memory_space<smem>>
    %204 = vector.broadcast %203 : f32 to vector<24x128xf32>
    %205 = arith.mulf %204, %1 : vector<24x128xf32>
    %206 = arith.addf %202, %205 : vector<24x128xf32>
    %c32 = arith.constant 32 : index
    %207 = memref.load %arg1[%c32] : memref<36xf32, #tpu.memory_space<smem>>
    %208 = vector.broadcast %207 : f32 to vector<24x128xf32>
    %209 = arith.mulf %208, %38 : vector<24x128xf32>
    %210 = arith.addf %206, %209 : vector<24x128xf32>
    %c33 = arith.constant 33 : index
    %211 = memref.load %arg1[%c33] : memref<36xf32, #tpu.memory_space<smem>>
    %212 = vector.broadcast %211 : f32 to vector<24x128xf32>
    %213 = arith.mulf %212, %44 : vector<24x128xf32>
    %214 = arith.addf %210, %213 : vector<24x128xf32>
    %c34 = arith.constant 34 : index
    %215 = memref.load %arg1[%c34] : memref<36xf32, #tpu.memory_space<smem>>
    %216 = vector.broadcast %215 : f32 to vector<24x128xf32>
    %217 = arith.mulf %216, %47 : vector<24x128xf32>
    %218 = arith.addf %214, %217 : vector<24x128xf32>
    %c35 = arith.constant 35 : index
    %219 = memref.load %arg1[%c35] : memref<36xf32, #tpu.memory_space<smem>>
    %220 = vector.broadcast %219 : f32 to vector<24x128xf32>
    %221 = arith.mulf %220, %53 : vector<24x128xf32>
    %222 = arith.addf %218, %221 : vector<24x128xf32>
    %cst_17 = arith.constant 0.000000e+00 : f32
    %223 = vector.broadcast %cst_17 : f32 to vector<24x128xf32>
    %224 = arith.maximumf %222, %223 : vector<24x128xf32>
    %225 = arith.mulf %224, %17 : vector<24x128xf32>
    %226 = vector.extract_strided_slice %96 {offsets = [23, 0], sizes = [1, 128], strides = [1, 1]} : vector<24x128xf32> to vector<1x128xf32>
    %227 = vector.extract_strided_slice %96 {offsets = [0, 0], sizes = [23, 128], strides = [1, 1]} : vector<24x128xf32> to vector<23x128xf32>
    %228 = tpu.concatenate %226, %227 in 0 : vector<1x128xf32>, vector<23x128xf32> -> vector<24x128xf32>
    %229 = vector.extract_strided_slice %228 {offsets = [0, 127], sizes = [24, 1], strides = [1, 1]} : vector<24x128xf32> to vector<24x1xf32>
    %230 = vector.extract_strided_slice %228 {offsets = [0, 0], sizes = [24, 127], strides = [1, 1]} : vector<24x128xf32> to vector<24x127xf32>
    %231 = tpu.concatenate %229, %230 in 1 : vector<24x1xf32>, vector<24x127xf32> -> vector<24x128xf32>
    %232 = vector.extract_strided_slice %96 {offsets = [23, 0], sizes = [1, 128], strides = [1, 1]} : vector<24x128xf32> to vector<1x128xf32>
    %233 = vector.extract_strided_slice %96 {offsets = [0, 0], sizes = [23, 128], strides = [1, 1]} : vector<24x128xf32> to vector<23x128xf32>
    %234 = tpu.concatenate %232, %233 in 0 : vector<1x128xf32>, vector<23x128xf32> -> vector<24x128xf32>
    %235 = vector.extract_strided_slice %96 {offsets = [23, 0], sizes = [1, 128], strides = [1, 1]} : vector<24x128xf32> to vector<1x128xf32>
    %236 = vector.extract_strided_slice %96 {offsets = [0, 0], sizes = [23, 128], strides = [1, 1]} : vector<24x128xf32> to vector<23x128xf32>
    %237 = tpu.concatenate %235, %236 in 0 : vector<1x128xf32>, vector<23x128xf32> -> vector<24x128xf32>
    %238 = vector.extract_strided_slice %237 {offsets = [0, 1], sizes = [24, 127], strides = [1, 1]} : vector<24x128xf32> to vector<24x127xf32>
    %239 = vector.extract_strided_slice %237 {offsets = [0, 0], sizes = [24, 1], strides = [1, 1]} : vector<24x128xf32> to vector<24x1xf32>
    %240 = tpu.concatenate %238, %239 in 1 : vector<24x127xf32>, vector<24x1xf32> -> vector<24x128xf32>
    %241 = vector.extract_strided_slice %96 {offsets = [0, 127], sizes = [24, 1], strides = [1, 1]} : vector<24x128xf32> to vector<24x1xf32>
    %242 = vector.extract_strided_slice %96 {offsets = [0, 0], sizes = [24, 127], strides = [1, 1]} : vector<24x128xf32> to vector<24x127xf32>
    %243 = tpu.concatenate %241, %242 in 1 : vector<24x1xf32>, vector<24x127xf32> -> vector<24x128xf32>
    %244 = vector.extract_strided_slice %96 {offsets = [0, 1], sizes = [24, 127], strides = [1, 1]} : vector<24x128xf32> to vector<24x127xf32>
    %245 = vector.extract_strided_slice %96 {offsets = [0, 0], sizes = [24, 1], strides = [1, 1]} : vector<24x128xf32> to vector<24x1xf32>
    %246 = tpu.concatenate %244, %245 in 1 : vector<24x127xf32>, vector<24x1xf32> -> vector<24x128xf32>
    %247 = vector.extract_strided_slice %96 {offsets = [1, 0], sizes = [23, 128], strides = [1, 1]} : vector<24x128xf32> to vector<23x128xf32>
    %248 = vector.extract_strided_slice %96 {offsets = [0, 0], sizes = [1, 128], strides = [1, 1]} : vector<24x128xf32> to vector<1x128xf32>
    %249 = tpu.concatenate %247, %248 in 0 : vector<23x128xf32>, vector<1x128xf32> -> vector<24x128xf32>
    %250 = vector.extract_strided_slice %249 {offsets = [0, 127], sizes = [24, 1], strides = [1, 1]} : vector<24x128xf32> to vector<24x1xf32>
    %251 = vector.extract_strided_slice %249 {offsets = [0, 0], sizes = [24, 127], strides = [1, 1]} : vector<24x128xf32> to vector<24x127xf32>
    %252 = tpu.concatenate %250, %251 in 1 : vector<24x1xf32>, vector<24x127xf32> -> vector<24x128xf32>
    %253 = vector.extract_strided_slice %96 {offsets = [1, 0], sizes = [23, 128], strides = [1, 1]} : vector<24x128xf32> to vector<23x128xf32>
    %254 = vector.extract_strided_slice %96 {offsets = [0, 0], sizes = [1, 128], strides = [1, 1]} : vector<24x128xf32> to vector<1x128xf32>
    %255 = tpu.concatenate %253, %254 in 0 : vector<23x128xf32>, vector<1x128xf32> -> vector<24x128xf32>
    %256 = vector.extract_strided_slice %96 {offsets = [1, 0], sizes = [23, 128], strides = [1, 1]} : vector<24x128xf32> to vector<23x128xf32>
    %257 = vector.extract_strided_slice %96 {offsets = [0, 0], sizes = [1, 128], strides = [1, 1]} : vector<24x128xf32> to vector<1x128xf32>
    %258 = tpu.concatenate %256, %257 in 0 : vector<23x128xf32>, vector<1x128xf32> -> vector<24x128xf32>
    %259 = vector.extract_strided_slice %258 {offsets = [0, 1], sizes = [24, 127], strides = [1, 1]} : vector<24x128xf32> to vector<24x127xf32>
    %260 = vector.extract_strided_slice %258 {offsets = [0, 0], sizes = [24, 1], strides = [1, 1]} : vector<24x128xf32> to vector<24x1xf32>
    %261 = tpu.concatenate %259, %260 in 1 : vector<24x127xf32>, vector<24x1xf32> -> vector<24x128xf32>
    %262 = vector.extract_strided_slice %139 {offsets = [23, 0], sizes = [1, 128], strides = [1, 1]} : vector<24x128xf32> to vector<1x128xf32>
    %263 = vector.extract_strided_slice %139 {offsets = [0, 0], sizes = [23, 128], strides = [1, 1]} : vector<24x128xf32> to vector<23x128xf32>
    %264 = tpu.concatenate %262, %263 in 0 : vector<1x128xf32>, vector<23x128xf32> -> vector<24x128xf32>
    %265 = vector.extract_strided_slice %264 {offsets = [0, 127], sizes = [24, 1], strides = [1, 1]} : vector<24x128xf32> to vector<24x1xf32>
    %266 = vector.extract_strided_slice %264 {offsets = [0, 0], sizes = [24, 127], strides = [1, 1]} : vector<24x128xf32> to vector<24x127xf32>
    %267 = tpu.concatenate %265, %266 in 1 : vector<24x1xf32>, vector<24x127xf32> -> vector<24x128xf32>
    %268 = vector.extract_strided_slice %139 {offsets = [23, 0], sizes = [1, 128], strides = [1, 1]} : vector<24x128xf32> to vector<1x128xf32>
    %269 = vector.extract_strided_slice %139 {offsets = [0, 0], sizes = [23, 128], strides = [1, 1]} : vector<24x128xf32> to vector<23x128xf32>
    %270 = tpu.concatenate %268, %269 in 0 : vector<1x128xf32>, vector<23x128xf32> -> vector<24x128xf32>
    %271 = vector.extract_strided_slice %139 {offsets = [23, 0], sizes = [1, 128], strides = [1, 1]} : vector<24x128xf32> to vector<1x128xf32>
    %272 = vector.extract_strided_slice %139 {offsets = [0, 0], sizes = [23, 128], strides = [1, 1]} : vector<24x128xf32> to vector<23x128xf32>
    %273 = tpu.concatenate %271, %272 in 0 : vector<1x128xf32>, vector<23x128xf32> -> vector<24x128xf32>
    %274 = vector.extract_strided_slice %273 {offsets = [0, 1], sizes = [24, 127], strides = [1, 1]} : vector<24x128xf32> to vector<24x127xf32>
    %275 = vector.extract_strided_slice %273 {offsets = [0, 0], sizes = [24, 1], strides = [1, 1]} : vector<24x128xf32> to vector<24x1xf32>
    %276 = tpu.concatenate %274, %275 in 1 : vector<24x127xf32>, vector<24x1xf32> -> vector<24x128xf32>
    %277 = vector.extract_strided_slice %139 {offsets = [0, 127], sizes = [24, 1], strides = [1, 1]} : vector<24x128xf32> to vector<24x1xf32>
    %278 = vector.extract_strided_slice %139 {offsets = [0, 0], sizes = [24, 127], strides = [1, 1]} : vector<24x128xf32> to vector<24x127xf32>
    %279 = tpu.concatenate %277, %278 in 1 : vector<24x1xf32>, vector<24x127xf32> -> vector<24x128xf32>
    %280 = vector.extract_strided_slice %139 {offsets = [0, 1], sizes = [24, 127], strides = [1, 1]} : vector<24x128xf32> to vector<24x127xf32>
    %281 = vector.extract_strided_slice %139 {offsets = [0, 0], sizes = [24, 1], strides = [1, 1]} : vector<24x128xf32> to vector<24x1xf32>
    %282 = tpu.concatenate %280, %281 in 1 : vector<24x127xf32>, vector<24x1xf32> -> vector<24x128xf32>
    %283 = vector.extract_strided_slice %139 {offsets = [1, 0], sizes = [23, 128], strides = [1, 1]} : vector<24x128xf32> to vector<23x128xf32>
    %284 = vector.extract_strided_slice %139 {offsets = [0, 0], sizes = [1, 128], strides = [1, 1]} : vector<24x128xf32> to vector<1x128xf32>
    %285 = tpu.concatenate %283, %284 in 0 : vector<23x128xf32>, vector<1x128xf32> -> vector<24x128xf32>
    %286 = vector.extract_strided_slice %285 {offsets = [0, 127], sizes = [24, 1], strides = [1, 1]} : vector<24x128xf32> to vector<24x1xf32>
    %287 = vector.extract_strided_slice %285 {offsets = [0, 0], sizes = [24, 127], strides = [1, 1]} : vector<24x128xf32> to vector<24x127xf32>
    %288 = tpu.concatenate %286, %287 in 1 : vector<24x1xf32>, vector<24x127xf32> -> vector<24x128xf32>
    %289 = vector.extract_strided_slice %139 {offsets = [1, 0], sizes = [23, 128], strides = [1, 1]} : vector<24x128xf32> to vector<23x128xf32>
    %290 = vector.extract_strided_slice %139 {offsets = [0, 0], sizes = [1, 128], strides = [1, 1]} : vector<24x128xf32> to vector<1x128xf32>
    %291 = tpu.concatenate %289, %290 in 0 : vector<23x128xf32>, vector<1x128xf32> -> vector<24x128xf32>
    %292 = vector.extract_strided_slice %139 {offsets = [1, 0], sizes = [23, 128], strides = [1, 1]} : vector<24x128xf32> to vector<23x128xf32>
    %293 = vector.extract_strided_slice %139 {offsets = [0, 0], sizes = [1, 128], strides = [1, 1]} : vector<24x128xf32> to vector<1x128xf32>
    %294 = tpu.concatenate %292, %293 in 0 : vector<23x128xf32>, vector<1x128xf32> -> vector<24x128xf32>
    %295 = vector.extract_strided_slice %294 {offsets = [0, 1], sizes = [24, 127], strides = [1, 1]} : vector<24x128xf32> to vector<24x127xf32>
    %296 = vector.extract_strided_slice %294 {offsets = [0, 0], sizes = [24, 1], strides = [1, 1]} : vector<24x128xf32> to vector<24x1xf32>
    %297 = tpu.concatenate %295, %296 in 1 : vector<24x127xf32>, vector<24x1xf32> -> vector<24x128xf32>
    %298 = vector.extract_strided_slice %182 {offsets = [23, 0], sizes = [1, 128], strides = [1, 1]} : vector<24x128xf32> to vector<1x128xf32>
    %299 = vector.extract_strided_slice %182 {offsets = [0, 0], sizes = [23, 128], strides = [1, 1]} : vector<24x128xf32> to vector<23x128xf32>
    %300 = tpu.concatenate %298, %299 in 0 : vector<1x128xf32>, vector<23x128xf32> -> vector<24x128xf32>
    %301 = vector.extract_strided_slice %300 {offsets = [0, 127], sizes = [24, 1], strides = [1, 1]} : vector<24x128xf32> to vector<24x1xf32>
    %302 = vector.extract_strided_slice %300 {offsets = [0, 0], sizes = [24, 127], strides = [1, 1]} : vector<24x128xf32> to vector<24x127xf32>
    %303 = tpu.concatenate %301, %302 in 1 : vector<24x1xf32>, vector<24x127xf32> -> vector<24x128xf32>
    %304 = vector.extract_strided_slice %182 {offsets = [23, 0], sizes = [1, 128], strides = [1, 1]} : vector<24x128xf32> to vector<1x128xf32>
    %305 = vector.extract_strided_slice %182 {offsets = [0, 0], sizes = [23, 128], strides = [1, 1]} : vector<24x128xf32> to vector<23x128xf32>
    %306 = tpu.concatenate %304, %305 in 0 : vector<1x128xf32>, vector<23x128xf32> -> vector<24x128xf32>
    %307 = vector.extract_strided_slice %182 {offsets = [23, 0], sizes = [1, 128], strides = [1, 1]} : vector<24x128xf32> to vector<1x128xf32>
    %308 = vector.extract_strided_slice %182 {offsets = [0, 0], sizes = [23, 128], strides = [1, 1]} : vector<24x128xf32> to vector<23x128xf32>
    %309 = tpu.concatenate %307, %308 in 0 : vector<1x128xf32>, vector<23x128xf32> -> vector<24x128xf32>
    %310 = vector.extract_strided_slice %309 {offsets = [0, 1], sizes = [24, 127], strides = [1, 1]} : vector<24x128xf32> to vector<24x127xf32>
    %311 = vector.extract_strided_slice %309 {offsets = [0, 0], sizes = [24, 1], strides = [1, 1]} : vector<24x128xf32> to vector<24x1xf32>
    %312 = tpu.concatenate %310, %311 in 1 : vector<24x127xf32>, vector<24x1xf32> -> vector<24x128xf32>
    %313 = vector.extract_strided_slice %182 {offsets = [0, 127], sizes = [24, 1], strides = [1, 1]} : vector<24x128xf32> to vector<24x1xf32>
    %314 = vector.extract_strided_slice %182 {offsets = [0, 0], sizes = [24, 127], strides = [1, 1]} : vector<24x128xf32> to vector<24x127xf32>
    %315 = tpu.concatenate %313, %314 in 1 : vector<24x1xf32>, vector<24x127xf32> -> vector<24x128xf32>
    %316 = vector.extract_strided_slice %182 {offsets = [0, 1], sizes = [24, 127], strides = [1, 1]} : vector<24x128xf32> to vector<24x127xf32>
    %317 = vector.extract_strided_slice %182 {offsets = [0, 0], sizes = [24, 1], strides = [1, 1]} : vector<24x128xf32> to vector<24x1xf32>
    %318 = tpu.concatenate %316, %317 in 1 : vector<24x127xf32>, vector<24x1xf32> -> vector<24x128xf32>
    %319 = vector.extract_strided_slice %182 {offsets = [1, 0], sizes = [23, 128], strides = [1, 1]} : vector<24x128xf32> to vector<23x128xf32>
    %320 = vector.extract_strided_slice %182 {offsets = [0, 0], sizes = [1, 128], strides = [1, 1]} : vector<24x128xf32> to vector<1x128xf32>
    %321 = tpu.concatenate %319, %320 in 0 : vector<23x128xf32>, vector<1x128xf32> -> vector<24x128xf32>
    %322 = vector.extract_strided_slice %321 {offsets = [0, 127], sizes = [24, 1], strides = [1, 1]} : vector<24x128xf32> to vector<24x1xf32>
    %323 = vector.extract_strided_slice %321 {offsets = [0, 0], sizes = [24, 127], strides = [1, 1]} : vector<24x128xf32> to vector<24x127xf32>
    %324 = tpu.concatenate %322, %323 in 1 : vector<24x1xf32>, vector<24x127xf32> -> vector<24x128xf32>
    %325 = vector.extract_strided_slice %182 {offsets = [1, 0], sizes = [23, 128], strides = [1, 1]} : vector<24x128xf32> to vector<23x128xf32>
    %326 = vector.extract_strided_slice %182 {offsets = [0, 0], sizes = [1, 128], strides = [1, 1]} : vector<24x128xf32> to vector<1x128xf32>
    %327 = tpu.concatenate %325, %326 in 0 : vector<23x128xf32>, vector<1x128xf32> -> vector<24x128xf32>
    %328 = vector.extract_strided_slice %182 {offsets = [1, 0], sizes = [23, 128], strides = [1, 1]} : vector<24x128xf32> to vector<23x128xf32>
    %329 = vector.extract_strided_slice %182 {offsets = [0, 0], sizes = [1, 128], strides = [1, 1]} : vector<24x128xf32> to vector<1x128xf32>
    %330 = tpu.concatenate %328, %329 in 0 : vector<23x128xf32>, vector<1x128xf32> -> vector<24x128xf32>
    %331 = vector.extract_strided_slice %330 {offsets = [0, 1], sizes = [24, 127], strides = [1, 1]} : vector<24x128xf32> to vector<24x127xf32>
    %332 = vector.extract_strided_slice %330 {offsets = [0, 0], sizes = [24, 1], strides = [1, 1]} : vector<24x128xf32> to vector<24x1xf32>
    %333 = tpu.concatenate %331, %332 in 1 : vector<24x127xf32>, vector<24x1xf32> -> vector<24x128xf32>
    %334 = vector.extract_strided_slice %225 {offsets = [23, 0], sizes = [1, 128], strides = [1, 1]} : vector<24x128xf32> to vector<1x128xf32>
    %335 = vector.extract_strided_slice %225 {offsets = [0, 0], sizes = [23, 128], strides = [1, 1]} : vector<24x128xf32> to vector<23x128xf32>
    %336 = tpu.concatenate %334, %335 in 0 : vector<1x128xf32>, vector<23x128xf32> -> vector<24x128xf32>
    %337 = vector.extract_strided_slice %336 {offsets = [0, 127], sizes = [24, 1], strides = [1, 1]} : vector<24x128xf32> to vector<24x1xf32>
    %338 = vector.extract_strided_slice %336 {offsets = [0, 0], sizes = [24, 127], strides = [1, 1]} : vector<24x128xf32> to vector<24x127xf32>
    %339 = tpu.concatenate %337, %338 in 1 : vector<24x1xf32>, vector<24x127xf32> -> vector<24x128xf32>
    %340 = vector.extract_strided_slice %225 {offsets = [23, 0], sizes = [1, 128], strides = [1, 1]} : vector<24x128xf32> to vector<1x128xf32>
    %341 = vector.extract_strided_slice %225 {offsets = [0, 0], sizes = [23, 128], strides = [1, 1]} : vector<24x128xf32> to vector<23x128xf32>
    %342 = tpu.concatenate %340, %341 in 0 : vector<1x128xf32>, vector<23x128xf32> -> vector<24x128xf32>
    %343 = vector.extract_strided_slice %225 {offsets = [23, 0], sizes = [1, 128], strides = [1, 1]} : vector<24x128xf32> to vector<1x128xf32>
    %344 = vector.extract_strided_slice %225 {offsets = [0, 0], sizes = [23, 128], strides = [1, 1]} : vector<24x128xf32> to vector<23x128xf32>
    %345 = tpu.concatenate %343, %344 in 0 : vector<1x128xf32>, vector<23x128xf32> -> vector<24x128xf32>
    %346 = vector.extract_strided_slice %345 {offsets = [0, 1], sizes = [24, 127], strides = [1, 1]} : vector<24x128xf32> to vector<24x127xf32>
    %347 = vector.extract_strided_slice %345 {offsets = [0, 0], sizes = [24, 1], strides = [1, 1]} : vector<24x128xf32> to vector<24x1xf32>
    %348 = tpu.concatenate %346, %347 in 1 : vector<24x127xf32>, vector<24x1xf32> -> vector<24x128xf32>
    %349 = vector.extract_strided_slice %225 {offsets = [0, 127], sizes = [24, 1], strides = [1, 1]} : vector<24x128xf32> to vector<24x1xf32>
    %350 = vector.extract_strided_slice %225 {offsets = [0, 0], sizes = [24, 127], strides = [1, 1]} : vector<24x128xf32> to vector<24x127xf32>
    %351 = tpu.concatenate %349, %350 in 1 : vector<24x1xf32>, vector<24x127xf32> -> vector<24x128xf32>
    %352 = vector.extract_strided_slice %225 {offsets = [0, 1], sizes = [24, 127], strides = [1, 1]} : vector<24x128xf32> to vector<24x127xf32>
    %353 = vector.extract_strided_slice %225 {offsets = [0, 0], sizes = [24, 1], strides = [1, 1]} : vector<24x128xf32> to vector<24x1xf32>
    %354 = tpu.concatenate %352, %353 in 1 : vector<24x127xf32>, vector<24x1xf32> -> vector<24x128xf32>
    %355 = vector.extract_strided_slice %225 {offsets = [1, 0], sizes = [23, 128], strides = [1, 1]} : vector<24x128xf32> to vector<23x128xf32>
    %356 = vector.extract_strided_slice %225 {offsets = [0, 0], sizes = [1, 128], strides = [1, 1]} : vector<24x128xf32> to vector<1x128xf32>
    %357 = tpu.concatenate %355, %356 in 0 : vector<23x128xf32>, vector<1x128xf32> -> vector<24x128xf32>
    %358 = vector.extract_strided_slice %357 {offsets = [0, 127], sizes = [24, 1], strides = [1, 1]} : vector<24x128xf32> to vector<24x1xf32>
    %359 = vector.extract_strided_slice %357 {offsets = [0, 0], sizes = [24, 127], strides = [1, 1]} : vector<24x128xf32> to vector<24x127xf32>
    %360 = tpu.concatenate %358, %359 in 1 : vector<24x1xf32>, vector<24x127xf32> -> vector<24x128xf32>
    %361 = vector.extract_strided_slice %225 {offsets = [1, 0], sizes = [23, 128], strides = [1, 1]} : vector<24x128xf32> to vector<23x128xf32>
    %362 = vector.extract_strided_slice %225 {offsets = [0, 0], sizes = [1, 128], strides = [1, 1]} : vector<24x128xf32> to vector<1x128xf32>
    %363 = tpu.concatenate %361, %362 in 0 : vector<23x128xf32>, vector<1x128xf32> -> vector<24x128xf32>
    %364 = vector.extract_strided_slice %225 {offsets = [1, 0], sizes = [23, 128], strides = [1, 1]} : vector<24x128xf32> to vector<23x128xf32>
    %365 = vector.extract_strided_slice %225 {offsets = [0, 0], sizes = [1, 128], strides = [1, 1]} : vector<24x128xf32> to vector<1x128xf32>
    %366 = tpu.concatenate %364, %365 in 0 : vector<23x128xf32>, vector<1x128xf32> -> vector<24x128xf32>
    %367 = vector.extract_strided_slice %366 {offsets = [0, 1], sizes = [24, 127], strides = [1, 1]} : vector<24x128xf32> to vector<24x127xf32>
    %368 = vector.extract_strided_slice %366 {offsets = [0, 0], sizes = [24, 1], strides = [1, 1]} : vector<24x128xf32> to vector<24x1xf32>
    %369 = tpu.concatenate %367, %368 in 1 : vector<24x127xf32>, vector<24x1xf32> -> vector<24x128xf32>
    %cst_18 = arith.constant 0.000000e+00 : f32
    %370 = vector.broadcast %cst_18 : f32 to vector<24x128xf32>
    %c0_19 = arith.constant 0 : index
    %371 = memref.load %arg4[%c0_19] : memref<4xf32, #tpu.memory_space<smem>>
    %372 = vector.broadcast %371 : f32 to vector<24x128xf32>
    %373 = arith.addf %370, %372 : vector<24x128xf32>
    %c0_20 = arith.constant 0 : index
    %374 = memref.load %arg3[%c0_20] : memref<144xf32, #tpu.memory_space<smem>>
    %375 = vector.broadcast %374 : f32 to vector<24x128xf32>
    %376 = arith.mulf %375, %231 : vector<24x128xf32>
    %377 = arith.addf %373, %376 : vector<24x128xf32>
    %c1_21 = arith.constant 1 : index
    %378 = memref.load %arg3[%c1_21] : memref<144xf32, #tpu.memory_space<smem>>
    %379 = vector.broadcast %378 : f32 to vector<24x128xf32>
    %380 = arith.mulf %379, %234 : vector<24x128xf32>
    %381 = arith.addf %377, %380 : vector<24x128xf32>
    %c2_22 = arith.constant 2 : index
    %382 = memref.load %arg3[%c2_22] : memref<144xf32, #tpu.memory_space<smem>>
    %383 = vector.broadcast %382 : f32 to vector<24x128xf32>
    %384 = arith.mulf %383, %240 : vector<24x128xf32>
    %385 = arith.addf %381, %384 : vector<24x128xf32>
    %c3_23 = arith.constant 3 : index
    %386 = memref.load %arg3[%c3_23] : memref<144xf32, #tpu.memory_space<smem>>
    %387 = vector.broadcast %386 : f32 to vector<24x128xf32>
    %388 = arith.mulf %387, %243 : vector<24x128xf32>
    %389 = arith.addf %385, %388 : vector<24x128xf32>
    %c4_24 = arith.constant 4 : index
    %390 = memref.load %arg3[%c4_24] : memref<144xf32, #tpu.memory_space<smem>>
    %391 = vector.broadcast %390 : f32 to vector<24x128xf32>
    %392 = arith.mulf %391, %96 : vector<24x128xf32>
    %393 = arith.addf %389, %392 : vector<24x128xf32>
    %c5_25 = arith.constant 5 : index
    %394 = memref.load %arg3[%c5_25] : memref<144xf32, #tpu.memory_space<smem>>
    %395 = vector.broadcast %394 : f32 to vector<24x128xf32>
    %396 = arith.mulf %395, %246 : vector<24x128xf32>
    %397 = arith.addf %393, %396 : vector<24x128xf32>
    %c6_26 = arith.constant 6 : index
    %398 = memref.load %arg3[%c6_26] : memref<144xf32, #tpu.memory_space<smem>>
    %399 = vector.broadcast %398 : f32 to vector<24x128xf32>
    %400 = arith.mulf %399, %252 : vector<24x128xf32>
    %401 = arith.addf %397, %400 : vector<24x128xf32>
    %c7_27 = arith.constant 7 : index
    %402 = memref.load %arg3[%c7_27] : memref<144xf32, #tpu.memory_space<smem>>
    %403 = vector.broadcast %402 : f32 to vector<24x128xf32>
    %404 = arith.mulf %403, %255 : vector<24x128xf32>
    %405 = arith.addf %401, %404 : vector<24x128xf32>
    %c8_28 = arith.constant 8 : index
    %406 = memref.load %arg3[%c8_28] : memref<144xf32, #tpu.memory_space<smem>>
    %407 = vector.broadcast %406 : f32 to vector<24x128xf32>
    %408 = arith.mulf %407, %261 : vector<24x128xf32>
    %409 = arith.addf %405, %408 : vector<24x128xf32>
    %c9_29 = arith.constant 9 : index
    %410 = memref.load %arg3[%c9_29] : memref<144xf32, #tpu.memory_space<smem>>
    %411 = vector.broadcast %410 : f32 to vector<24x128xf32>
    %412 = arith.mulf %411, %267 : vector<24x128xf32>
    %413 = arith.addf %409, %412 : vector<24x128xf32>
    %c10_30 = arith.constant 10 : index
    %414 = memref.load %arg3[%c10_30] : memref<144xf32, #tpu.memory_space<smem>>
    %415 = vector.broadcast %414 : f32 to vector<24x128xf32>
    %416 = arith.mulf %415, %270 : vector<24x128xf32>
    %417 = arith.addf %413, %416 : vector<24x128xf32>
    %c11_31 = arith.constant 11 : index
    %418 = memref.load %arg3[%c11_31] : memref<144xf32, #tpu.memory_space<smem>>
    %419 = vector.broadcast %418 : f32 to vector<24x128xf32>
    %420 = arith.mulf %419, %276 : vector<24x128xf32>
    %421 = arith.addf %417, %420 : vector<24x128xf32>
    %c12_32 = arith.constant 12 : index
    %422 = memref.load %arg3[%c12_32] : memref<144xf32, #tpu.memory_space<smem>>
    %423 = vector.broadcast %422 : f32 to vector<24x128xf32>
    %424 = arith.mulf %423, %279 : vector<24x128xf32>
    %425 = arith.addf %421, %424 : vector<24x128xf32>
    %c13_33 = arith.constant 13 : index
    %426 = memref.load %arg3[%c13_33] : memref<144xf32, #tpu.memory_space<smem>>
    %427 = vector.broadcast %426 : f32 to vector<24x128xf32>
    %428 = arith.mulf %427, %139 : vector<24x128xf32>
    %429 = arith.addf %425, %428 : vector<24x128xf32>
    %c14_34 = arith.constant 14 : index
    %430 = memref.load %arg3[%c14_34] : memref<144xf32, #tpu.memory_space<smem>>
    %431 = vector.broadcast %430 : f32 to vector<24x128xf32>
    %432 = arith.mulf %431, %282 : vector<24x128xf32>
    %433 = arith.addf %429, %432 : vector<24x128xf32>
    %c15_35 = arith.constant 15 : index
    %434 = memref.load %arg3[%c15_35] : memref<144xf32, #tpu.memory_space<smem>>
    %435 = vector.broadcast %434 : f32 to vector<24x128xf32>
    %436 = arith.mulf %435, %288 : vector<24x128xf32>
    %437 = arith.addf %433, %436 : vector<24x128xf32>
    %c16_36 = arith.constant 16 : index
    %438 = memref.load %arg3[%c16_36] : memref<144xf32, #tpu.memory_space<smem>>
    %439 = vector.broadcast %438 : f32 to vector<24x128xf32>
    %440 = arith.mulf %439, %291 : vector<24x128xf32>
    %441 = arith.addf %437, %440 : vector<24x128xf32>
    %c17_37 = arith.constant 17 : index
    %442 = memref.load %arg3[%c17_37] : memref<144xf32, #tpu.memory_space<smem>>
    %443 = vector.broadcast %442 : f32 to vector<24x128xf32>
    %444 = arith.mulf %443, %297 : vector<24x128xf32>
    %445 = arith.addf %441, %444 : vector<24x128xf32>
    %c18_38 = arith.constant 18 : index
    %446 = memref.load %arg3[%c18_38] : memref<144xf32, #tpu.memory_space<smem>>
    %447 = vector.broadcast %446 : f32 to vector<24x128xf32>
    %448 = arith.mulf %447, %303 : vector<24x128xf32>
    %449 = arith.addf %445, %448 : vector<24x128xf32>
    %c19_39 = arith.constant 19 : index
    %450 = memref.load %arg3[%c19_39] : memref<144xf32, #tpu.memory_space<smem>>
    %451 = vector.broadcast %450 : f32 to vector<24x128xf32>
    %452 = arith.mulf %451, %306 : vector<24x128xf32>
    %453 = arith.addf %449, %452 : vector<24x128xf32>
    %c20_40 = arith.constant 20 : index
    %454 = memref.load %arg3[%c20_40] : memref<144xf32, #tpu.memory_space<smem>>
    %455 = vector.broadcast %454 : f32 to vector<24x128xf32>
    %456 = arith.mulf %455, %312 : vector<24x128xf32>
    %457 = arith.addf %453, %456 : vector<24x128xf32>
    %c21_41 = arith.constant 21 : index
    %458 = memref.load %arg3[%c21_41] : memref<144xf32, #tpu.memory_space<smem>>
    %459 = vector.broadcast %458 : f32 to vector<24x128xf32>
    %460 = arith.mulf %459, %315 : vector<24x128xf32>
    %461 = arith.addf %457, %460 : vector<24x128xf32>
    %c22_42 = arith.constant 22 : index
    %462 = memref.load %arg3[%c22_42] : memref<144xf32, #tpu.memory_space<smem>>
    %463 = vector.broadcast %462 : f32 to vector<24x128xf32>
    %464 = arith.mulf %463, %182 : vector<24x128xf32>
    %465 = arith.addf %461, %464 : vector<24x128xf32>
    %c23_43 = arith.constant 23 : index
    %466 = memref.load %arg3[%c23_43] : memref<144xf32, #tpu.memory_space<smem>>
    %467 = vector.broadcast %466 : f32 to vector<24x128xf32>
    %468 = arith.mulf %467, %318 : vector<24x128xf32>
    %469 = arith.addf %465, %468 : vector<24x128xf32>
    %c24_44 = arith.constant 24 : index
    %470 = memref.load %arg3[%c24_44] : memref<144xf32, #tpu.memory_space<smem>>
    %471 = vector.broadcast %470 : f32 to vector<24x128xf32>
    %472 = arith.mulf %471, %324 : vector<24x128xf32>
    %473 = arith.addf %469, %472 : vector<24x128xf32>
    %c25_45 = arith.constant 25 : index
    %474 = memref.load %arg3[%c25_45] : memref<144xf32, #tpu.memory_space<smem>>
    %475 = vector.broadcast %474 : f32 to vector<24x128xf32>
    %476 = arith.mulf %475, %327 : vector<24x128xf32>
    %477 = arith.addf %473, %476 : vector<24x128xf32>
    %c26_46 = arith.constant 26 : index
    %478 = memref.load %arg3[%c26_46] : memref<144xf32, #tpu.memory_space<smem>>
    %479 = vector.broadcast %478 : f32 to vector<24x128xf32>
    %480 = arith.mulf %479, %333 : vector<24x128xf32>
    %481 = arith.addf %477, %480 : vector<24x128xf32>
    %c27_47 = arith.constant 27 : index
    %482 = memref.load %arg3[%c27_47] : memref<144xf32, #tpu.memory_space<smem>>
    %483 = vector.broadcast %482 : f32 to vector<24x128xf32>
    %484 = arith.mulf %483, %339 : vector<24x128xf32>
    %485 = arith.addf %481, %484 : vector<24x128xf32>
    %c28_48 = arith.constant 28 : index
    %486 = memref.load %arg3[%c28_48] : memref<144xf32, #tpu.memory_space<smem>>
    %487 = vector.broadcast %486 : f32 to vector<24x128xf32>
    %488 = arith.mulf %487, %342 : vector<24x128xf32>
    %489 = arith.addf %485, %488 : vector<24x128xf32>
    %c29_49 = arith.constant 29 : index
    %490 = memref.load %arg3[%c29_49] : memref<144xf32, #tpu.memory_space<smem>>
    %491 = vector.broadcast %490 : f32 to vector<24x128xf32>
    %492 = arith.mulf %491, %348 : vector<24x128xf32>
    %493 = arith.addf %489, %492 : vector<24x128xf32>
    %c30_50 = arith.constant 30 : index
    %494 = memref.load %arg3[%c30_50] : memref<144xf32, #tpu.memory_space<smem>>
    %495 = vector.broadcast %494 : f32 to vector<24x128xf32>
    %496 = arith.mulf %495, %351 : vector<24x128xf32>
    %497 = arith.addf %493, %496 : vector<24x128xf32>
    %c31_51 = arith.constant 31 : index
    %498 = memref.load %arg3[%c31_51] : memref<144xf32, #tpu.memory_space<smem>>
    %499 = vector.broadcast %498 : f32 to vector<24x128xf32>
    %500 = arith.mulf %499, %225 : vector<24x128xf32>
    %501 = arith.addf %497, %500 : vector<24x128xf32>
    %c32_52 = arith.constant 32 : index
    %502 = memref.load %arg3[%c32_52] : memref<144xf32, #tpu.memory_space<smem>>
    %503 = vector.broadcast %502 : f32 to vector<24x128xf32>
    %504 = arith.mulf %503, %354 : vector<24x128xf32>
    %505 = arith.addf %501, %504 : vector<24x128xf32>
    %c33_53 = arith.constant 33 : index
    %506 = memref.load %arg3[%c33_53] : memref<144xf32, #tpu.memory_space<smem>>
    %507 = vector.broadcast %506 : f32 to vector<24x128xf32>
    %508 = arith.mulf %507, %360 : vector<24x128xf32>
    %509 = arith.addf %505, %508 : vector<24x128xf32>
    %c34_54 = arith.constant 34 : index
    %510 = memref.load %arg3[%c34_54] : memref<144xf32, #tpu.memory_space<smem>>
    %511 = vector.broadcast %510 : f32 to vector<24x128xf32>
    %512 = arith.mulf %511, %363 : vector<24x128xf32>
    %513 = arith.addf %509, %512 : vector<24x128xf32>
    %c35_55 = arith.constant 35 : index
    %514 = memref.load %arg3[%c35_55] : memref<144xf32, #tpu.memory_space<smem>>
    %515 = vector.broadcast %514 : f32 to vector<24x128xf32>
    %516 = arith.mulf %515, %369 : vector<24x128xf32>
    %517 = arith.addf %513, %516 : vector<24x128xf32>
    %cst_56 = arith.constant 0.000000e+00 : f32
    %518 = vector.broadcast %cst_56 : f32 to vector<24x128xf32>
    %519 = arith.maximumf %517, %518 : vector<24x128xf32>
    %520 = arith.mulf %519, %17 : vector<24x128xf32>
    %cst_57 = arith.constant 0.000000e+00 : f32
    %521 = vector.broadcast %cst_57 : f32 to vector<24x128xf32>
    %c1_58 = arith.constant 1 : index
    %522 = memref.load %arg4[%c1_58] : memref<4xf32, #tpu.memory_space<smem>>
    %523 = vector.broadcast %522 : f32 to vector<24x128xf32>
    %524 = arith.addf %521, %523 : vector<24x128xf32>
    %c36 = arith.constant 36 : index
    %525 = memref.load %arg3[%c36] : memref<144xf32, #tpu.memory_space<smem>>
    %526 = vector.broadcast %525 : f32 to vector<24x128xf32>
    %527 = arith.mulf %526, %231 : vector<24x128xf32>
    %528 = arith.addf %524, %527 : vector<24x128xf32>
    %c37 = arith.constant 37 : index
    %529 = memref.load %arg3[%c37] : memref<144xf32, #tpu.memory_space<smem>>
    %530 = vector.broadcast %529 : f32 to vector<24x128xf32>
    %531 = arith.mulf %530, %234 : vector<24x128xf32>
    %532 = arith.addf %528, %531 : vector<24x128xf32>
    %c38 = arith.constant 38 : index
    %533 = memref.load %arg3[%c38] : memref<144xf32, #tpu.memory_space<smem>>
    %534 = vector.broadcast %533 : f32 to vector<24x128xf32>
    %535 = arith.mulf %534, %240 : vector<24x128xf32>
    %536 = arith.addf %532, %535 : vector<24x128xf32>
    %c39 = arith.constant 39 : index
    %537 = memref.load %arg3[%c39] : memref<144xf32, #tpu.memory_space<smem>>
    %538 = vector.broadcast %537 : f32 to vector<24x128xf32>
    %539 = arith.mulf %538, %243 : vector<24x128xf32>
    %540 = arith.addf %536, %539 : vector<24x128xf32>
    %c40 = arith.constant 40 : index
    %541 = memref.load %arg3[%c40] : memref<144xf32, #tpu.memory_space<smem>>
    %542 = vector.broadcast %541 : f32 to vector<24x128xf32>
    %543 = arith.mulf %542, %96 : vector<24x128xf32>
    %544 = arith.addf %540, %543 : vector<24x128xf32>
    %c41 = arith.constant 41 : index
    %545 = memref.load %arg3[%c41] : memref<144xf32, #tpu.memory_space<smem>>
    %546 = vector.broadcast %545 : f32 to vector<24x128xf32>
    %547 = arith.mulf %546, %246 : vector<24x128xf32>
    %548 = arith.addf %544, %547 : vector<24x128xf32>
    %c42 = arith.constant 42 : index
    %549 = memref.load %arg3[%c42] : memref<144xf32, #tpu.memory_space<smem>>
    %550 = vector.broadcast %549 : f32 to vector<24x128xf32>
    %551 = arith.mulf %550, %252 : vector<24x128xf32>
    %552 = arith.addf %548, %551 : vector<24x128xf32>
    %c43 = arith.constant 43 : index
    %553 = memref.load %arg3[%c43] : memref<144xf32, #tpu.memory_space<smem>>
    %554 = vector.broadcast %553 : f32 to vector<24x128xf32>
    %555 = arith.mulf %554, %255 : vector<24x128xf32>
    %556 = arith.addf %552, %555 : vector<24x128xf32>
    %c44 = arith.constant 44 : index
    %557 = memref.load %arg3[%c44] : memref<144xf32, #tpu.memory_space<smem>>
    %558 = vector.broadcast %557 : f32 to vector<24x128xf32>
    %559 = arith.mulf %558, %261 : vector<24x128xf32>
    %560 = arith.addf %556, %559 : vector<24x128xf32>
    %c45 = arith.constant 45 : index
    %561 = memref.load %arg3[%c45] : memref<144xf32, #tpu.memory_space<smem>>
    %562 = vector.broadcast %561 : f32 to vector<24x128xf32>
    %563 = arith.mulf %562, %267 : vector<24x128xf32>
    %564 = arith.addf %560, %563 : vector<24x128xf32>
    %c46 = arith.constant 46 : index
    %565 = memref.load %arg3[%c46] : memref<144xf32, #tpu.memory_space<smem>>
    %566 = vector.broadcast %565 : f32 to vector<24x128xf32>
    %567 = arith.mulf %566, %270 : vector<24x128xf32>
    %568 = arith.addf %564, %567 : vector<24x128xf32>
    %c47 = arith.constant 47 : index
    %569 = memref.load %arg3[%c47] : memref<144xf32, #tpu.memory_space<smem>>
    %570 = vector.broadcast %569 : f32 to vector<24x128xf32>
    %571 = arith.mulf %570, %276 : vector<24x128xf32>
    %572 = arith.addf %568, %571 : vector<24x128xf32>
    %c48 = arith.constant 48 : index
    %573 = memref.load %arg3[%c48] : memref<144xf32, #tpu.memory_space<smem>>
    %574 = vector.broadcast %573 : f32 to vector<24x128xf32>
    %575 = arith.mulf %574, %279 : vector<24x128xf32>
    %576 = arith.addf %572, %575 : vector<24x128xf32>
    %c49 = arith.constant 49 : index
    %577 = memref.load %arg3[%c49] : memref<144xf32, #tpu.memory_space<smem>>
    %578 = vector.broadcast %577 : f32 to vector<24x128xf32>
    %579 = arith.mulf %578, %139 : vector<24x128xf32>
    %580 = arith.addf %576, %579 : vector<24x128xf32>
    %c50 = arith.constant 50 : index
    %581 = memref.load %arg3[%c50] : memref<144xf32, #tpu.memory_space<smem>>
    %582 = vector.broadcast %581 : f32 to vector<24x128xf32>
    %583 = arith.mulf %582, %282 : vector<24x128xf32>
    %584 = arith.addf %580, %583 : vector<24x128xf32>
    %c51 = arith.constant 51 : index
    %585 = memref.load %arg3[%c51] : memref<144xf32, #tpu.memory_space<smem>>
    %586 = vector.broadcast %585 : f32 to vector<24x128xf32>
    %587 = arith.mulf %586, %288 : vector<24x128xf32>
    %588 = arith.addf %584, %587 : vector<24x128xf32>
    %c52 = arith.constant 52 : index
    %589 = memref.load %arg3[%c52] : memref<144xf32, #tpu.memory_space<smem>>
    %590 = vector.broadcast %589 : f32 to vector<24x128xf32>
    %591 = arith.mulf %590, %291 : vector<24x128xf32>
    %592 = arith.addf %588, %591 : vector<24x128xf32>
    %c53 = arith.constant 53 : index
    %593 = memref.load %arg3[%c53] : memref<144xf32, #tpu.memory_space<smem>>
    %594 = vector.broadcast %593 : f32 to vector<24x128xf32>
    %595 = arith.mulf %594, %297 : vector<24x128xf32>
    %596 = arith.addf %592, %595 : vector<24x128xf32>
    %c54 = arith.constant 54 : index
    %597 = memref.load %arg3[%c54] : memref<144xf32, #tpu.memory_space<smem>>
    %598 = vector.broadcast %597 : f32 to vector<24x128xf32>
    %599 = arith.mulf %598, %303 : vector<24x128xf32>
    %600 = arith.addf %596, %599 : vector<24x128xf32>
    %c55 = arith.constant 55 : index
    %601 = memref.load %arg3[%c55] : memref<144xf32, #tpu.memory_space<smem>>
    %602 = vector.broadcast %601 : f32 to vector<24x128xf32>
    %603 = arith.mulf %602, %306 : vector<24x128xf32>
    %604 = arith.addf %600, %603 : vector<24x128xf32>
    %c56 = arith.constant 56 : index
    %605 = memref.load %arg3[%c56] : memref<144xf32, #tpu.memory_space<smem>>
    %606 = vector.broadcast %605 : f32 to vector<24x128xf32>
    %607 = arith.mulf %606, %312 : vector<24x128xf32>
    %608 = arith.addf %604, %607 : vector<24x128xf32>
    %c57 = arith.constant 57 : index
    %609 = memref.load %arg3[%c57] : memref<144xf32, #tpu.memory_space<smem>>
    %610 = vector.broadcast %609 : f32 to vector<24x128xf32>
    %611 = arith.mulf %610, %315 : vector<24x128xf32>
    %612 = arith.addf %608, %611 : vector<24x128xf32>
    %c58 = arith.constant 58 : index
    %613 = memref.load %arg3[%c58] : memref<144xf32, #tpu.memory_space<smem>>
    %614 = vector.broadcast %613 : f32 to vector<24x128xf32>
    %615 = arith.mulf %614, %182 : vector<24x128xf32>
    %616 = arith.addf %612, %615 : vector<24x128xf32>
    %c59 = arith.constant 59 : index
    %617 = memref.load %arg3[%c59] : memref<144xf32, #tpu.memory_space<smem>>
    %618 = vector.broadcast %617 : f32 to vector<24x128xf32>
    %619 = arith.mulf %618, %318 : vector<24x128xf32>
    %620 = arith.addf %616, %619 : vector<24x128xf32>
    %c60 = arith.constant 60 : index
    %621 = memref.load %arg3[%c60] : memref<144xf32, #tpu.memory_space<smem>>
    %622 = vector.broadcast %621 : f32 to vector<24x128xf32>
    %623 = arith.mulf %622, %324 : vector<24x128xf32>
    %624 = arith.addf %620, %623 : vector<24x128xf32>
    %c61 = arith.constant 61 : index
    %625 = memref.load %arg3[%c61] : memref<144xf32, #tpu.memory_space<smem>>
    %626 = vector.broadcast %625 : f32 to vector<24x128xf32>
    %627 = arith.mulf %626, %327 : vector<24x128xf32>
    %628 = arith.addf %624, %627 : vector<24x128xf32>
    %c62 = arith.constant 62 : index
    %629 = memref.load %arg3[%c62] : memref<144xf32, #tpu.memory_space<smem>>
    %630 = vector.broadcast %629 : f32 to vector<24x128xf32>
    %631 = arith.mulf %630, %333 : vector<24x128xf32>
    %632 = arith.addf %628, %631 : vector<24x128xf32>
    %c63 = arith.constant 63 : index
    %633 = memref.load %arg3[%c63] : memref<144xf32, #tpu.memory_space<smem>>
    %634 = vector.broadcast %633 : f32 to vector<24x128xf32>
    %635 = arith.mulf %634, %339 : vector<24x128xf32>
    %636 = arith.addf %632, %635 : vector<24x128xf32>
    %c64 = arith.constant 64 : index
    %637 = memref.load %arg3[%c64] : memref<144xf32, #tpu.memory_space<smem>>
    %638 = vector.broadcast %637 : f32 to vector<24x128xf32>
    %639 = arith.mulf %638, %342 : vector<24x128xf32>
    %640 = arith.addf %636, %639 : vector<24x128xf32>
    %c65 = arith.constant 65 : index
    %641 = memref.load %arg3[%c65] : memref<144xf32, #tpu.memory_space<smem>>
    %642 = vector.broadcast %641 : f32 to vector<24x128xf32>
    %643 = arith.mulf %642, %348 : vector<24x128xf32>
    %644 = arith.addf %640, %643 : vector<24x128xf32>
    %c66 = arith.constant 66 : index
    %645 = memref.load %arg3[%c66] : memref<144xf32, #tpu.memory_space<smem>>
    %646 = vector.broadcast %645 : f32 to vector<24x128xf32>
    %647 = arith.mulf %646, %351 : vector<24x128xf32>
    %648 = arith.addf %644, %647 : vector<24x128xf32>
    %c67 = arith.constant 67 : index
    %649 = memref.load %arg3[%c67] : memref<144xf32, #tpu.memory_space<smem>>
    %650 = vector.broadcast %649 : f32 to vector<24x128xf32>
    %651 = arith.mulf %650, %225 : vector<24x128xf32>
    %652 = arith.addf %648, %651 : vector<24x128xf32>
    %c68 = arith.constant 68 : index
    %653 = memref.load %arg3[%c68] : memref<144xf32, #tpu.memory_space<smem>>
    %654 = vector.broadcast %653 : f32 to vector<24x128xf32>
    %655 = arith.mulf %654, %354 : vector<24x128xf32>
    %656 = arith.addf %652, %655 : vector<24x128xf32>
    %c69 = arith.constant 69 : index
    %657 = memref.load %arg3[%c69] : memref<144xf32, #tpu.memory_space<smem>>
    %658 = vector.broadcast %657 : f32 to vector<24x128xf32>
    %659 = arith.mulf %658, %360 : vector<24x128xf32>
    %660 = arith.addf %656, %659 : vector<24x128xf32>
    %c70 = arith.constant 70 : index
    %661 = memref.load %arg3[%c70] : memref<144xf32, #tpu.memory_space<smem>>
    %662 = vector.broadcast %661 : f32 to vector<24x128xf32>
    %663 = arith.mulf %662, %363 : vector<24x128xf32>
    %664 = arith.addf %660, %663 : vector<24x128xf32>
    %c71 = arith.constant 71 : index
    %665 = memref.load %arg3[%c71] : memref<144xf32, #tpu.memory_space<smem>>
    %666 = vector.broadcast %665 : f32 to vector<24x128xf32>
    %667 = arith.mulf %666, %369 : vector<24x128xf32>
    %668 = arith.addf %664, %667 : vector<24x128xf32>
    %cst_59 = arith.constant 0.000000e+00 : f32
    %669 = vector.broadcast %cst_59 : f32 to vector<24x128xf32>
    %670 = arith.maximumf %668, %669 : vector<24x128xf32>
    %671 = arith.mulf %670, %17 : vector<24x128xf32>
    %cst_60 = arith.constant 0.000000e+00 : f32
    %672 = vector.broadcast %cst_60 : f32 to vector<24x128xf32>
    %c2_61 = arith.constant 2 : index
    %673 = memref.load %arg4[%c2_61] : memref<4xf32, #tpu.memory_space<smem>>
    %674 = vector.broadcast %673 : f32 to vector<24x128xf32>
    %675 = arith.addf %672, %674 : vector<24x128xf32>
    %c72 = arith.constant 72 : index
    %676 = memref.load %arg3[%c72] : memref<144xf32, #tpu.memory_space<smem>>
    %677 = vector.broadcast %676 : f32 to vector<24x128xf32>
    %678 = arith.mulf %677, %231 : vector<24x128xf32>
    %679 = arith.addf %675, %678 : vector<24x128xf32>
    %c73 = arith.constant 73 : index
    %680 = memref.load %arg3[%c73] : memref<144xf32, #tpu.memory_space<smem>>
    %681 = vector.broadcast %680 : f32 to vector<24x128xf32>
    %682 = arith.mulf %681, %234 : vector<24x128xf32>
    %683 = arith.addf %679, %682 : vector<24x128xf32>
    %c74 = arith.constant 74 : index
    %684 = memref.load %arg3[%c74] : memref<144xf32, #tpu.memory_space<smem>>
    %685 = vector.broadcast %684 : f32 to vector<24x128xf32>
    %686 = arith.mulf %685, %240 : vector<24x128xf32>
    %687 = arith.addf %683, %686 : vector<24x128xf32>
    %c75 = arith.constant 75 : index
    %688 = memref.load %arg3[%c75] : memref<144xf32, #tpu.memory_space<smem>>
    %689 = vector.broadcast %688 : f32 to vector<24x128xf32>
    %690 = arith.mulf %689, %243 : vector<24x128xf32>
    %691 = arith.addf %687, %690 : vector<24x128xf32>
    %c76 = arith.constant 76 : index
    %692 = memref.load %arg3[%c76] : memref<144xf32, #tpu.memory_space<smem>>
    %693 = vector.broadcast %692 : f32 to vector<24x128xf32>
    %694 = arith.mulf %693, %96 : vector<24x128xf32>
    %695 = arith.addf %691, %694 : vector<24x128xf32>
    %c77 = arith.constant 77 : index
    %696 = memref.load %arg3[%c77] : memref<144xf32, #tpu.memory_space<smem>>
    %697 = vector.broadcast %696 : f32 to vector<24x128xf32>
    %698 = arith.mulf %697, %246 : vector<24x128xf32>
    %699 = arith.addf %695, %698 : vector<24x128xf32>
    %c78 = arith.constant 78 : index
    %700 = memref.load %arg3[%c78] : memref<144xf32, #tpu.memory_space<smem>>
    %701 = vector.broadcast %700 : f32 to vector<24x128xf32>
    %702 = arith.mulf %701, %252 : vector<24x128xf32>
    %703 = arith.addf %699, %702 : vector<24x128xf32>
    %c79 = arith.constant 79 : index
    %704 = memref.load %arg3[%c79] : memref<144xf32, #tpu.memory_space<smem>>
    %705 = vector.broadcast %704 : f32 to vector<24x128xf32>
    %706 = arith.mulf %705, %255 : vector<24x128xf32>
    %707 = arith.addf %703, %706 : vector<24x128xf32>
    %c80 = arith.constant 80 : index
    %708 = memref.load %arg3[%c80] : memref<144xf32, #tpu.memory_space<smem>>
    %709 = vector.broadcast %708 : f32 to vector<24x128xf32>
    %710 = arith.mulf %709, %261 : vector<24x128xf32>
    %711 = arith.addf %707, %710 : vector<24x128xf32>
    %c81 = arith.constant 81 : index
    %712 = memref.load %arg3[%c81] : memref<144xf32, #tpu.memory_space<smem>>
    %713 = vector.broadcast %712 : f32 to vector<24x128xf32>
    %714 = arith.mulf %713, %267 : vector<24x128xf32>
    %715 = arith.addf %711, %714 : vector<24x128xf32>
    %c82 = arith.constant 82 : index
    %716 = memref.load %arg3[%c82] : memref<144xf32, #tpu.memory_space<smem>>
    %717 = vector.broadcast %716 : f32 to vector<24x128xf32>
    %718 = arith.mulf %717, %270 : vector<24x128xf32>
    %719 = arith.addf %715, %718 : vector<24x128xf32>
    %c83 = arith.constant 83 : index
    %720 = memref.load %arg3[%c83] : memref<144xf32, #tpu.memory_space<smem>>
    %721 = vector.broadcast %720 : f32 to vector<24x128xf32>
    %722 = arith.mulf %721, %276 : vector<24x128xf32>
    %723 = arith.addf %719, %722 : vector<24x128xf32>
    %c84 = arith.constant 84 : index
    %724 = memref.load %arg3[%c84] : memref<144xf32, #tpu.memory_space<smem>>
    %725 = vector.broadcast %724 : f32 to vector<24x128xf32>
    %726 = arith.mulf %725, %279 : vector<24x128xf32>
    %727 = arith.addf %723, %726 : vector<24x128xf32>
    %c85 = arith.constant 85 : index
    %728 = memref.load %arg3[%c85] : memref<144xf32, #tpu.memory_space<smem>>
    %729 = vector.broadcast %728 : f32 to vector<24x128xf32>
    %730 = arith.mulf %729, %139 : vector<24x128xf32>
    %731 = arith.addf %727, %730 : vector<24x128xf32>
    %c86 = arith.constant 86 : index
    %732 = memref.load %arg3[%c86] : memref<144xf32, #tpu.memory_space<smem>>
    %733 = vector.broadcast %732 : f32 to vector<24x128xf32>
    %734 = arith.mulf %733, %282 : vector<24x128xf32>
    %735 = arith.addf %731, %734 : vector<24x128xf32>
    %c87 = arith.constant 87 : index
    %736 = memref.load %arg3[%c87] : memref<144xf32, #tpu.memory_space<smem>>
    %737 = vector.broadcast %736 : f32 to vector<24x128xf32>
    %738 = arith.mulf %737, %288 : vector<24x128xf32>
    %739 = arith.addf %735, %738 : vector<24x128xf32>
    %c88 = arith.constant 88 : index
    %740 = memref.load %arg3[%c88] : memref<144xf32, #tpu.memory_space<smem>>
    %741 = vector.broadcast %740 : f32 to vector<24x128xf32>
    %742 = arith.mulf %741, %291 : vector<24x128xf32>
    %743 = arith.addf %739, %742 : vector<24x128xf32>
    %c89 = arith.constant 89 : index
    %744 = memref.load %arg3[%c89] : memref<144xf32, #tpu.memory_space<smem>>
    %745 = vector.broadcast %744 : f32 to vector<24x128xf32>
    %746 = arith.mulf %745, %297 : vector<24x128xf32>
    %747 = arith.addf %743, %746 : vector<24x128xf32>
    %c90 = arith.constant 90 : index
    %748 = memref.load %arg3[%c90] : memref<144xf32, #tpu.memory_space<smem>>
    %749 = vector.broadcast %748 : f32 to vector<24x128xf32>
    %750 = arith.mulf %749, %303 : vector<24x128xf32>
    %751 = arith.addf %747, %750 : vector<24x128xf32>
    %c91 = arith.constant 91 : index
    %752 = memref.load %arg3[%c91] : memref<144xf32, #tpu.memory_space<smem>>
    %753 = vector.broadcast %752 : f32 to vector<24x128xf32>
    %754 = arith.mulf %753, %306 : vector<24x128xf32>
    %755 = arith.addf %751, %754 : vector<24x128xf32>
    %c92 = arith.constant 92 : index
    %756 = memref.load %arg3[%c92] : memref<144xf32, #tpu.memory_space<smem>>
    %757 = vector.broadcast %756 : f32 to vector<24x128xf32>
    %758 = arith.mulf %757, %312 : vector<24x128xf32>
    %759 = arith.addf %755, %758 : vector<24x128xf32>
    %c93 = arith.constant 93 : index
    %760 = memref.load %arg3[%c93] : memref<144xf32, #tpu.memory_space<smem>>
    %761 = vector.broadcast %760 : f32 to vector<24x128xf32>
    %762 = arith.mulf %761, %315 : vector<24x128xf32>
    %763 = arith.addf %759, %762 : vector<24x128xf32>
    %c94 = arith.constant 94 : index
    %764 = memref.load %arg3[%c94] : memref<144xf32, #tpu.memory_space<smem>>
    %765 = vector.broadcast %764 : f32 to vector<24x128xf32>
    %766 = arith.mulf %765, %182 : vector<24x128xf32>
    %767 = arith.addf %763, %766 : vector<24x128xf32>
    %c95 = arith.constant 95 : index
    %768 = memref.load %arg3[%c95] : memref<144xf32, #tpu.memory_space<smem>>
    %769 = vector.broadcast %768 : f32 to vector<24x128xf32>
    %770 = arith.mulf %769, %318 : vector<24x128xf32>
    %771 = arith.addf %767, %770 : vector<24x128xf32>
    %c96 = arith.constant 96 : index
    %772 = memref.load %arg3[%c96] : memref<144xf32, #tpu.memory_space<smem>>
    %773 = vector.broadcast %772 : f32 to vector<24x128xf32>
    %774 = arith.mulf %773, %324 : vector<24x128xf32>
    %775 = arith.addf %771, %774 : vector<24x128xf32>
    %c97 = arith.constant 97 : index
    %776 = memref.load %arg3[%c97] : memref<144xf32, #tpu.memory_space<smem>>
    %777 = vector.broadcast %776 : f32 to vector<24x128xf32>
    %778 = arith.mulf %777, %327 : vector<24x128xf32>
    %779 = arith.addf %775, %778 : vector<24x128xf32>
    %c98 = arith.constant 98 : index
    %780 = memref.load %arg3[%c98] : memref<144xf32, #tpu.memory_space<smem>>
    %781 = vector.broadcast %780 : f32 to vector<24x128xf32>
    %782 = arith.mulf %781, %333 : vector<24x128xf32>
    %783 = arith.addf %779, %782 : vector<24x128xf32>
    %c99 = arith.constant 99 : index
    %784 = memref.load %arg3[%c99] : memref<144xf32, #tpu.memory_space<smem>>
    %785 = vector.broadcast %784 : f32 to vector<24x128xf32>
    %786 = arith.mulf %785, %339 : vector<24x128xf32>
    %787 = arith.addf %783, %786 : vector<24x128xf32>
    %c100 = arith.constant 100 : index
    %788 = memref.load %arg3[%c100] : memref<144xf32, #tpu.memory_space<smem>>
    %789 = vector.broadcast %788 : f32 to vector<24x128xf32>
    %790 = arith.mulf %789, %342 : vector<24x128xf32>
    %791 = arith.addf %787, %790 : vector<24x128xf32>
    %c101 = arith.constant 101 : index
    %792 = memref.load %arg3[%c101] : memref<144xf32, #tpu.memory_space<smem>>
    %793 = vector.broadcast %792 : f32 to vector<24x128xf32>
    %794 = arith.mulf %793, %348 : vector<24x128xf32>
    %795 = arith.addf %791, %794 : vector<24x128xf32>
    %c102 = arith.constant 102 : index
    %796 = memref.load %arg3[%c102] : memref<144xf32, #tpu.memory_space<smem>>
    %797 = vector.broadcast %796 : f32 to vector<24x128xf32>
    %798 = arith.mulf %797, %351 : vector<24x128xf32>
    %799 = arith.addf %795, %798 : vector<24x128xf32>
    %c103 = arith.constant 103 : index
    %800 = memref.load %arg3[%c103] : memref<144xf32, #tpu.memory_space<smem>>
    %801 = vector.broadcast %800 : f32 to vector<24x128xf32>
    %802 = arith.mulf %801, %225 : vector<24x128xf32>
    %803 = arith.addf %799, %802 : vector<24x128xf32>
    %c104 = arith.constant 104 : index
    %804 = memref.load %arg3[%c104] : memref<144xf32, #tpu.memory_space<smem>>
    %805 = vector.broadcast %804 : f32 to vector<24x128xf32>
    %806 = arith.mulf %805, %354 : vector<24x128xf32>
    %807 = arith.addf %803, %806 : vector<24x128xf32>
    %c105 = arith.constant 105 : index
    %808 = memref.load %arg3[%c105] : memref<144xf32, #tpu.memory_space<smem>>
    %809 = vector.broadcast %808 : f32 to vector<24x128xf32>
    %810 = arith.mulf %809, %360 : vector<24x128xf32>
    %811 = arith.addf %807, %810 : vector<24x128xf32>
    %c106 = arith.constant 106 : index
    %812 = memref.load %arg3[%c106] : memref<144xf32, #tpu.memory_space<smem>>
    %813 = vector.broadcast %812 : f32 to vector<24x128xf32>
    %814 = arith.mulf %813, %363 : vector<24x128xf32>
    %815 = arith.addf %811, %814 : vector<24x128xf32>
    %c107 = arith.constant 107 : index
    %816 = memref.load %arg3[%c107] : memref<144xf32, #tpu.memory_space<smem>>
    %817 = vector.broadcast %816 : f32 to vector<24x128xf32>
    %818 = arith.mulf %817, %369 : vector<24x128xf32>
    %819 = arith.addf %815, %818 : vector<24x128xf32>
    %cst_62 = arith.constant 0.000000e+00 : f32
    %820 = vector.broadcast %cst_62 : f32 to vector<24x128xf32>
    %821 = arith.maximumf %819, %820 : vector<24x128xf32>
    %822 = arith.mulf %821, %17 : vector<24x128xf32>
    %cst_63 = arith.constant 0.000000e+00 : f32
    %823 = vector.broadcast %cst_63 : f32 to vector<24x128xf32>
    %c3_64 = arith.constant 3 : index
    %824 = memref.load %arg4[%c3_64] : memref<4xf32, #tpu.memory_space<smem>>
    %825 = vector.broadcast %824 : f32 to vector<24x128xf32>
    %826 = arith.addf %823, %825 : vector<24x128xf32>
    %c108 = arith.constant 108 : index
    %827 = memref.load %arg3[%c108] : memref<144xf32, #tpu.memory_space<smem>>
    %828 = vector.broadcast %827 : f32 to vector<24x128xf32>
    %829 = arith.mulf %828, %231 : vector<24x128xf32>
    %830 = arith.addf %826, %829 : vector<24x128xf32>
    %c109 = arith.constant 109 : index
    %831 = memref.load %arg3[%c109] : memref<144xf32, #tpu.memory_space<smem>>
    %832 = vector.broadcast %831 : f32 to vector<24x128xf32>
    %833 = arith.mulf %832, %234 : vector<24x128xf32>
    %834 = arith.addf %830, %833 : vector<24x128xf32>
    %c110 = arith.constant 110 : index
    %835 = memref.load %arg3[%c110] : memref<144xf32, #tpu.memory_space<smem>>
    %836 = vector.broadcast %835 : f32 to vector<24x128xf32>
    %837 = arith.mulf %836, %240 : vector<24x128xf32>
    %838 = arith.addf %834, %837 : vector<24x128xf32>
    %c111 = arith.constant 111 : index
    %839 = memref.load %arg3[%c111] : memref<144xf32, #tpu.memory_space<smem>>
    %840 = vector.broadcast %839 : f32 to vector<24x128xf32>
    %841 = arith.mulf %840, %243 : vector<24x128xf32>
    %842 = arith.addf %838, %841 : vector<24x128xf32>
    %c112 = arith.constant 112 : index
    %843 = memref.load %arg3[%c112] : memref<144xf32, #tpu.memory_space<smem>>
    %844 = vector.broadcast %843 : f32 to vector<24x128xf32>
    %845 = arith.mulf %844, %96 : vector<24x128xf32>
    %846 = arith.addf %842, %845 : vector<24x128xf32>
    %c113 = arith.constant 113 : index
    %847 = memref.load %arg3[%c113] : memref<144xf32, #tpu.memory_space<smem>>
    %848 = vector.broadcast %847 : f32 to vector<24x128xf32>
    %849 = arith.mulf %848, %246 : vector<24x128xf32>
    %850 = arith.addf %846, %849 : vector<24x128xf32>
    %c114 = arith.constant 114 : index
    %851 = memref.load %arg3[%c114] : memref<144xf32, #tpu.memory_space<smem>>
    %852 = vector.broadcast %851 : f32 to vector<24x128xf32>
    %853 = arith.mulf %852, %252 : vector<24x128xf32>
    %854 = arith.addf %850, %853 : vector<24x128xf32>
    %c115 = arith.constant 115 : index
    %855 = memref.load %arg3[%c115] : memref<144xf32, #tpu.memory_space<smem>>
    %856 = vector.broadcast %855 : f32 to vector<24x128xf32>
    %857 = arith.mulf %856, %255 : vector<24x128xf32>
    %858 = arith.addf %854, %857 : vector<24x128xf32>
    %c116 = arith.constant 116 : index
    %859 = memref.load %arg3[%c116] : memref<144xf32, #tpu.memory_space<smem>>
    %860 = vector.broadcast %859 : f32 to vector<24x128xf32>
    %861 = arith.mulf %860, %261 : vector<24x128xf32>
    %862 = arith.addf %858, %861 : vector<24x128xf32>
    %c117 = arith.constant 117 : index
    %863 = memref.load %arg3[%c117] : memref<144xf32, #tpu.memory_space<smem>>
    %864 = vector.broadcast %863 : f32 to vector<24x128xf32>
    %865 = arith.mulf %864, %267 : vector<24x128xf32>
    %866 = arith.addf %862, %865 : vector<24x128xf32>
    %c118 = arith.constant 118 : index
    %867 = memref.load %arg3[%c118] : memref<144xf32, #tpu.memory_space<smem>>
    %868 = vector.broadcast %867 : f32 to vector<24x128xf32>
    %869 = arith.mulf %868, %270 : vector<24x128xf32>
    %870 = arith.addf %866, %869 : vector<24x128xf32>
    %c119 = arith.constant 119 : index
    %871 = memref.load %arg3[%c119] : memref<144xf32, #tpu.memory_space<smem>>
    %872 = vector.broadcast %871 : f32 to vector<24x128xf32>
    %873 = arith.mulf %872, %276 : vector<24x128xf32>
    %874 = arith.addf %870, %873 : vector<24x128xf32>
    %c120 = arith.constant 120 : index
    %875 = memref.load %arg3[%c120] : memref<144xf32, #tpu.memory_space<smem>>
    %876 = vector.broadcast %875 : f32 to vector<24x128xf32>
    %877 = arith.mulf %876, %279 : vector<24x128xf32>
    %878 = arith.addf %874, %877 : vector<24x128xf32>
    %c121 = arith.constant 121 : index
    %879 = memref.load %arg3[%c121] : memref<144xf32, #tpu.memory_space<smem>>
    %880 = vector.broadcast %879 : f32 to vector<24x128xf32>
    %881 = arith.mulf %880, %139 : vector<24x128xf32>
    %882 = arith.addf %878, %881 : vector<24x128xf32>
    %c122 = arith.constant 122 : index
    %883 = memref.load %arg3[%c122] : memref<144xf32, #tpu.memory_space<smem>>
    %884 = vector.broadcast %883 : f32 to vector<24x128xf32>
    %885 = arith.mulf %884, %282 : vector<24x128xf32>
    %886 = arith.addf %882, %885 : vector<24x128xf32>
    %c123 = arith.constant 123 : index
    %887 = memref.load %arg3[%c123] : memref<144xf32, #tpu.memory_space<smem>>
    %888 = vector.broadcast %887 : f32 to vector<24x128xf32>
    %889 = arith.mulf %888, %288 : vector<24x128xf32>
    %890 = arith.addf %886, %889 : vector<24x128xf32>
    %c124 = arith.constant 124 : index
    %891 = memref.load %arg3[%c124] : memref<144xf32, #tpu.memory_space<smem>>
    %892 = vector.broadcast %891 : f32 to vector<24x128xf32>
    %893 = arith.mulf %892, %291 : vector<24x128xf32>
    %894 = arith.addf %890, %893 : vector<24x128xf32>
    %c125 = arith.constant 125 : index
    %895 = memref.load %arg3[%c125] : memref<144xf32, #tpu.memory_space<smem>>
    %896 = vector.broadcast %895 : f32 to vector<24x128xf32>
    %897 = arith.mulf %896, %297 : vector<24x128xf32>
    %898 = arith.addf %894, %897 : vector<24x128xf32>
    %c126 = arith.constant 126 : index
    %899 = memref.load %arg3[%c126] : memref<144xf32, #tpu.memory_space<smem>>
    %900 = vector.broadcast %899 : f32 to vector<24x128xf32>
    %901 = arith.mulf %900, %303 : vector<24x128xf32>
    %902 = arith.addf %898, %901 : vector<24x128xf32>
    %c127 = arith.constant 127 : index
    %903 = memref.load %arg3[%c127] : memref<144xf32, #tpu.memory_space<smem>>
    %904 = vector.broadcast %903 : f32 to vector<24x128xf32>
    %905 = arith.mulf %904, %306 : vector<24x128xf32>
    %906 = arith.addf %902, %905 : vector<24x128xf32>
    %c128 = arith.constant 128 : index
    %907 = memref.load %arg3[%c128] : memref<144xf32, #tpu.memory_space<smem>>
    %908 = vector.broadcast %907 : f32 to vector<24x128xf32>
    %909 = arith.mulf %908, %312 : vector<24x128xf32>
    %910 = arith.addf %906, %909 : vector<24x128xf32>
    %c129 = arith.constant 129 : index
    %911 = memref.load %arg3[%c129] : memref<144xf32, #tpu.memory_space<smem>>
    %912 = vector.broadcast %911 : f32 to vector<24x128xf32>
    %913 = arith.mulf %912, %315 : vector<24x128xf32>
    %914 = arith.addf %910, %913 : vector<24x128xf32>
    %c130 = arith.constant 130 : index
    %915 = memref.load %arg3[%c130] : memref<144xf32, #tpu.memory_space<smem>>
    %916 = vector.broadcast %915 : f32 to vector<24x128xf32>
    %917 = arith.mulf %916, %182 : vector<24x128xf32>
    %918 = arith.addf %914, %917 : vector<24x128xf32>
    %c131 = arith.constant 131 : index
    %919 = memref.load %arg3[%c131] : memref<144xf32, #tpu.memory_space<smem>>
    %920 = vector.broadcast %919 : f32 to vector<24x128xf32>
    %921 = arith.mulf %920, %318 : vector<24x128xf32>
    %922 = arith.addf %918, %921 : vector<24x128xf32>
    %c132 = arith.constant 132 : index
    %923 = memref.load %arg3[%c132] : memref<144xf32, #tpu.memory_space<smem>>
    %924 = vector.broadcast %923 : f32 to vector<24x128xf32>
    %925 = arith.mulf %924, %324 : vector<24x128xf32>
    %926 = arith.addf %922, %925 : vector<24x128xf32>
    %c133 = arith.constant 133 : index
    %927 = memref.load %arg3[%c133] : memref<144xf32, #tpu.memory_space<smem>>
    %928 = vector.broadcast %927 : f32 to vector<24x128xf32>
    %929 = arith.mulf %928, %327 : vector<24x128xf32>
    %930 = arith.addf %926, %929 : vector<24x128xf32>
    %c134 = arith.constant 134 : index
    %931 = memref.load %arg3[%c134] : memref<144xf32, #tpu.memory_space<smem>>
    %932 = vector.broadcast %931 : f32 to vector<24x128xf32>
    %933 = arith.mulf %932, %333 : vector<24x128xf32>
    %934 = arith.addf %930, %933 : vector<24x128xf32>
    %c135 = arith.constant 135 : index
    %935 = memref.load %arg3[%c135] : memref<144xf32, #tpu.memory_space<smem>>
    %936 = vector.broadcast %935 : f32 to vector<24x128xf32>
    %937 = arith.mulf %936, %339 : vector<24x128xf32>
    %938 = arith.addf %934, %937 : vector<24x128xf32>
    %c136 = arith.constant 136 : index
    %939 = memref.load %arg3[%c136] : memref<144xf32, #tpu.memory_space<smem>>
    %940 = vector.broadcast %939 : f32 to vector<24x128xf32>
    %941 = arith.mulf %940, %342 : vector<24x128xf32>
    %942 = arith.addf %938, %941 : vector<24x128xf32>
    %c137 = arith.constant 137 : index
    %943 = memref.load %arg3[%c137] : memref<144xf32, #tpu.memory_space<smem>>
    %944 = vector.broadcast %943 : f32 to vector<24x128xf32>
    %945 = arith.mulf %944, %348 : vector<24x128xf32>
    %946 = arith.addf %942, %945 : vector<24x128xf32>
    %c138 = arith.constant 138 : index
    %947 = memref.load %arg3[%c138] : memref<144xf32, #tpu.memory_space<smem>>
    %948 = vector.broadcast %947 : f32 to vector<24x128xf32>
    %949 = arith.mulf %948, %351 : vector<24x128xf32>
    %950 = arith.addf %946, %949 : vector<24x128xf32>
    %c139 = arith.constant 139 : index
    %951 = memref.load %arg3[%c139] : memref<144xf32, #tpu.memory_space<smem>>
    %952 = vector.broadcast %951 : f32 to vector<24x128xf32>
    %953 = arith.mulf %952, %225 : vector<24x128xf32>
    %954 = arith.addf %950, %953 : vector<24x128xf32>
    %c140 = arith.constant 140 : index
    %955 = memref.load %arg3[%c140] : memref<144xf32, #tpu.memory_space<smem>>
    %956 = vector.broadcast %955 : f32 to vector<24x128xf32>
    %957 = arith.mulf %956, %354 : vector<24x128xf32>
    %958 = arith.addf %954, %957 : vector<24x128xf32>
    %c141 = arith.constant 141 : index
    %959 = memref.load %arg3[%c141] : memref<144xf32, #tpu.memory_space<smem>>
    %960 = vector.broadcast %959 : f32 to vector<24x128xf32>
    %961 = arith.mulf %960, %360 : vector<24x128xf32>
    %962 = arith.addf %958, %961 : vector<24x128xf32>
    %c142 = arith.constant 142 : index
    %963 = memref.load %arg3[%c142] : memref<144xf32, #tpu.memory_space<smem>>
    %964 = vector.broadcast %963 : f32 to vector<24x128xf32>
    %965 = arith.mulf %964, %363 : vector<24x128xf32>
    %966 = arith.addf %962, %965 : vector<24x128xf32>
    %c143 = arith.constant 143 : index
    %967 = memref.load %arg3[%c143] : memref<144xf32, #tpu.memory_space<smem>>
    %968 = vector.broadcast %967 : f32 to vector<24x128xf32>
    %969 = arith.mulf %968, %369 : vector<24x128xf32>
    %970 = arith.addf %966, %969 : vector<24x128xf32>
    %cst_65 = arith.constant 0.000000e+00 : f32
    %971 = vector.broadcast %cst_65 : f32 to vector<24x128xf32>
    %972 = arith.maximumf %970, %971 : vector<24x128xf32>
    %973 = arith.mulf %972, %17 : vector<24x128xf32>
    %974 = vector.extract_strided_slice %520 {offsets = [23, 0], sizes = [1, 128], strides = [1, 1]} : vector<24x128xf32> to vector<1x128xf32>
    %975 = vector.extract_strided_slice %520 {offsets = [0, 0], sizes = [23, 128], strides = [1, 1]} : vector<24x128xf32> to vector<23x128xf32>
    %976 = tpu.concatenate %974, %975 in 0 : vector<1x128xf32>, vector<23x128xf32> -> vector<24x128xf32>
    %977 = vector.extract_strided_slice %976 {offsets = [0, 127], sizes = [24, 1], strides = [1, 1]} : vector<24x128xf32> to vector<24x1xf32>
    %978 = vector.extract_strided_slice %976 {offsets = [0, 0], sizes = [24, 127], strides = [1, 1]} : vector<24x128xf32> to vector<24x127xf32>
    %979 = tpu.concatenate %977, %978 in 1 : vector<24x1xf32>, vector<24x127xf32> -> vector<24x128xf32>
    %980 = vector.extract_strided_slice %520 {offsets = [23, 0], sizes = [1, 128], strides = [1, 1]} : vector<24x128xf32> to vector<1x128xf32>
    %981 = vector.extract_strided_slice %520 {offsets = [0, 0], sizes = [23, 128], strides = [1, 1]} : vector<24x128xf32> to vector<23x128xf32>
    %982 = tpu.concatenate %980, %981 in 0 : vector<1x128xf32>, vector<23x128xf32> -> vector<24x128xf32>
    %983 = vector.extract_strided_slice %520 {offsets = [23, 0], sizes = [1, 128], strides = [1, 1]} : vector<24x128xf32> to vector<1x128xf32>
    %984 = vector.extract_strided_slice %520 {offsets = [0, 0], sizes = [23, 128], strides = [1, 1]} : vector<24x128xf32> to vector<23x128xf32>
    %985 = tpu.concatenate %983, %984 in 0 : vector<1x128xf32>, vector<23x128xf32> -> vector<24x128xf32>
    %986 = vector.extract_strided_slice %985 {offsets = [0, 1], sizes = [24, 127], strides = [1, 1]} : vector<24x128xf32> to vector<24x127xf32>
    %987 = vector.extract_strided_slice %985 {offsets = [0, 0], sizes = [24, 1], strides = [1, 1]} : vector<24x128xf32> to vector<24x1xf32>
    %988 = tpu.concatenate %986, %987 in 1 : vector<24x127xf32>, vector<24x1xf32> -> vector<24x128xf32>
    %989 = vector.extract_strided_slice %520 {offsets = [0, 127], sizes = [24, 1], strides = [1, 1]} : vector<24x128xf32> to vector<24x1xf32>
    %990 = vector.extract_strided_slice %520 {offsets = [0, 0], sizes = [24, 127], strides = [1, 1]} : vector<24x128xf32> to vector<24x127xf32>
    %991 = tpu.concatenate %989, %990 in 1 : vector<24x1xf32>, vector<24x127xf32> -> vector<24x128xf32>
    %992 = vector.extract_strided_slice %520 {offsets = [0, 1], sizes = [24, 127], strides = [1, 1]} : vector<24x128xf32> to vector<24x127xf32>
    %993 = vector.extract_strided_slice %520 {offsets = [0, 0], sizes = [24, 1], strides = [1, 1]} : vector<24x128xf32> to vector<24x1xf32>
    %994 = tpu.concatenate %992, %993 in 1 : vector<24x127xf32>, vector<24x1xf32> -> vector<24x128xf32>
    %995 = vector.extract_strided_slice %520 {offsets = [1, 0], sizes = [23, 128], strides = [1, 1]} : vector<24x128xf32> to vector<23x128xf32>
    %996 = vector.extract_strided_slice %520 {offsets = [0, 0], sizes = [1, 128], strides = [1, 1]} : vector<24x128xf32> to vector<1x128xf32>
    %997 = tpu.concatenate %995, %996 in 0 : vector<23x128xf32>, vector<1x128xf32> -> vector<24x128xf32>
    %998 = vector.extract_strided_slice %997 {offsets = [0, 127], sizes = [24, 1], strides = [1, 1]} : vector<24x128xf32> to vector<24x1xf32>
    %999 = vector.extract_strided_slice %997 {offsets = [0, 0], sizes = [24, 127], strides = [1, 1]} : vector<24x128xf32> to vector<24x127xf32>
    %1000 = tpu.concatenate %998, %999 in 1 : vector<24x1xf32>, vector<24x127xf32> -> vector<24x128xf32>
    %1001 = vector.extract_strided_slice %520 {offsets = [1, 0], sizes = [23, 128], strides = [1, 1]} : vector<24x128xf32> to vector<23x128xf32>
    %1002 = vector.extract_strided_slice %520 {offsets = [0, 0], sizes = [1, 128], strides = [1, 1]} : vector<24x128xf32> to vector<1x128xf32>
    %1003 = tpu.concatenate %1001, %1002 in 0 : vector<23x128xf32>, vector<1x128xf32> -> vector<24x128xf32>
    %1004 = vector.extract_strided_slice %520 {offsets = [1, 0], sizes = [23, 128], strides = [1, 1]} : vector<24x128xf32> to vector<23x128xf32>
    %1005 = vector.extract_strided_slice %520 {offsets = [0, 0], sizes = [1, 128], strides = [1, 1]} : vector<24x128xf32> to vector<1x128xf32>
    %1006 = tpu.concatenate %1004, %1005 in 0 : vector<23x128xf32>, vector<1x128xf32> -> vector<24x128xf32>
    %1007 = vector.extract_strided_slice %1006 {offsets = [0, 1], sizes = [24, 127], strides = [1, 1]} : vector<24x128xf32> to vector<24x127xf32>
    %1008 = vector.extract_strided_slice %1006 {offsets = [0, 0], sizes = [24, 1], strides = [1, 1]} : vector<24x128xf32> to vector<24x1xf32>
    %1009 = tpu.concatenate %1007, %1008 in 1 : vector<24x127xf32>, vector<24x1xf32> -> vector<24x128xf32>
    %1010 = vector.extract_strided_slice %671 {offsets = [23, 0], sizes = [1, 128], strides = [1, 1]} : vector<24x128xf32> to vector<1x128xf32>
    %1011 = vector.extract_strided_slice %671 {offsets = [0, 0], sizes = [23, 128], strides = [1, 1]} : vector<24x128xf32> to vector<23x128xf32>
    %1012 = tpu.concatenate %1010, %1011 in 0 : vector<1x128xf32>, vector<23x128xf32> -> vector<24x128xf32>
    %1013 = vector.extract_strided_slice %1012 {offsets = [0, 127], sizes = [24, 1], strides = [1, 1]} : vector<24x128xf32> to vector<24x1xf32>
    %1014 = vector.extract_strided_slice %1012 {offsets = [0, 0], sizes = [24, 127], strides = [1, 1]} : vector<24x128xf32> to vector<24x127xf32>
    %1015 = tpu.concatenate %1013, %1014 in 1 : vector<24x1xf32>, vector<24x127xf32> -> vector<24x128xf32>
    %1016 = vector.extract_strided_slice %671 {offsets = [23, 0], sizes = [1, 128], strides = [1, 1]} : vector<24x128xf32> to vector<1x128xf32>
    %1017 = vector.extract_strided_slice %671 {offsets = [0, 0], sizes = [23, 128], strides = [1, 1]} : vector<24x128xf32> to vector<23x128xf32>
    %1018 = tpu.concatenate %1016, %1017 in 0 : vector<1x128xf32>, vector<23x128xf32> -> vector<24x128xf32>
    %1019 = vector.extract_strided_slice %671 {offsets = [23, 0], sizes = [1, 128], strides = [1, 1]} : vector<24x128xf32> to vector<1x128xf32>
    %1020 = vector.extract_strided_slice %671 {offsets = [0, 0], sizes = [23, 128], strides = [1, 1]} : vector<24x128xf32> to vector<23x128xf32>
    %1021 = tpu.concatenate %1019, %1020 in 0 : vector<1x128xf32>, vector<23x128xf32> -> vector<24x128xf32>
    %1022 = vector.extract_strided_slice %1021 {offsets = [0, 1], sizes = [24, 127], strides = [1, 1]} : vector<24x128xf32> to vector<24x127xf32>
    %1023 = vector.extract_strided_slice %1021 {offsets = [0, 0], sizes = [24, 1], strides = [1, 1]} : vector<24x128xf32> to vector<24x1xf32>
    %1024 = tpu.concatenate %1022, %1023 in 1 : vector<24x127xf32>, vector<24x1xf32> -> vector<24x128xf32>
    %1025 = vector.extract_strided_slice %671 {offsets = [0, 127], sizes = [24, 1], strides = [1, 1]} : vector<24x128xf32> to vector<24x1xf32>
    %1026 = vector.extract_strided_slice %671 {offsets = [0, 0], sizes = [24, 127], strides = [1, 1]} : vector<24x128xf32> to vector<24x127xf32>
    %1027 = tpu.concatenate %1025, %1026 in 1 : vector<24x1xf32>, vector<24x127xf32> -> vector<24x128xf32>
    %1028 = vector.extract_strided_slice %671 {offsets = [0, 1], sizes = [24, 127], strides = [1, 1]} : vector<24x128xf32> to vector<24x127xf32>
    %1029 = vector.extract_strided_slice %671 {offsets = [0, 0], sizes = [24, 1], strides = [1, 1]} : vector<24x128xf32> to vector<24x1xf32>
    %1030 = tpu.concatenate %1028, %1029 in 1 : vector<24x127xf32>, vector<24x1xf32> -> vector<24x128xf32>
    %1031 = vector.extract_strided_slice %671 {offsets = [1, 0], sizes = [23, 128], strides = [1, 1]} : vector<24x128xf32> to vector<23x128xf32>
    %1032 = vector.extract_strided_slice %671 {offsets = [0, 0], sizes = [1, 128], strides = [1, 1]} : vector<24x128xf32> to vector<1x128xf32>
    %1033 = tpu.concatenate %1031, %1032 in 0 : vector<23x128xf32>, vector<1x128xf32> -> vector<24x128xf32>
    %1034 = vector.extract_strided_slice %1033 {offsets = [0, 127], sizes = [24, 1], strides = [1, 1]} : vector<24x128xf32> to vector<24x1xf32>
    %1035 = vector.extract_strided_slice %1033 {offsets = [0, 0], sizes = [24, 127], strides = [1, 1]} : vector<24x128xf32> to vector<24x127xf32>
    %1036 = tpu.concatenate %1034, %1035 in 1 : vector<24x1xf32>, vector<24x127xf32> -> vector<24x128xf32>
    %1037 = vector.extract_strided_slice %671 {offsets = [1, 0], sizes = [23, 128], strides = [1, 1]} : vector<24x128xf32> to vector<23x128xf32>
    %1038 = vector.extract_strided_slice %671 {offsets = [0, 0], sizes = [1, 128], strides = [1, 1]} : vector<24x128xf32> to vector<1x128xf32>
    %1039 = tpu.concatenate %1037, %1038 in 0 : vector<23x128xf32>, vector<1x128xf32> -> vector<24x128xf32>
    %1040 = vector.extract_strided_slice %671 {offsets = [1, 0], sizes = [23, 128], strides = [1, 1]} : vector<24x128xf32> to vector<23x128xf32>
    %1041 = vector.extract_strided_slice %671 {offsets = [0, 0], sizes = [1, 128], strides = [1, 1]} : vector<24x128xf32> to vector<1x128xf32>
    %1042 = tpu.concatenate %1040, %1041 in 0 : vector<23x128xf32>, vector<1x128xf32> -> vector<24x128xf32>
    %1043 = vector.extract_strided_slice %1042 {offsets = [0, 1], sizes = [24, 127], strides = [1, 1]} : vector<24x128xf32> to vector<24x127xf32>
    %1044 = vector.extract_strided_slice %1042 {offsets = [0, 0], sizes = [24, 1], strides = [1, 1]} : vector<24x128xf32> to vector<24x1xf32>
    %1045 = tpu.concatenate %1043, %1044 in 1 : vector<24x127xf32>, vector<24x1xf32> -> vector<24x128xf32>
    %1046 = vector.extract_strided_slice %822 {offsets = [23, 0], sizes = [1, 128], strides = [1, 1]} : vector<24x128xf32> to vector<1x128xf32>
    %1047 = vector.extract_strided_slice %822 {offsets = [0, 0], sizes = [23, 128], strides = [1, 1]} : vector<24x128xf32> to vector<23x128xf32>
    %1048 = tpu.concatenate %1046, %1047 in 0 : vector<1x128xf32>, vector<23x128xf32> -> vector<24x128xf32>
    %1049 = vector.extract_strided_slice %1048 {offsets = [0, 127], sizes = [24, 1], strides = [1, 1]} : vector<24x128xf32> to vector<24x1xf32>
    %1050 = vector.extract_strided_slice %1048 {offsets = [0, 0], sizes = [24, 127], strides = [1, 1]} : vector<24x128xf32> to vector<24x127xf32>
    %1051 = tpu.concatenate %1049, %1050 in 1 : vector<24x1xf32>, vector<24x127xf32> -> vector<24x128xf32>
    %1052 = vector.extract_strided_slice %822 {offsets = [23, 0], sizes = [1, 128], strides = [1, 1]} : vector<24x128xf32> to vector<1x128xf32>
    %1053 = vector.extract_strided_slice %822 {offsets = [0, 0], sizes = [23, 128], strides = [1, 1]} : vector<24x128xf32> to vector<23x128xf32>
    %1054 = tpu.concatenate %1052, %1053 in 0 : vector<1x128xf32>, vector<23x128xf32> -> vector<24x128xf32>
    %1055 = vector.extract_strided_slice %822 {offsets = [23, 0], sizes = [1, 128], strides = [1, 1]} : vector<24x128xf32> to vector<1x128xf32>
    %1056 = vector.extract_strided_slice %822 {offsets = [0, 0], sizes = [23, 128], strides = [1, 1]} : vector<24x128xf32> to vector<23x128xf32>
    %1057 = tpu.concatenate %1055, %1056 in 0 : vector<1x128xf32>, vector<23x128xf32> -> vector<24x128xf32>
    %1058 = vector.extract_strided_slice %1057 {offsets = [0, 1], sizes = [24, 127], strides = [1, 1]} : vector<24x128xf32> to vector<24x127xf32>
    %1059 = vector.extract_strided_slice %1057 {offsets = [0, 0], sizes = [24, 1], strides = [1, 1]} : vector<24x128xf32> to vector<24x1xf32>
    %1060 = tpu.concatenate %1058, %1059 in 1 : vector<24x127xf32>, vector<24x1xf32> -> vector<24x128xf32>
    %1061 = vector.extract_strided_slice %822 {offsets = [0, 127], sizes = [24, 1], strides = [1, 1]} : vector<24x128xf32> to vector<24x1xf32>
    %1062 = vector.extract_strided_slice %822 {offsets = [0, 0], sizes = [24, 127], strides = [1, 1]} : vector<24x128xf32> to vector<24x127xf32>
    %1063 = tpu.concatenate %1061, %1062 in 1 : vector<24x1xf32>, vector<24x127xf32> -> vector<24x128xf32>
    %1064 = vector.extract_strided_slice %822 {offsets = [0, 1], sizes = [24, 127], strides = [1, 1]} : vector<24x128xf32> to vector<24x127xf32>
    %1065 = vector.extract_strided_slice %822 {offsets = [0, 0], sizes = [24, 1], strides = [1, 1]} : vector<24x128xf32> to vector<24x1xf32>
    %1066 = tpu.concatenate %1064, %1065 in 1 : vector<24x127xf32>, vector<24x1xf32> -> vector<24x128xf32>
    %1067 = vector.extract_strided_slice %822 {offsets = [1, 0], sizes = [23, 128], strides = [1, 1]} : vector<24x128xf32> to vector<23x128xf32>
    %1068 = vector.extract_strided_slice %822 {offsets = [0, 0], sizes = [1, 128], strides = [1, 1]} : vector<24x128xf32> to vector<1x128xf32>
    %1069 = tpu.concatenate %1067, %1068 in 0 : vector<23x128xf32>, vector<1x128xf32> -> vector<24x128xf32>
    %1070 = vector.extract_strided_slice %1069 {offsets = [0, 127], sizes = [24, 1], strides = [1, 1]} : vector<24x128xf32> to vector<24x1xf32>
    %1071 = vector.extract_strided_slice %1069 {offsets = [0, 0], sizes = [24, 127], strides = [1, 1]} : vector<24x128xf32> to vector<24x127xf32>
    %1072 = tpu.concatenate %1070, %1071 in 1 : vector<24x1xf32>, vector<24x127xf32> -> vector<24x128xf32>
    %1073 = vector.extract_strided_slice %822 {offsets = [1, 0], sizes = [23, 128], strides = [1, 1]} : vector<24x128xf32> to vector<23x128xf32>
    %1074 = vector.extract_strided_slice %822 {offsets = [0, 0], sizes = [1, 128], strides = [1, 1]} : vector<24x128xf32> to vector<1x128xf32>
    %1075 = tpu.concatenate %1073, %1074 in 0 : vector<23x128xf32>, vector<1x128xf32> -> vector<24x128xf32>
    %1076 = vector.extract_strided_slice %822 {offsets = [1, 0], sizes = [23, 128], strides = [1, 1]} : vector<24x128xf32> to vector<23x128xf32>
    %1077 = vector.extract_strided_slice %822 {offsets = [0, 0], sizes = [1, 128], strides = [1, 1]} : vector<24x128xf32> to vector<1x128xf32>
    %1078 = tpu.concatenate %1076, %1077 in 0 : vector<23x128xf32>, vector<1x128xf32> -> vector<24x128xf32>
    %1079 = vector.extract_strided_slice %1078 {offsets = [0, 1], sizes = [24, 127], strides = [1, 1]} : vector<24x128xf32> to vector<24x127xf32>
    %1080 = vector.extract_strided_slice %1078 {offsets = [0, 0], sizes = [24, 1], strides = [1, 1]} : vector<24x128xf32> to vector<24x1xf32>
    %1081 = tpu.concatenate %1079, %1080 in 1 : vector<24x127xf32>, vector<24x1xf32> -> vector<24x128xf32>
    %1082 = vector.extract_strided_slice %973 {offsets = [23, 0], sizes = [1, 128], strides = [1, 1]} : vector<24x128xf32> to vector<1x128xf32>
    %1083 = vector.extract_strided_slice %973 {offsets = [0, 0], sizes = [23, 128], strides = [1, 1]} : vector<24x128xf32> to vector<23x128xf32>
    %1084 = tpu.concatenate %1082, %1083 in 0 : vector<1x128xf32>, vector<23x128xf32> -> vector<24x128xf32>
    %1085 = vector.extract_strided_slice %1084 {offsets = [0, 127], sizes = [24, 1], strides = [1, 1]} : vector<24x128xf32> to vector<24x1xf32>
    %1086 = vector.extract_strided_slice %1084 {offsets = [0, 0], sizes = [24, 127], strides = [1, 1]} : vector<24x128xf32> to vector<24x127xf32>
    %1087 = tpu.concatenate %1085, %1086 in 1 : vector<24x1xf32>, vector<24x127xf32> -> vector<24x128xf32>
    %1088 = vector.extract_strided_slice %973 {offsets = [23, 0], sizes = [1, 128], strides = [1, 1]} : vector<24x128xf32> to vector<1x128xf32>
    %1089 = vector.extract_strided_slice %973 {offsets = [0, 0], sizes = [23, 128], strides = [1, 1]} : vector<24x128xf32> to vector<23x128xf32>
    %1090 = tpu.concatenate %1088, %1089 in 0 : vector<1x128xf32>, vector<23x128xf32> -> vector<24x128xf32>
    %1091 = vector.extract_strided_slice %973 {offsets = [23, 0], sizes = [1, 128], strides = [1, 1]} : vector<24x128xf32> to vector<1x128xf32>
    %1092 = vector.extract_strided_slice %973 {offsets = [0, 0], sizes = [23, 128], strides = [1, 1]} : vector<24x128xf32> to vector<23x128xf32>
    %1093 = tpu.concatenate %1091, %1092 in 0 : vector<1x128xf32>, vector<23x128xf32> -> vector<24x128xf32>
    %1094 = vector.extract_strided_slice %1093 {offsets = [0, 1], sizes = [24, 127], strides = [1, 1]} : vector<24x128xf32> to vector<24x127xf32>
    %1095 = vector.extract_strided_slice %1093 {offsets = [0, 0], sizes = [24, 1], strides = [1, 1]} : vector<24x128xf32> to vector<24x1xf32>
    %1096 = tpu.concatenate %1094, %1095 in 1 : vector<24x127xf32>, vector<24x1xf32> -> vector<24x128xf32>
    %1097 = vector.extract_strided_slice %973 {offsets = [0, 127], sizes = [24, 1], strides = [1, 1]} : vector<24x128xf32> to vector<24x1xf32>
    %1098 = vector.extract_strided_slice %973 {offsets = [0, 0], sizes = [24, 127], strides = [1, 1]} : vector<24x128xf32> to vector<24x127xf32>
    %1099 = tpu.concatenate %1097, %1098 in 1 : vector<24x1xf32>, vector<24x127xf32> -> vector<24x128xf32>
    %1100 = vector.extract_strided_slice %973 {offsets = [0, 1], sizes = [24, 127], strides = [1, 1]} : vector<24x128xf32> to vector<24x127xf32>
    %1101 = vector.extract_strided_slice %973 {offsets = [0, 0], sizes = [24, 1], strides = [1, 1]} : vector<24x128xf32> to vector<24x1xf32>
    %1102 = tpu.concatenate %1100, %1101 in 1 : vector<24x127xf32>, vector<24x1xf32> -> vector<24x128xf32>
    %1103 = vector.extract_strided_slice %973 {offsets = [1, 0], sizes = [23, 128], strides = [1, 1]} : vector<24x128xf32> to vector<23x128xf32>
    %1104 = vector.extract_strided_slice %973 {offsets = [0, 0], sizes = [1, 128], strides = [1, 1]} : vector<24x128xf32> to vector<1x128xf32>
    %1105 = tpu.concatenate %1103, %1104 in 0 : vector<23x128xf32>, vector<1x128xf32> -> vector<24x128xf32>
    %1106 = vector.extract_strided_slice %1105 {offsets = [0, 127], sizes = [24, 1], strides = [1, 1]} : vector<24x128xf32> to vector<24x1xf32>
    %1107 = vector.extract_strided_slice %1105 {offsets = [0, 0], sizes = [24, 127], strides = [1, 1]} : vector<24x128xf32> to vector<24x127xf32>
    %1108 = tpu.concatenate %1106, %1107 in 1 : vector<24x1xf32>, vector<24x127xf32> -> vector<24x128xf32>
    %1109 = vector.extract_strided_slice %973 {offsets = [1, 0], sizes = [23, 128], strides = [1, 1]} : vector<24x128xf32> to vector<23x128xf32>
    %1110 = vector.extract_strided_slice %973 {offsets = [0, 0], sizes = [1, 128], strides = [1, 1]} : vector<24x128xf32> to vector<1x128xf32>
    %1111 = tpu.concatenate %1109, %1110 in 0 : vector<23x128xf32>, vector<1x128xf32> -> vector<24x128xf32>
    %1112 = vector.extract_strided_slice %973 {offsets = [1, 0], sizes = [23, 128], strides = [1, 1]} : vector<24x128xf32> to vector<23x128xf32>
    %1113 = vector.extract_strided_slice %973 {offsets = [0, 0], sizes = [1, 128], strides = [1, 1]} : vector<24x128xf32> to vector<1x128xf32>
    %1114 = tpu.concatenate %1112, %1113 in 0 : vector<23x128xf32>, vector<1x128xf32> -> vector<24x128xf32>
    %1115 = vector.extract_strided_slice %1114 {offsets = [0, 1], sizes = [24, 127], strides = [1, 1]} : vector<24x128xf32> to vector<24x127xf32>
    %1116 = vector.extract_strided_slice %1114 {offsets = [0, 0], sizes = [24, 1], strides = [1, 1]} : vector<24x128xf32> to vector<24x1xf32>
    %1117 = tpu.concatenate %1115, %1116 in 1 : vector<24x127xf32>, vector<24x1xf32> -> vector<24x128xf32>
    %cst_66 = arith.constant 0.000000e+00 : f32
    %1118 = vector.broadcast %cst_66 : f32 to vector<24x128xf32>
    %c0_67 = arith.constant 0 : index
    %1119 = memref.load %arg6[%c0_67] : memref<1xf32, #tpu.memory_space<smem>>
    %1120 = vector.broadcast %1119 : f32 to vector<24x128xf32>
    %1121 = arith.addf %1118, %1120 : vector<24x128xf32>
    %c0_68 = arith.constant 0 : index
    %1122 = memref.load %arg5[%c0_68] : memref<36xf32, #tpu.memory_space<smem>>
    %1123 = vector.broadcast %1122 : f32 to vector<24x128xf32>
    %1124 = arith.mulf %1123, %979 : vector<24x128xf32>
    %1125 = arith.addf %1121, %1124 : vector<24x128xf32>
    %c1_69 = arith.constant 1 : index
    %1126 = memref.load %arg5[%c1_69] : memref<36xf32, #tpu.memory_space<smem>>
    %1127 = vector.broadcast %1126 : f32 to vector<24x128xf32>
    %1128 = arith.mulf %1127, %982 : vector<24x128xf32>
    %1129 = arith.addf %1125, %1128 : vector<24x128xf32>
    %c2_70 = arith.constant 2 : index
    %1130 = memref.load %arg5[%c2_70] : memref<36xf32, #tpu.memory_space<smem>>
    %1131 = vector.broadcast %1130 : f32 to vector<24x128xf32>
    %1132 = arith.mulf %1131, %988 : vector<24x128xf32>
    %1133 = arith.addf %1129, %1132 : vector<24x128xf32>
    %c3_71 = arith.constant 3 : index
    %1134 = memref.load %arg5[%c3_71] : memref<36xf32, #tpu.memory_space<smem>>
    %1135 = vector.broadcast %1134 : f32 to vector<24x128xf32>
    %1136 = arith.mulf %1135, %991 : vector<24x128xf32>
    %1137 = arith.addf %1133, %1136 : vector<24x128xf32>
    %c4_72 = arith.constant 4 : index
    %1138 = memref.load %arg5[%c4_72] : memref<36xf32, #tpu.memory_space<smem>>
    %1139 = vector.broadcast %1138 : f32 to vector<24x128xf32>
    %1140 = arith.mulf %1139, %520 : vector<24x128xf32>
    %1141 = arith.addf %1137, %1140 : vector<24x128xf32>
    %c5_73 = arith.constant 5 : index
    %1142 = memref.load %arg5[%c5_73] : memref<36xf32, #tpu.memory_space<smem>>
    %1143 = vector.broadcast %1142 : f32 to vector<24x128xf32>
    %1144 = arith.mulf %1143, %994 : vector<24x128xf32>
    %1145 = arith.addf %1141, %1144 : vector<24x128xf32>
    %c6_74 = arith.constant 6 : index
    %1146 = memref.load %arg5[%c6_74] : memref<36xf32, #tpu.memory_space<smem>>
    %1147 = vector.broadcast %1146 : f32 to vector<24x128xf32>
    %1148 = arith.mulf %1147, %1000 : vector<24x128xf32>
    %1149 = arith.addf %1145, %1148 : vector<24x128xf32>
    %c7_75 = arith.constant 7 : index
    %1150 = memref.load %arg5[%c7_75] : memref<36xf32, #tpu.memory_space<smem>>
    %1151 = vector.broadcast %1150 : f32 to vector<24x128xf32>
    %1152 = arith.mulf %1151, %1003 : vector<24x128xf32>
    %1153 = arith.addf %1149, %1152 : vector<24x128xf32>
    %c8_76 = arith.constant 8 : index
    %1154 = memref.load %arg5[%c8_76] : memref<36xf32, #tpu.memory_space<smem>>
    %1155 = vector.broadcast %1154 : f32 to vector<24x128xf32>
    %1156 = arith.mulf %1155, %1009 : vector<24x128xf32>
    %1157 = arith.addf %1153, %1156 : vector<24x128xf32>
    %c9_77 = arith.constant 9 : index
    %1158 = memref.load %arg5[%c9_77] : memref<36xf32, #tpu.memory_space<smem>>
    %1159 = vector.broadcast %1158 : f32 to vector<24x128xf32>
    %1160 = arith.mulf %1159, %1015 : vector<24x128xf32>
    %1161 = arith.addf %1157, %1160 : vector<24x128xf32>
    %c10_78 = arith.constant 10 : index
    %1162 = memref.load %arg5[%c10_78] : memref<36xf32, #tpu.memory_space<smem>>
    %1163 = vector.broadcast %1162 : f32 to vector<24x128xf32>
    %1164 = arith.mulf %1163, %1018 : vector<24x128xf32>
    %1165 = arith.addf %1161, %1164 : vector<24x128xf32>
    %c11_79 = arith.constant 11 : index
    %1166 = memref.load %arg5[%c11_79] : memref<36xf32, #tpu.memory_space<smem>>
    %1167 = vector.broadcast %1166 : f32 to vector<24x128xf32>
    %1168 = arith.mulf %1167, %1024 : vector<24x128xf32>
    %1169 = arith.addf %1165, %1168 : vector<24x128xf32>
    %c12_80 = arith.constant 12 : index
    %1170 = memref.load %arg5[%c12_80] : memref<36xf32, #tpu.memory_space<smem>>
    %1171 = vector.broadcast %1170 : f32 to vector<24x128xf32>
    %1172 = arith.mulf %1171, %1027 : vector<24x128xf32>
    %1173 = arith.addf %1169, %1172 : vector<24x128xf32>
    %c13_81 = arith.constant 13 : index
    %1174 = memref.load %arg5[%c13_81] : memref<36xf32, #tpu.memory_space<smem>>
    %1175 = vector.broadcast %1174 : f32 to vector<24x128xf32>
    %1176 = arith.mulf %1175, %671 : vector<24x128xf32>
    %1177 = arith.addf %1173, %1176 : vector<24x128xf32>
    %c14_82 = arith.constant 14 : index
    %1178 = memref.load %arg5[%c14_82] : memref<36xf32, #tpu.memory_space<smem>>
    %1179 = vector.broadcast %1178 : f32 to vector<24x128xf32>
    %1180 = arith.mulf %1179, %1030 : vector<24x128xf32>
    %1181 = arith.addf %1177, %1180 : vector<24x128xf32>
    %c15_83 = arith.constant 15 : index
    %1182 = memref.load %arg5[%c15_83] : memref<36xf32, #tpu.memory_space<smem>>
    %1183 = vector.broadcast %1182 : f32 to vector<24x128xf32>
    %1184 = arith.mulf %1183, %1036 : vector<24x128xf32>
    %1185 = arith.addf %1181, %1184 : vector<24x128xf32>
    %c16_84 = arith.constant 16 : index
    %1186 = memref.load %arg5[%c16_84] : memref<36xf32, #tpu.memory_space<smem>>
    %1187 = vector.broadcast %1186 : f32 to vector<24x128xf32>
    %1188 = arith.mulf %1187, %1039 : vector<24x128xf32>
    %1189 = arith.addf %1185, %1188 : vector<24x128xf32>
    %c17_85 = arith.constant 17 : index
    %1190 = memref.load %arg5[%c17_85] : memref<36xf32, #tpu.memory_space<smem>>
    %1191 = vector.broadcast %1190 : f32 to vector<24x128xf32>
    %1192 = arith.mulf %1191, %1045 : vector<24x128xf32>
    %1193 = arith.addf %1189, %1192 : vector<24x128xf32>
    %c18_86 = arith.constant 18 : index
    %1194 = memref.load %arg5[%c18_86] : memref<36xf32, #tpu.memory_space<smem>>
    %1195 = vector.broadcast %1194 : f32 to vector<24x128xf32>
    %1196 = arith.mulf %1195, %1051 : vector<24x128xf32>
    %1197 = arith.addf %1193, %1196 : vector<24x128xf32>
    %c19_87 = arith.constant 19 : index
    %1198 = memref.load %arg5[%c19_87] : memref<36xf32, #tpu.memory_space<smem>>
    %1199 = vector.broadcast %1198 : f32 to vector<24x128xf32>
    %1200 = arith.mulf %1199, %1054 : vector<24x128xf32>
    %1201 = arith.addf %1197, %1200 : vector<24x128xf32>
    %c20_88 = arith.constant 20 : index
    %1202 = memref.load %arg5[%c20_88] : memref<36xf32, #tpu.memory_space<smem>>
    %1203 = vector.broadcast %1202 : f32 to vector<24x128xf32>
    %1204 = arith.mulf %1203, %1060 : vector<24x128xf32>
    %1205 = arith.addf %1201, %1204 : vector<24x128xf32>
    %c21_89 = arith.constant 21 : index
    %1206 = memref.load %arg5[%c21_89] : memref<36xf32, #tpu.memory_space<smem>>
    %1207 = vector.broadcast %1206 : f32 to vector<24x128xf32>
    %1208 = arith.mulf %1207, %1063 : vector<24x128xf32>
    %1209 = arith.addf %1205, %1208 : vector<24x128xf32>
    %c22_90 = arith.constant 22 : index
    %1210 = memref.load %arg5[%c22_90] : memref<36xf32, #tpu.memory_space<smem>>
    %1211 = vector.broadcast %1210 : f32 to vector<24x128xf32>
    %1212 = arith.mulf %1211, %822 : vector<24x128xf32>
    %1213 = arith.addf %1209, %1212 : vector<24x128xf32>
    %c23_91 = arith.constant 23 : index
    %1214 = memref.load %arg5[%c23_91] : memref<36xf32, #tpu.memory_space<smem>>
    %1215 = vector.broadcast %1214 : f32 to vector<24x128xf32>
    %1216 = arith.mulf %1215, %1066 : vector<24x128xf32>
    %1217 = arith.addf %1213, %1216 : vector<24x128xf32>
    %c24_92 = arith.constant 24 : index
    %1218 = memref.load %arg5[%c24_92] : memref<36xf32, #tpu.memory_space<smem>>
    %1219 = vector.broadcast %1218 : f32 to vector<24x128xf32>
    %1220 = arith.mulf %1219, %1072 : vector<24x128xf32>
    %1221 = arith.addf %1217, %1220 : vector<24x128xf32>
    %c25_93 = arith.constant 25 : index
    %1222 = memref.load %arg5[%c25_93] : memref<36xf32, #tpu.memory_space<smem>>
    %1223 = vector.broadcast %1222 : f32 to vector<24x128xf32>
    %1224 = arith.mulf %1223, %1075 : vector<24x128xf32>
    %1225 = arith.addf %1221, %1224 : vector<24x128xf32>
    %c26_94 = arith.constant 26 : index
    %1226 = memref.load %arg5[%c26_94] : memref<36xf32, #tpu.memory_space<smem>>
    %1227 = vector.broadcast %1226 : f32 to vector<24x128xf32>
    %1228 = arith.mulf %1227, %1081 : vector<24x128xf32>
    %1229 = arith.addf %1225, %1228 : vector<24x128xf32>
    %c27_95 = arith.constant 27 : index
    %1230 = memref.load %arg5[%c27_95] : memref<36xf32, #tpu.memory_space<smem>>
    %1231 = vector.broadcast %1230 : f32 to vector<24x128xf32>
    %1232 = arith.mulf %1231, %1087 : vector<24x128xf32>
    %1233 = arith.addf %1229, %1232 : vector<24x128xf32>
    %c28_96 = arith.constant 28 : index
    %1234 = memref.load %arg5[%c28_96] : memref<36xf32, #tpu.memory_space<smem>>
    %1235 = vector.broadcast %1234 : f32 to vector<24x128xf32>
    %1236 = arith.mulf %1235, %1090 : vector<24x128xf32>
    %1237 = arith.addf %1233, %1236 : vector<24x128xf32>
    %c29_97 = arith.constant 29 : index
    %1238 = memref.load %arg5[%c29_97] : memref<36xf32, #tpu.memory_space<smem>>
    %1239 = vector.broadcast %1238 : f32 to vector<24x128xf32>
    %1240 = arith.mulf %1239, %1096 : vector<24x128xf32>
    %1241 = arith.addf %1237, %1240 : vector<24x128xf32>
    %c30_98 = arith.constant 30 : index
    %1242 = memref.load %arg5[%c30_98] : memref<36xf32, #tpu.memory_space<smem>>
    %1243 = vector.broadcast %1242 : f32 to vector<24x128xf32>
    %1244 = arith.mulf %1243, %1099 : vector<24x128xf32>
    %1245 = arith.addf %1241, %1244 : vector<24x128xf32>
    %c31_99 = arith.constant 31 : index
    %1246 = memref.load %arg5[%c31_99] : memref<36xf32, #tpu.memory_space<smem>>
    %1247 = vector.broadcast %1246 : f32 to vector<24x128xf32>
    %1248 = arith.mulf %1247, %973 : vector<24x128xf32>
    %1249 = arith.addf %1245, %1248 : vector<24x128xf32>
    %c32_100 = arith.constant 32 : index
    %1250 = memref.load %arg5[%c32_100] : memref<36xf32, #tpu.memory_space<smem>>
    %1251 = vector.broadcast %1250 : f32 to vector<24x128xf32>
    %1252 = arith.mulf %1251, %1102 : vector<24x128xf32>
    %1253 = arith.addf %1249, %1252 : vector<24x128xf32>
    %c33_101 = arith.constant 33 : index
    %1254 = memref.load %arg5[%c33_101] : memref<36xf32, #tpu.memory_space<smem>>
    %1255 = vector.broadcast %1254 : f32 to vector<24x128xf32>
    %1256 = arith.mulf %1255, %1108 : vector<24x128xf32>
    %1257 = arith.addf %1253, %1256 : vector<24x128xf32>
    %c34_102 = arith.constant 34 : index
    %1258 = memref.load %arg5[%c34_102] : memref<36xf32, #tpu.memory_space<smem>>
    %1259 = vector.broadcast %1258 : f32 to vector<24x128xf32>
    %1260 = arith.mulf %1259, %1111 : vector<24x128xf32>
    %1261 = arith.addf %1257, %1260 : vector<24x128xf32>
    %c35_103 = arith.constant 35 : index
    %1262 = memref.load %arg5[%c35_103] : memref<36xf32, #tpu.memory_space<smem>>
    %1263 = vector.broadcast %1262 : f32 to vector<24x128xf32>
    %1264 = arith.mulf %1263, %1117 : vector<24x128xf32>
    %1265 = arith.addf %1261, %1264 : vector<24x128xf32>
    %cst_104 = arith.constant 0.000000e+00 : f32
    %1266 = vector.broadcast %cst_104 : f32 to vector<24x128xf32>
    %1267 = arith.maximumf %1265, %1266 : vector<24x128xf32>
    %1268 = arith.addf %1267, %1 : vector<24x128xf32>
    %c0_105 = arith.constant 0 : index
    %c0_106 = arith.constant 0 : index
    %c0_107 = arith.constant 0 : index
    %1269 = vector.load %arg8[%c0_105, %c0_106, %c0_107] : memref<1x24x128xf32, #tpu.memory_space<vmem>>, vector<1x24x128xf32>
    %1270 = vector.shape_cast %1269 : vector<1x24x128xf32> to vector<24x128xf32>
    %1271 = vector.shape_cast %1268 : vector<24x128xf32> to vector<1x24x128xf32>
    tpu.vector_store %arg8[%c0_105, %c0_106, %c0_107], %1271 {strides = array<i32>} : memref<1x24x128xf32, #tpu.memory_space<vmem>>, vector<1x24x128xf32>,
    return
  }
  func.func @transform_0(%arg0: i32) -> i32 {
    %c0_i32 = arith.constant 0 : i32
    %c0_i32_0 = arith.constant 0 : i32
    return %c0_i32 : i32
  }
  func.func @transform_1(%arg0: i32) -> i32 {
    %c0_i32 = arith.constant 0 : i32
    %c0_i32_0 = arith.constant 0 : i32
    return %c0_i32 : i32
  }
  func.func @transform_2(%arg0: i32) -> i32 {
    %c0_i32 = arith.constant 0 : i32
    %c0_i32_0 = arith.constant 0 : i32
    return %c0_i32 : i32
  }
  func.func @transform_3(%arg0: i32) -> i32 {
    %c0_i32 = arith.constant 0 : i32
    %c0_i32_0 = arith.constant 0 : i32
    return %c0_i32 : i32
  }
  func.func @transform_4(%arg0: i32) -> i32 {
    %c0_i32 = arith.constant 0 : i32
    %c0_i32_0 = arith.constant 0 : i32
    return %c0_i32 : i32
  }
  func.func @transform_5(%arg0: i32) -> i32 {
    %c0_i32 = arith.constant 0 : i32
    %c0_i32_0 = arith.constant 0 : i32
    return %c0_i32 : i32
  }
  func.func @transform_6(%arg0: i32) -> (i32, i32, i32) {
    %c0_i32 = arith.constant 0 : i32
    %c0_i32_0 = arith.constant 0 : i32
    %c0_i32_1 = arith.constant 0 : i32
    return %arg0, %c0_i32, %c0_i32_0 : i32, i32, i32
  }
  func.func @transform_7(%arg0: i32) -> (i32, i32, i32) {
    %c0_i32 = arith.constant 0 : i32
    %c0_i32_0 = arith.constant 0 : i32
    %c0_i32_1 = arith.constant 0 : i32
    return %arg0, %c0_i32, %c0_i32_0 : i32, i32, i32
  }
}

</mosaic_0001>

<llo_original>
// kernel: tpu_custom_call.1
$region0: #{tpu_custom_call.1}
  #allocation0 [shape = 'u32[]', space=smem, size = 0x4, offset = 0x4, fixed_abs, tag = 'smem constant byte address 0x4 - core index']
  #allocation1 [shape = 'u32[144,128]{1,0:T(1,128)}', space=vmem, size = 0x12000, scoped, tag = 'internal scratch']
  #allocation2 [shape = 'f32[1]{0:T(128)S(6)}', space=smem, size = 0x200, scoped, tag = 'scoped memory for tpu_custom_call.1']
  %s0 = inlined_call_operand.vmem [shape: f32[36], index: 0, kind: input, shape index: {}]
  %s1 = inlined_call_operand.vmem [shape: f32[4], index: 1, kind: input, shape index: {}]
  %s2 = inlined_call_operand.vmem [shape: f32[144], index: 2, kind: input, shape index: {}]
  %s3 = inlined_call_operand.vmem [shape: f32[4], index: 3, kind: input, shape index: {}]
  %s4 = inlined_call_operand.vmem [shape: f32[36], index: 4, kind: input, shape index: {}]
  %s5 = inlined_call_operand.<no memory space> [shape: f32[1], index: 5, kind: input, shape index: {}]
  %s6 = inlined_call_operand.hbm [shape: f32[2,24,128], index: 6, kind: input, shape index: {}]
  %s7 = inlined_call_operand.hbm [shape: f32[2,24,128], index: 7, kind: output, shape index: {}]
  %s8 = sld [smem:[#allocation0]]
  $region85: #{tpu_custom_call.1} parent=0
    _
  %s10 = ssub.s32 1, %s8
  %s11 = scalar_select 0, %s10, %s8
  %12 = sst [smem:[#allocation2]] %s5
  $region1: #{tpu_custom_call.1} parent=0
    #allocation3 [shape = 'u8[512]{0}', space=smem, size = 0x200, scoped, tag = 'input window, operand 0, single buffered']
    #allocation4 [shape = 's32[2]{0}', space=sflag, size = 0x8, scoped, tag = 'scoped memory for tpu_custom_call.1']
    #allocation5 [shape = 's32[2]{0}', space=sflag, size = 0x8, scoped, tag = 'scoped memory for tpu_custom_call.1']
    #allocation6 [shape = 's32[2]{0}', space=sflag, size = 0x8, scoped, tag = 'scoped memory for tpu_custom_call.1']
    #allocation7 [shape = 'u8[512]{0}', space=smem, size = 0x200, scoped, tag = 'input window, operand 1, single buffered']
    #allocation8 [shape = 's32[1]{0}', space=sflag, size = 0x4, scoped, tag = 'scoped memory for tpu_custom_call.1']
    #allocation9 [shape = 'u8[1024]{0}', space=smem, size = 0x400, scoped, tag = 'input window, operand 2, single buffered']
    #allocation10 [shape = 'u8[512]{0}', space=smem, size = 0x200, scoped, tag = 'input window, operand 3, single buffered']
    #allocation11 [shape = 's32[1]{0}', space=sflag, size = 0x4, scoped, tag = 'scoped memory for tpu_custom_call.1']
    #allocation12 [shape = 'u8[512]{0}', space=smem, size = 0x200, scoped, tag = 'input window, operand 4, single buffered']
    #allocation13 [shape = 'u8[24576]{0}', space=vmem, size = 0x6000, scoped, tag = 'input window, operand 6']
    #allocation14 [shape = 'u8[24576]{0}', space=vmem, size = 0x6000, scoped, tag = 'output window, operand 0']
    %13 = vsyncpa [#allocation6], 0
    %14 = vsyncpa [#allocation8], 0
    %15 = vsyncpa [#allocation11], 0
    %16 = vsyncpa [#allocation4], 0
    %s17 = scalar_lea.sflag [#allocation4], 1
    %18 = vsyncpa %s17, 0
    %19 = vsyncpa [#allocation5], 0
    %s20 = scalar_lea.sflag [#allocation5], 1
    %21 = vsyncpa %s20, 0
    loop: start=0, step=1, limit=4
    $region2: #{tpu_custom_call.1} parent=1 // loop_pre_header
      _
    $region3: #{tpu_custom_call.1} parent=1 // loop_header
      %s23 = sphi 0, %s27
      %p24 = scmp.ge.s32.totalorder %s23, 4
      %s31 = sphi 0, %s31
      %s33 = sphi 0, %s31
      %s34 = sphi 0, %s33
      %s48 = sphi 0, %s34
      %s52 = sphi 0, %s52
      %s54 = sphi 0, %s52
      %s55 = sphi 0, %s54
      %s69 = sphi 0, %s55
      %s73 = sphi 0, %s73
      %s75 = sphi 0, %s73
      %s76 = sphi 0, %s75
      %s90 = sphi 0, %s76
      %s94 = sphi 0, %s94
      %s96 = sphi 0, %s94
      %s97 = sphi 0, %s96
      %s111 = sphi 0, %s97
      %s115 = sphi 0, %s115
      %s117 = sphi 0, %s115
      %s118 = sphi 0, %s117
      %s132 = sphi 0, %s118
      %s136 = sphi 0, %s136
      %s138 = sphi 0, %s136
      %s139 = sphi 0, %s138
      %s153 = sphi 0, %s139
      %s159 = sphi 0, %s161
      %s162 = sphi 0, %s159
      %s163 = sphi 0, %s162
      %s179 = sphi 0, %s163
      %s185 = sphi 0, %s187
      %s188 = sphi 0, %s185
      %s189 = sphi 0, %s188
      %s205 = sphi 0, %s189
    $region4: #{tpu_custom_call.1} parent=1 // loop_header_branch
      %26 = sbr.rel (%p24) target = $region8
    $region5: #{tpu_custom_call.1} parent=1 // loop_body
      %s28 = ssub.s32 %s23, 1
      %s29 = ssub.s32 %s23, 2
      %s30 = sadd.s32 %s23, 1
      %s32 = sadd.s32 %s31, 1
      %p35 = scmp.eq.s32.totalorder %s23, 1
      %p36 = scmp.ne.s32.totalorder %s31, %s33
      %p37 = scmp.eq.s32.totalorder %s23, 0
      %p38 = por %p36, %p37
      %p39 = scmp.ne.s32.totalorder %s31, %s33
      %p40 = scmp.eq.s32.totalorder %s28, 1
      %p41 = por %p39, %p40
      %p42 = scmp.ne.s32.totalorder %s33, %s34
      %p43 = scmp.eq.s32.totalorder %s28, 0
      %p44 = por %p42, %p43
      %p45 = scmp.ne.s32.totalorder %s33, %s34
      %p46 = scmp.eq.s32.totalorder %s29, 1
      %p47 = por %p45, %p46
      %p49 = scmp.ne.s32.totalorder %s34, %s48
      %p50 = scmp.eq.s32.totalorder %s29, 0
      %p51 = por %p49, %p50
      %s53 = sadd.s32 %s52, 1
      %p56 = scmp.eq.s32.totalorder %s23, 1
      %p57 = scmp.ne.s32.totalorder %s52, %s54
      %p58 = scmp.eq.s32.totalorder %s23, 0
      %p59 = por %p57, %p58
      %p60 = scmp.ne.s32.totalorder %s52, %s54
      %p61 = scmp.eq.s32.totalorder %s28, 1
      %p62 = por %p60, %p61
      %p63 = scmp.ne.s32.totalorder %s54, %s55
      %p64 = scmp.eq.s32.totalorder %s28, 0
      %p65 = por %p63, %p64
      %p66 = scmp.ne.s32.totalorder %s54, %s55
      %p67 = scmp.eq.s32.totalorder %s29, 1
      %p68 = por %p66, %p67
      %p70 = scmp.ne.s32.totalorder %s55, %s69
      %p71 = scmp.eq.s32.totalorder %s29, 0
      %p72 = por %p70, %p71
      %s74 = sadd.s32 %s73, 1
      %p77 = scmp.eq.s32.totalorder %s23, 1
      %p78 = scmp.ne.s32.totalorder %s73, %s75
      %p79 = scmp.eq.s32.totalorder %s23, 0
      %p80 = por %p78, %p79
      %p81 = scmp.ne.s32.totalorder %s73, %s75
      %p82 = scmp.eq.s32.totalorder %s28, 1
      %p83 = por %p81, %p82
      %p84 = scmp.ne.s32.totalorder %s75, %s76
      %p85 = scmp.eq.s32.totalorder %s28, 0
      %p86 = por %p84, %p85
      %p87 = scmp.ne.s32.totalorder %s75, %s76
      %p88 = scmp.eq.s32.totalorder %s29, 1
      %p89 = por %p87, %p88
      %p91 = scmp.ne.s32.totalorder %s76, %s90
      %p92 = scmp.eq.s32.totalorder %s29, 0
      %p93 = por %p91, %p92
      %s95 = sadd.s32 %s94, 1
      %p98 = scmp.eq.s32.totalorder %s23, 1
      %p99 = scmp.ne.s32.totalorder %s94, %s96
      %p100 = scmp.eq.s32.totalorder %s23, 0
      %p101 = por %p99, %p100
      %p102 = scmp.ne.s32.totalorder %s94, %s96
      %p103 = scmp.eq.s32.totalorder %s28, 1
      %p104 = por %p102, %p103
      %p105 = scmp.ne.s32.totalorder %s96, %s97
      %p106 = scmp.eq.s32.totalorder %s28, 0
      %p107 = por %p105, %p106
      %p108 = scmp.ne.s32.totalorder %s96, %s97
      %p109 = scmp.eq.s32.totalorder %s29, 1
      %p110 = por %p108, %p109
      %p112 = scmp.ne.s32.totalorder %s97, %s111
      %p113 = scmp.eq.s32.totalorder %s29, 0
      %p114 = por %p112, %p113
      %s116 = sadd.s32 %s115, 1
      %p119 = scmp.eq.s32.totalorder %s23, 1
      %p120 = scmp.ne.s32.totalorder %s115, %s117
      %p121 = scmp.eq.s32.totalorder %s23, 0
      %p122 = por %p120, %p121
      %p123 = scmp.ne.s32.totalorder %s115, %s117
      %p124 = scmp.eq.s32.totalorder %s28, 1
      %p125 = por %p123, %p124
      %p126 = scmp.ne.s32.totalorder %s117, %s118
      %p127 = scmp.eq.s32.totalorder %s28, 0
      %p128 = por %p126, %p127
      %p129 = scmp.ne.s32.totalorder %s117, %s118
      %p130 = scmp.eq.s32.totalorder %s29, 1
      %p131 = por %p129, %p130
      %p133 = scmp.ne.s32.totalorder %s118, %s132
      %p134 = scmp.eq.s32.totalorder %s29, 0
      %p135 = por %p133, %p134
      %s137 = sadd.s32 %s136, 1
      %p140 = scmp.eq.s32.totalorder %s23, 1
      %p141 = scmp.ne.s32.totalorder %s136, %s138
      %p142 = scmp.eq.s32.totalorder %s23, 0
      %p143 = por %p141, %p142
      %p144 = scmp.ne.s32.totalorder %s136, %s138
      %p145 = scmp.eq.s32.totalorder %s28, 1
      %p146 = por %p144, %p145
      %p147 = scmp.ne.s32.totalorder %s138, %s139
      %p148 = scmp.eq.s32.totalorder %s28, 0
      %p149 = por %p147, %p148
      %p150 = scmp.ne.s32.totalorder %s138, %s139
      %p151 = scmp.eq.s32.totalorder %s29, 1
      %p152 = por %p150, %p151
      %p154 = scmp.ne.s32.totalorder %s139, %s153
      %p155 = scmp.eq.s32.totalorder %s29, 0
      %p156 = por %p154, %p155
      %s157 = ssub.s32 %s23, %s30
      %p158 = scmp.eq.s32.totalorder %s157, 0
      %s160 = sadd.s32 %s159, 1
      %s161 = scalar_select %p158, %s159, %s160
      %p164 = pneg %p158
      %p165 = scmp.eq.s32.totalorder %s23, 1
      %p166 = por %p164, %p165
      %p167 = scmp.ne.s32.totalorder %s159, %s162
      %p168 = scmp.eq.s32.totalorder %s23, 0
      %p169 = por %p167, %p168
      %p170 = scmp.ne.s32.totalorder %s159, %s162
      %p171 = scmp.eq.s32.totalorder %s28, 1
      %p172 = por %p170, %p171
      %p173 = scmp.ne.s32.totalorder %s162, %s163
      %p174 = scmp.eq.s32.totalorder %s28, 0
      %p175 = por %p173, %p174
      %p176 = scmp.ne.s32.totalorder %s162, %s163
      %p177 = scmp.eq.s32.totalorder %s29, 1
      %p178 = por %p176, %p177
      %p180 = scmp.ne.s32.totalorder %s163, %s179
      %p181 = scmp.eq.s32.totalorder %s29, 0
      %p182 = por %p180, %p181
      %s183 = ssub.s32 %s23, %s30
      %p184 = scmp.eq.s32.totalorder %s183, 0
      %s186 = sadd.s32 %s185, 1
      %s187 = scalar_select %p184, %s185, %s186
      %p190 = pneg %p184
      %p191 = scmp.eq.s32.totalorder %s23, 1
      %p192 = por %p190, %p191
      %p193 = scmp.ne.s32.totalorder %s185, %s188
      %p194 = scmp.eq.s32.totalorder %s23, 0
      %p195 = por %p193, %p194
      %p196 = scmp.ne.s32.totalorder %s185, %s188
      %p197 = scmp.eq.s32.totalorder %s28, 1
      %p198 = por %p196, %p197
      %p199 = scmp.ne.s32.totalorder %s188, %s189
      %p200 = scmp.eq.s32.totalorder %s28, 0
      %p201 = por %p199, %p200
      %p202 = scmp.ne.s32.totalorder %s188, %s189
      %p203 = scmp.eq.s32.totalorder %s29, 1
      %p204 = por %p202, %p203
      %p206 = scmp.ne.s32.totalorder %s189, %s205
      %p207 = scmp.eq.s32.totalorder %s29, 0
      %p208 = por %p206, %p207
      %p209 = scmp.le.s32.totalorder 1, %s23
      %p210 = scmp.lt.s32.totalorder %s23, 3
      %p211 = pnand %p209, %p210
      %p212 = pneg %p211
      // Predicated region
      $region9: #{tpu_custom_call.1} parent=5 // pred_check
        _
      $region10: #{tpu_custom_call.1} parent=5 // pred_check_branch
        %214 = sbr.rel (%p211) target = $region12
      $region11: #{tpu_custom_call.1} parent=5 // pred_region
        %s215 = ssub.s32 %s23, 1
        // Predicated region
        $region13: #{tpu_custom_call.1} parent=11 // pred_check
          %p216 = pneg %p44
        $region14: #{tpu_custom_call.1} parent=11 // pred_check_branch
          %218 = sbr.rel (%p216) target = $region16
        $region15: #{tpu_custom_call.1} parent=11 // pred_region
          %s220 = ssub.s32 16, 16
          %221 = vsyncadd [#allocation6], %s220
          %s223 = sshll.u32 %s0, 4
          %s224 = int_to_ptr.vmem [resolvable:$true] %s223
          %226 = dma.vmem_to_smem %s224, 16, [#allocation3], [#allocation6]
        $region16: #{tpu_custom_call.1} parent=11 // pred_fallthru
          _
        // Predicated region
        $region17: #{tpu_custom_call.1} parent=11 // pred_check
          %p227 = pneg %p65
        $region18: #{tpu_custom_call.1} parent=11 // pred_check_branch
          %229 = sbr.rel (%p227) target = $region20
        $region19: #{tpu_custom_call.1} parent=11 // pred_region
          %s231 = ssub.s32 16, 16
          %232 = vsyncadd [#allocation8], %s231
          %s234 = sshll.u32 %s1, 4
          %s235 = int_to_ptr.vmem [resolvable:$true] %s234
          %237 = dma.vmem_to_smem %s235, 16, [#allocation7], [#allocation8]
        $region20: #{tpu_custom_call.1} parent=11 // pred_fallthru
          _
        // Predicated region
        $region21: #{tpu_custom_call.1} parent=11 // pred_check
          %p238 = pneg %p86
        $region22: #{tpu_custom_call.1} parent=11 // pred_check_branch
          %240 = sbr.rel (%p238) target = $region24
        $region23: #{tpu_custom_call.1} parent=11 // pred_region
          %s242 = ssub.s32 32, 32
          %243 = vsyncadd [#allocation8], %s242
          %s245 = sshll.u32 %s2, 4
          %s246 = int_to_ptr.vmem [resolvable:$true] %s245
          %248 = dma.vmem_to_smem %s246, 32, [#allocation9], [#allocation8]
        $region24: #{tpu_custom_call.1} parent=11 // pred_fallthru
          _
        // Predicated region
        $region25: #{tpu_custom_call.1} parent=11 // pred_check
          %p249 = pneg %p107
        $region26: #{tpu_custom_call.1} parent=11 // pred_check_branch
          %251 = sbr.rel (%p249) target = $region28
        $region27: #{tpu_custom_call.1} parent=11 // pred_region
          %s253 = ssub.s32 16, 16
          %254 = vsyncadd [#allocation11], %s253
          %s256 = sshll.u32 %s3, 4
          %s257 = int_to_ptr.vmem [resolvable:$true] %s256
          %259 = dma.vmem_to_smem %s257, 16, [#allocation10], [#allocation11]
        $region28: #{tpu_custom_call.1} parent=11 // pred_fallthru
          _
        // Predicated region
        $region29: #{tpu_custom_call.1} parent=11 // pred_check
          %p260 = pneg %p128
        $region30: #{tpu_custom_call.1} parent=11 // pred_check_branch
          %262 = sbr.rel (%p260) target = $region32
        $region31: #{tpu_custom_call.1} parent=11 // pred_region
          %s264 = ssub.s32 16, 16
          %265 = vsyncadd [#allocation11], %s264
          %s267 = sshll.u32 %s4, 4
          %s268 = int_to_ptr.vmem [resolvable:$true] %s267
          %270 = dma.vmem_to_smem %s268, 16, [#allocation12], [#allocation11]
        $region32: #{tpu_custom_call.1} parent=11 // pred_fallthru
          _
        // Predicated region
        $region33: #{tpu_custom_call.1} parent=11 // pred_check
          %p271 = pneg %p149
        $region34: #{tpu_custom_call.1} parent=11 // pred_check_branch
          %273 = sbr.rel (%p271) target = $region36
        $region35: #{tpu_custom_call.1} parent=11 // pred_region
          _
        $region36: #{tpu_custom_call.1} parent=11 // pred_fallthru
          _
      $region12: #{tpu_custom_call.1} parent=5 // pred_fallthru
        _
      %p274 = scmp.lt.s32.totalorder %s23, 2
      // Predicated region
      $region37: #{tpu_custom_call.1} parent=5 // pred_check
        %p275 = pneg %p274
      $region38: #{tpu_custom_call.1} parent=5 // pred_check_branch
        %277 = sbr.rel (%p275) target = $region40
      $region39: #{tpu_custom_call.1} parent=5 // pred_region
        // Predicated region
        $region41: #{tpu_custom_call.1} parent=39 // pred_check
          %p278 = pneg %p169
        $region42: #{tpu_custom_call.1} parent=39 // pred_check_branch
          %280 = sbr.rel (%p278) target = $region44
        $region43: #{tpu_custom_call.1} parent=39 // pred_region
          %s281 = sand.u32 %s159, 1
          %s282 = scalar_lea.sflag [#allocation4], %s281
          %s283 = sand.u32 %s159, 1
          %s284 = smul.addr %s283, 24
          %s285 = scalar_lea.vmem [#allocation13], %s284
          %s287 = ssub.s32 384, 384
          %288 = vsyncadd %s282, %s287
          %s289 = smul.addr %s23, 3
          %s290 = smul.addr %s289, 128
          %s291 = scalar_lea.hbm %s6, %s290
          %s292 = sshll.u32 %s285, 4
          %s293 = int_to_ptr.vmem [resolvable:$true] %s292
          %298 = dma.hbm_to_vmem [thread:$0]  %s291, 384, %s293, %s282, 128, 128, 8
        $region44: #{tpu_custom_call.1} parent=39 // pred_fallthru
          _
      $region40: #{tpu_custom_call.1} parent=5 // pred_fallthru
        _
      %p299 = scmp.le.s32.totalorder 1, %s23
      %p300 = scmp.lt.s32.totalorder %s23, 3
      %p301 = pnand %p299, %p300
      %p302 = pneg %p301
      // Predicated region
      $region45: #{tpu_custom_call.1} parent=5 // pred_check
        _
      $region46: #{tpu_custom_call.1} parent=5 // pred_check_branch
        %304 = sbr.rel (%p301) target = $region48
      $region47: #{tpu_custom_call.1} parent=5 // pred_region
        %s305 = ssub.s32 %s23, 1
        // Predicated region
        $region49: #{tpu_custom_call.1} parent=47 // pred_check
          %p306 = pneg %p44
        $region50: #{tpu_custom_call.1} parent=47 // pred_check_branch
          %308 = sbr.rel (%p306) target = $region52
        $region51: #{tpu_custom_call.1} parent=47 // pred_region
          %309 = dma.done [#allocation6], 16
        $region52: #{tpu_custom_call.1} parent=47 // pred_fallthru
          _
        // Predicated region
        $region53: #{tpu_custom_call.1} parent=47 // pred_check
          %p310 = pneg %p65
        $region54: #{tpu_custom_call.1} parent=47 // pred_check_branch
          %312 = sbr.rel (%p310) target = $region56
        $region55: #{tpu_custom_call.1} parent=47 // pred_region
          %313 = dma.done [#allocation8], 16
        $region56: #{tpu_custom_call.1} parent=47 // pred_fallthru
          _
        // Predicated region
        $region57: #{tpu_custom_call.1} parent=47 // pred_check
          %p314 = pneg %p86
        $region58: #{tpu_custom_call.1} parent=47 // pred_check_branch
          %316 = sbr.rel (%p314) target = $region60
        $region59: #{tpu_custom_call.1} parent=47 // pred_region
          %317 = dma.done [#allocation8], 32
        $region60: #{tpu_custom_call.1} parent=47 // pred_fallthru
          _
        // Predicated region
        $region61: #{tpu_custom_call.1} parent=47 // pred_check
          %p318 = pneg %p107
        $region62: #{tpu_custom_call.1} parent=47 // pred_check_branch
          %320 = sbr.rel (%p318) target = $region64
        $region63: #{tpu_custom_call.1} parent=47 // pred_region
          %321 = dma.done [#allocation11], 16
        $region64: #{tpu_custom_call.1} parent=47 // pred_fallthru
          _
        // Predicated region
        $region65: #{tpu_custom_call.1} parent=47 // pred_check
          %p322 = pneg %p128
        $region66: #{tpu_custom_call.1} parent=47 // pred_check_branch
          %324 = sbr.rel (%p322) target = $region68
        $region67: #{tpu_custom_call.1} parent=47 // pred_region
          %325 = dma.done [#allocation11], 16
        $region68: #{tpu_custom_call.1} parent=47 // pred_fallthru
          _
        %s326 = sand.u32 %s162, 1
        %s327 = scalar_lea.sflag [#allocation4], %s326
        %s328 = sand.u32 %s162, 1
        %s329 = smul.addr %s328, 24
        %s330 = scalar_lea.vmem [#allocation13], %s329
        // Predicated region
        $region69: #{tpu_custom_call.1} parent=47 // pred_check
          %p331 = pneg %p175
        $region70: #{tpu_custom_call.1} parent=47 // pred_check_branch
          %333 = sbr.rel (%p331) target = $region72
        $region71: #{tpu_custom_call.1} parent=47 // pred_region
          %334 = dma.done %s327, 384
        $region72: #{tpu_custom_call.1} parent=47 // pred_fallthru
          _
        %335 = sfence
        %p336 = pneg %p44
        %p337 = pneg %p41
        %p338 = pneg %p65
        %p339 = pneg %p62
        %p340 = pneg %p86
        %p341 = pneg %p83
        %p342 = pneg %p107
        %p343 = pneg %p104
        %p344 = pneg %p128
        %p345 = pneg %p125
        %p346 = pneg %p149
        %p347 = pneg %p146
        %s348 = sand.u32 %s162, 1
        %s349 = scalar_lea.sflag [#allocation4], %s348
        %s350 = sand.u32 %s162, 1
        %s351 = smul.addr %s350, 24
        %s352 = scalar_lea.vmem [#allocation13], %s351
        %p353 = pneg %p175
        %p354 = pneg %p172
        %p355 = pneg %p201
        %p356 = pneg %p198
        %s357 = sand.u32 %s188, 1
        %s358 = scalar_lea.sflag [#allocation5], %s357
        %s359 = sand.u32 %s188, 1
        %s360 = smul.addr %s359, 24
        %s361 = scalar_lea.vmem [#allocation14], %s360
        %v362 = vld [vmem:[%s330] sm:$0xff]
        %v363 = vld [vmem:[%s330 + $0x8] sm:$0xff]
        %v364 = vld [vmem:[%s330 + $0x10] sm:$0xff]
        %v365 = vlaneseq
        %v366 = vshrl.u32 %v365, 7
        %v367 = vadd.s32 %v366, 8
        %v368 = vadd.s32 %v366, 16
        %v369 = vlaneseq
        %v370 = vand.u32 %v369, 127
        %vm371 = vcmp.ge.s32.totalorder %v366, 1
        %vm372 = vcmp.ge.s32.totalorder %v367, 1
        %vm373 = vcmp.ge.s32.totalorder %v368, 1
        %vm374 = vcmp.le.s32.totalorder %v366, 16
        %vm375 = vcmp.le.s32.totalorder %v367, 16
        %vm376 = vcmp.le.s32.totalorder %v368, 16
        %vm377 = vmand %vm371, %vm374
        %vm378 = vmand %vm372, %vm375
        %vm379 = vmand %vm373, %vm376
        %vm380 = vcmp.ge.s32.totalorder %v370, 1
        %vm381 = vmand %vm377, %vm380
        %vm382 = vmand %vm378, %vm380
        %vm383 = vmand %vm379, %vm380
        %vm384 = vcmp.le.s32.totalorder %v370, 16
        %vm385 = vmand %vm381, %vm384
        %vm386 = vmand %vm382, %vm384
        %vm387 = vmand %vm383, %vm384
        %v388 = vsel %vm385, 1.0, 0.0
        %v389 = vsel %vm386, 1.0, 0.0
        %v390 = vsel %vm387, 1.0, 0.0
        %v392 = vrot.slane %v364, 7
        %vm396 = vcmask 1040384
        %v397 = vrot.slane %v362, 7
        %v398 = vrot.slane %v363, 7
        %v399 = vsel %vm396, %v397, %v398
        %v400 = vsel %vm396, %v398, %v392
        %v404 = vsel %vm396, %v392, %v397
        %406 = vrot.lane.b32.xlu0 %v404, 1
        %v407 = vpop.permute.xlu0 %406
        %408 = vrot.lane.b32.xlu0 %v399, 1
        %v409 = vpop.permute.xlu0 %408
        %410 = vrot.lane.b32.xlu0 %v400, 1
        %v411 = vpop.permute.xlu0 %410
        %415 = vrot.lane.b32.xlu0 %v404, 127
        %v416 = vpop.permute.xlu0 %415
        %417 = vrot.lane.b32.xlu0 %v399, 127
        %v418 = vpop.permute.xlu0 %417
        %419 = vrot.lane.b32.xlu0 %v400, 127
        %v420 = vpop.permute.xlu0 %419
        %424 = vrot.lane.b32.xlu0 %v362, 1
        %v425 = vpop.permute.xlu0 %424
        %426 = vrot.lane.b32.xlu0 %v363, 1
        %v427 = vpop.permute.xlu0 %426
        %428 = vrot.lane.b32.xlu0 %v364, 1
        %v429 = vpop.permute.xlu0 %428
        %433 = vrot.lane.b32.xlu0 %v362, 127
        %v434 = vpop.permute.xlu0 %433
        %435 = vrot.lane.b32.xlu0 %v363, 127
        %v436 = vpop.permute.xlu0 %435
        %437 = vrot.lane.b32.xlu0 %v364, 127
        %v438 = vpop.permute.xlu0 %437
        %vm442 = vcmask 1046528
        %v443 = vrot.slane %v362, 1
        %v444 = vrot.slane %v363, 1
        %v445 = vsel %vm442, %v443, %v444
        %v446 = vrot.slane %v364, 1
        %v447 = vsel %vm442, %v444, %v446
        %v452 = vsel %vm442, %v446, %v443
        %454 = vrot.lane.b32.xlu0 %v445, 1
        %v455 = vpop.permute.xlu0 %454
        %456 = vrot.lane.b32.xlu0 %v447, 1
        %v457 = vpop.permute.xlu0 %456
        %458 = vrot.lane.b32.xlu0 %v452, 1
        %v459 = vpop.permute.xlu0 %458
        %463 = vrot.lane.b32.xlu0 %v445, 127
        %v464 = vpop.permute.xlu0 %463
        %465 = vrot.lane.b32.xlu0 %v447, 127
        %v466 = vpop.permute.xlu0 %465
        %467 = vrot.lane.b32.xlu0 %v452, 127
        %v468 = vpop.permute.xlu0 %467
        %s472 = sld [smem:[#allocation7]]
        %v473 = vstv %s472
        %v474 = vadd.f32 %v473, 0.0
        %s475 = sld [smem:[#allocation3]]
        %v476 = vstv %s475
        %v477 = vmul.f32 %v476, %v407
        %v478 = vmul.f32 %v476, %v409
        %v479 = vmul.f32 %v476, %v411
        %v480 = vadd.f32 %v474, %v477
        %v481 = vadd.f32 %v474, %v478
        %v482 = vadd.f32 %v474, %v479
        %s483 = sld [smem:[#allocation3 + $0x1]]
        %v484 = vstv %s483
        %v485 = vmul.f32 %v484, %v404
        %v486 = vmul.f32 %v484, %v399
        %v487 = vmul.f32 %v484, %v400
        %v488 = vadd.f32 %v480, %v485
        %v489 = vadd.f32 %v481, %v486
        %v490 = vadd.f32 %v482, %v487
        %s491 = sld [smem:[#allocation3 + $0x2]]
        %v492 = vstv %s491
        %v493 = vmul.f32 %v492, %v416
        %v494 = vmul.f32 %v492, %v418
        %v495 = vmul.f32 %v492, %v420
        %v496 = vadd.f32 %v488, %v493
        %v497 = vadd.f32 %v489, %v494
        %v498 = vadd.f32 %v490, %v495
        %s499 = sld [smem:[#allocation3 + $0x3]]
        %v500 = vstv %s499
        %v501 = vmul.f32 %v500, %v425
        %v502 = vmul.f32 %v500, %v427
        %v503 = vmul.f32 %v500, %v429
        %v504 = vadd.f32 %v496, %v501
        %v505 = vadd.f32 %v497, %v502
        %v506 = vadd.f32 %v498, %v503
        %s507 = sld [smem:[#allocation3 + $0x4]]
        %v508 = vstv %s507
        %v509 = vmul.f32 %v508, %v362
        %v510 = vmul.f32 %v508, %v363
        %v511 = vmul.f32 %v508, %v364
        %v512 = vadd.f32 %v504, %v509
        %v513 = vadd.f32 %v505, %v510
        %v514 = vadd.f32 %v506, %v511
        %s515 = sld [smem:[#allocation3 + $0x5]]
        %v516 = vstv %s515
        %v517 = vmul.f32 %v516, %v434
        %v518 = vmul.f32 %v516, %v436
        %v519 = vmul.f32 %v516, %v438
        %v520 = vadd.f32 %v512, %v517
        %v521 = vadd.f32 %v513, %v518
        %v522 = vadd.f32 %v514, %v519
        %s523 = sld [smem:[#allocation3 + $0x6]]
        %v524 = vstv %s523
        %v525 = vmul.f32 %v524, %v455
        %v526 = vmul.f32 %v524, %v457
        %v527 = vmul.f32 %v524, %v459
        %v528 = vadd.f32 %v520, %v525
        %v529 = vadd.f32 %v521, %v526
        %v530 = vadd.f32 %v522, %v527
        %s531 = sld [smem:[#allocation3 + $0x7]]
        %v532 = vstv %s531
        %v533 = vmul.f32 %v532, %v445
        %v534 = vmul.f32 %v532, %v447
        %v535 = vmul.f32 %v532, %v452
        %v536 = vadd.f32 %v528, %v533
        %v537 = vadd.f32 %v529, %v534
        %v538 = vadd.f32 %v530, %v535
        %s539 = sld [smem:[#allocation3 + $0x8]]
        %v540 = vstv %s539
        %v541 = vmul.f32 %v540, %v464
        %v542 = vmul.f32 %v540, %v466
        %v543 = vmul.f32 %v540, %v468
        %v544 = vadd.f32 %v536, %v541
        %v545 = vadd.f32 %v537, %v542
        %v546 = vadd.f32 %v538, %v543
        %v547 = vmax.f32 %v544, 0.0
        %v548 = vmax.f32 %v545, 0.0
        %v549 = vmax.f32 %v546, 0.0
        %v550 = vmul.f32 %v547, %v388
        %v551 = vmul.f32 %v548, %v389
        %v552 = vmul.f32 %v549, %v390
        %s553 = sld [smem:[#allocation7 + $0x1]]
        %v554 = vstv %s553
        %v555 = vadd.f32 %v554, 0.0
        %s556 = sld [smem:[#allocation3 + $0x9]]
        %v557 = vstv %s556
        %v558 = vmul.f32 %v557, %v407
        %v559 = vmul.f32 %v557, %v409
        %v560 = vmul.f32 %v557, %v411
        %v561 = vadd.f32 %v555, %v558
        %v562 = vadd.f32 %v555, %v559
        %v563 = vadd.f32 %v555, %v560
        %s564 = sld [smem:[#allocation3 + $0xa]]
        %v565 = vstv %s564
        %v566 = vmul.f32 %v565, %v404
        %v567 = vmul.f32 %v565, %v399
        %v568 = vmul.f32 %v565, %v400
        %v569 = vadd.f32 %v561, %v566
        %v570 = vadd.f32 %v562, %v567
        %v571 = vadd.f32 %v563, %v568
        %s572 = sld [smem:[#allocation3 + $0xb]]
        %v573 = vstv %s572
        %v574 = vmul.f32 %v573, %v416
        %v575 = vmul.f32 %v573, %v418
        %v576 = vmul.f32 %v573, %v420
        %v577 = vadd.f32 %v569, %v574
        %v578 = vadd.f32 %v570, %v575
        %v579 = vadd.f32 %v571, %v576
        %s580 = sld [smem:[#allocation3 + $0xc]]
        %v581 = vstv %s580
        %v582 = vmul.f32 %v581, %v425
        %v583 = vmul.f32 %v581, %v427
        %v584 = vmul.f32 %v581, %v429
        %v585 = vadd.f32 %v577, %v582
        %v586 = vadd.f32 %v578, %v583
        %v587 = vadd.f32 %v579, %v584
        %s588 = sld [smem:[#allocation3 + $0xd]]
        %v589 = vstv %s588
        %v590 = vmul.f32 %v589, %v362
        %v591 = vmul.f32 %v589, %v363
        %v592 = vmul.f32 %v589, %v364
        %v593 = vadd.f32 %v585, %v590
        %v594 = vadd.f32 %v586, %v591
        %v595 = vadd.f32 %v587, %v592
        %s596 = sld [smem:[#allocation3 + $0xe]]
        %v597 = vstv %s596
        %v598 = vmul.f32 %v597, %v434
        %v599 = vmul.f32 %v597, %v436
        %v600 = vmul.f32 %v597, %v438
        %v601 = vadd.f32 %v593, %v598
        %v602 = vadd.f32 %v594, %v599
        %v603 = vadd.f32 %v595, %v600
        %s604 = sld [smem:[#allocation3 + $0xf]]
        %v605 = vstv %s604
        %v606 = vmul.f32 %v605, %v455
        %v607 = vmul.f32 %v605, %v457
        %v608 = vmul.f32 %v605, %v459
        %v609 = vadd.f32 %v601, %v606
        %v610 = vadd.f32 %v602, %v607
        %v611 = vadd.f32 %v603, %v608
        %s612 = sld [smem:[#allocation3 + $0x10]]
        %v613 = vstv %s612
        %v614 = vmul.f32 %v613, %v445
        %v615 = vmul.f32 %v613, %v447
        %v616 = vmul.f32 %v613, %v452
        %v617 = vadd.f32 %v609, %v614
        %v618 = vadd.f32 %v610, %v615
        %v619 = vadd.f32 %v611, %v616
        %s620 = sld [smem:[#allocation3 + $0x11]]
        %v621 = vstv %s620
        %v622 = vmul.f32 %v621, %v464
        %v623 = vmul.f32 %v621, %v466
        %v624 = vmul.f32 %v621, %v468
        %v625 = vadd.f32 %v617, %v622
        %v626 = vadd.f32 %v618, %v623
        %v627 = vadd.f32 %v619, %v624
        %v628 = vmax.f32 %v625, 0.0
        %v629 = vmax.f32 %v626, 0.0
        %v630 = vmax.f32 %v627, 0.0
        %v631 = vmul.f32 %v628, %v388
        %v632 = vmul.f32 %v629, %v389
        %v633 = vmul.f32 %v630, %v390
        %s634 = sld [smem:[#allocation7 + $0x2]]
        %v635 = vstv %s634
        %v636 = vadd.f32 %v635, 0.0
        %s637 = sld [smem:[#allocation3 + $0x12]]
        %v638 = vstv %s637
        %v639 = vmul.f32 %v638, %v407
        %v640 = vmul.f32 %v638, %v409
        %v641 = vmul.f32 %v638, %v411
        %v642 = vadd.f32 %v636, %v639
        %v643 = vadd.f32 %v636, %v640
        %v644 = vadd.f32 %v636, %v641
        %s645 = sld [smem:[#allocation3 + $0x13]]
        %v646 = vstv %s645
        %v647 = vmul.f32 %v646, %v404
        %v648 = vmul.f32 %v646, %v399
        %v649 = vmul.f32 %v646, %v400
        %v650 = vadd.f32 %v642, %v647
        %v651 = vadd.f32 %v643, %v648
        %v652 = vadd.f32 %v644, %v649
        %s653 = sld [smem:[#allocation3 + $0x14]]
        %v654 = vstv %s653
        %v655 = vmul.f32 %v654, %v416
        %v656 = vmul.f32 %v654, %v418
        %v657 = vmul.f32 %v654, %v420
        %v658 = vadd.f32 %v650, %v655
        %v659 = vadd.f32 %v651, %v656
        %v660 = vadd.f32 %v652, %v657
        %s661 = sld [smem:[#allocation3 + $0x15]]
        %v662 = vstv %s661
        %v663 = vmul.f32 %v662, %v425
        %v664 = vmul.f32 %v662, %v427
        %v665 = vmul.f32 %v662, %v429
        %v666 = vadd.f32 %v658, %v663
        %v667 = vadd.f32 %v659, %v664
        %v668 = vadd.f32 %v660, %v665
        %s669 = sld [smem:[#allocation3 + $0x16]]
        %v670 = vstv %s669
        %v671 = vmul.f32 %v670, %v362
        %v672 = vmul.f32 %v670, %v363
        %v673 = vmul.f32 %v670, %v364
        %v674 = vadd.f32 %v666, %v671
        %v675 = vadd.f32 %v667, %v672
        %v676 = vadd.f32 %v668, %v673
        %s677 = sld [smem:[#allocation3 + $0x17]]
        %v678 = vstv %s677
        %v679 = vmul.f32 %v678, %v434
        %v680 = vmul.f32 %v678, %v436
        %v681 = vmul.f32 %v678, %v438
        %v682 = vadd.f32 %v674, %v679
        %v683 = vadd.f32 %v675, %v680
        %v684 = vadd.f32 %v676, %v681
        %s685 = sld [smem:[#allocation3 + $0x18]]
        %v686 = vstv %s685
        %v687 = vmul.f32 %v686, %v455
        %v688 = vmul.f32 %v686, %v457
        %v689 = vmul.f32 %v686, %v459
        %v690 = vadd.f32 %v682, %v687
        %v691 = vadd.f32 %v683, %v688
        %v692 = vadd.f32 %v684, %v689
        %s693 = sld [smem:[#allocation3 + $0x19]]
        %v694 = vstv %s693
        %v695 = vmul.f32 %v694, %v445
        %v696 = vmul.f32 %v694, %v447
        %v697 = vmul.f32 %v694, %v452
        %v698 = vadd.f32 %v690, %v695
        %v699 = vadd.f32 %v691, %v696
        %v700 = vadd.f32 %v692, %v697
        %s701 = sld [smem:[#allocation3 + $0x1a]]
        %v702 = vstv %s701
        %v703 = vmul.f32 %v702, %v464
        %v704 = vmul.f32 %v702, %v466
        %v705 = vmul.f32 %v702, %v468
        %v706 = vadd.f32 %v698, %v703
        %v707 = vadd.f32 %v699, %v704
        %v708 = vadd.f32 %v700, %v705
        %v709 = vmax.f32 %v706, 0.0
        %v710 = vmax.f32 %v707, 0.0
        %v711 = vmax.f32 %v708, 0.0
        %v712 = vmul.f32 %v709, %v388
        %v713 = vmul.f32 %v710, %v389
        %v714 = vmul.f32 %v711, %v390
        %s715 = sld [smem:[#allocation7 + $0x3]]
        %v716 = vstv %s715
        %v717 = vadd.f32 %v716, 0.0
        %s718 = sld [smem:[#allocation3 + $0x1b]]
        %v719 = vstv %s718
        %v720 = vmul.f32 %v719, %v407
        %v721 = vmul.f32 %v719, %v409
        %v722 = vmul.f32 %v719, %v411
        %v723 = vadd.f32 %v717, %v720
        %v724 = vadd.f32 %v717, %v721
        %v725 = vadd.f32 %v717, %v722
        %s726 = sld [smem:[#allocation3 + $0x1c]]
        %v727 = vstv %s726
        %v728 = vmul.f32 %v727, %v404
        %v729 = vmul.f32 %v727, %v399
        %v730 = vmul.f32 %v727, %v400
        %v731 = vadd.f32 %v723, %v728
        %v732 = vadd.f32 %v724, %v729
        %v733 = vadd.f32 %v725, %v730
        %s734 = sld [smem:[#allocation3 + $0x1d]]
        %v735 = vstv %s734
        %v736 = vmul.f32 %v735, %v416
        %v737 = vmul.f32 %v735, %v418
        %v738 = vmul.f32 %v735, %v420
        %v739 = vadd.f32 %v731, %v736
        %v740 = vadd.f32 %v732, %v737
        %v741 = vadd.f32 %v733, %v738
        %s742 = sld [smem:[#allocation3 + $0x1e]]
        %v743 = vstv %s742
        %v744 = vmul.f32 %v743, %v425
        %v745 = vmul.f32 %v743, %v427
        %v746 = vmul.f32 %v743, %v429
        %v747 = vadd.f32 %v739, %v744
        %v748 = vadd.f32 %v740, %v745
        %v749 = vadd.f32 %v741, %v746
        %s750 = sld [smem:[#allocation3 + $0x1f]]
        %v751 = vstv %s750
        %v752 = vmul.f32 %v751, %v362
        %v753 = vmul.f32 %v751, %v363
        %v754 = vmul.f32 %v751, %v364
        %v755 = vadd.f32 %v747, %v752
        %v756 = vadd.f32 %v748, %v753
        %v757 = vadd.f32 %v749, %v754
        %s758 = sld [smem:[#allocation3 + $0x20]]
        %v759 = vstv %s758
        %v760 = vmul.f32 %v759, %v434
        %v761 = vmul.f32 %v759, %v436
        %v762 = vmul.f32 %v759, %v438
        %v763 = vadd.f32 %v755, %v760
        %v764 = vadd.f32 %v756, %v761
        %v765 = vadd.f32 %v757, %v762
        %s766 = sld [smem:[#allocation3 + $0x21]]
        %v767 = vstv %s766
        %v768 = vmul.f32 %v767, %v455
        %v769 = vmul.f32 %v767, %v457
        %v770 = vmul.f32 %v767, %v459
        %v771 = vadd.f32 %v763, %v768
        %v772 = vadd.f32 %v764, %v769
        %v773 = vadd.f32 %v765, %v770
        %s774 = sld [smem:[#allocation3 + $0x22]]
        %v775 = vstv %s774
        %v776 = vmul.f32 %v775, %v445
        %v777 = vmul.f32 %v775, %v447
        %v778 = vmul.f32 %v775, %v452
        %v779 = vadd.f32 %v771, %v776
        %v780 = vadd.f32 %v772, %v777
        %v781 = vadd.f32 %v773, %v778
        %s782 = sld [smem:[#allocation3 + $0x23]]
        %v783 = vstv %s782
        %v784 = vmul.f32 %v783, %v464
        %v785 = vmul.f32 %v783, %v466
        %v786 = vmul.f32 %v783, %v468
        %v787 = vadd.f32 %v779, %v784
        %v788 = vadd.f32 %v780, %v785
        %v789 = vadd.f32 %v781, %v786
        %v790 = vmax.f32 %v787, 0.0
        %v791 = vmax.f32 %v788, 0.0
        %v792 = vmax.f32 %v789, 0.0
        %v793 = vmul.f32 %v790, %v388
        %v794 = vmul.f32 %v791, %v389
        %v795 = vmul.f32 %v792, %v390
        %v797 = vrot.slane %v552, 7
        %v801 = vrot.slane %v550, 7
        %v802 = vrot.slane %v551, 7
        %v803 = vsel %vm396, %v801, %v802
        %v804 = vsel %vm396, %v802, %v797
        %v808 = vsel %vm396, %v797, %v801
        %810 = vrot.lane.b32.xlu0 %v808, 1
        %v811 = vpop.permute.xlu0 %810
        %812 = vrot.lane.b32.xlu0 %v803, 1
        %v813 = vpop.permute.xlu0 %812
        %814 = vrot.lane.b32.xlu0 %v804, 1
        %v815 = vpop.permute.xlu0 %814
        %819 = vrot.lane.b32.xlu0 %v808, 127
        %v820 = vpop.permute.xlu0 %819
        %821 = vrot.lane.b32.xlu0 %v803, 127
        %v822 = vpop.permute.xlu0 %821
        %823 = vrot.lane.b32.xlu0 %v804, 127
        %v824 = vpop.permute.xlu0 %823
        %828 = vrot.lane.b32.xlu0 %v550, 1
        %v829 = vpop.permute.xlu0 %828
        %830 = vrot.lane.b32.xlu0 %v551, 1
        %v831 = vpop.permute.xlu0 %830
        %832 = vrot.lane.b32.xlu0 %v552, 1
        %v833 = vpop.permute.xlu0 %832
        %837 = vrot.lane.b32.xlu0 %v550, 127
        %v838 = vpop.permute.xlu0 %837
        %839 = vrot.lane.b32.xlu0 %v551, 127
        %v840 = vpop.permute.xlu0 %839
        %841 = vrot.lane.b32.xlu0 %v552, 127
        %v842 = vpop.permute.xlu0 %841
        %v846 = vrot.slane %v550, 1
        %v847 = vrot.slane %v551, 1
        %v848 = vsel %vm442, %v846, %v847
        %v849 = vrot.slane %v552, 1
        %v850 = vsel %vm442, %v847, %v849
        %v855 = vsel %vm442, %v849, %v846
        %857 = vrot.lane.b32.xlu0 %v848, 1
        %v858 = vpop.permute.xlu0 %857
        %859 = vrot.lane.b32.xlu0 %v850, 1
        %v860 = vpop.permute.xlu0 %859
        %861 = vrot.lane.b32.xlu0 %v855, 1
        %v862 = vpop.permute.xlu0 %861
        %866 = vrot.lane.b32.xlu0 %v848, 127
        %v867 = vpop.permute.xlu0 %866
        %868 = vrot.lane.b32.xlu0 %v850, 127
        %v869 = vpop.permute.xlu0 %868
        %870 = vrot.lane.b32.xlu0 %v855, 127
        %v871 = vpop.permute.xlu0 %870
        %v876 = vrot.slane %v633, 7
        %v880 = vrot.slane %v631, 7
        %v881 = vrot.slane %v632, 7
        %v882 = vsel %vm396, %v880, %v881
        %v883 = vsel %vm396, %v881, %v876
        %v887 = vsel %vm396, %v876, %v880
        %889 = vrot.lane.b32.xlu0 %v887, 1
        %v890 = vpop.permute.xlu0 %889
        %891 = vrot.lane.b32.xlu0 %v882, 1
        %v892 = vpop.permute.xlu0 %891
        %893 = vrot.lane.b32.xlu0 %v883, 1
        %v894 = vpop.permute.xlu0 %893
        %898 = vrot.lane.b32.xlu0 %v887, 127
        %v899 = vpop.permute.xlu0 %898
        %900 = vrot.lane.b32.xlu0 %v882, 127
        %v901 = vpop.permute.xlu0 %900
        %902 = vrot.lane.b32.xlu0 %v883, 127
        %v903 = vpop.permute.xlu0 %902
        %907 = vrot.lane.b32.xlu0 %v631, 1
        %v908 = vpop.permute.xlu0 %907
        %909 = vrot.lane.b32.xlu0 %v632, 1
        %v910 = vpop.permute.xlu0 %909
        %911 = vrot.lane.b32.xlu0 %v633, 1
        %v912 = vpop.permute.xlu0 %911
        %916 = vrot.lane.b32.xlu0 %v631, 127
        %v917 = vpop.permute.xlu0 %916
        %918 = vrot.lane.b32.xlu0 %v632, 127
        %v919 = vpop.permute.xlu0 %918
        %920 = vrot.lane.b32.xlu0 %v633, 127
        %v921 = vpop.permute.xlu0 %920
        %v925 = vrot.slane %v631, 1
        %v926 = vrot.slane %v632, 1
        %v927 = vsel %vm442, %v925, %v926
        %v928 = vrot.slane %v633, 1
        %v929 = vsel %vm442, %v926, %v928
        %v934 = vsel %vm442, %v928, %v925
        %936 = vrot.lane.b32.xlu0 %v927, 1
        %v937 = vpop.permute.xlu0 %936
        %938 = vrot.lane.b32.xlu0 %v929, 1
        %v939 = vpop.permute.xlu0 %938
        %940 = vrot.lane.b32.xlu0 %v934, 1
        %v941 = vpop.permute.xlu0 %940
        %945 = vrot.lane.b32.xlu0 %v927, 127
        %v946 = vpop.permute.xlu0 %945
        %947 = vrot.lane.b32.xlu0 %v929, 127
        %v948 = vpop.permute.xlu0 %947
        %949 = vrot.lane.b32.xlu0 %v934, 127
        %v950 = vpop.permute.xlu0 %949
        %v955 = vrot.slane %v714, 7
        %v959 = vrot.slane %v712, 7
        %v960 = vrot.slane %v713, 7
        %v961 = vsel %vm396, %v959, %v960
        %v962 = vsel %vm396, %v960, %v955
        %v966 = vsel %vm396, %v955, %v959
        %968 = vrot.lane.b32.xlu0 %v966, 1
        %v969 = vpop.permute.xlu0 %968
        %970 = vrot.lane.b32.xlu0 %v961, 1
        %v971 = vpop.permute.xlu0 %970
        %972 = vrot.lane.b32.xlu0 %v962, 1
        %v973 = vpop.permute.xlu0 %972
        %977 = vrot.lane.b32.xlu0 %v966, 127
        %v978 = vpop.permute.xlu0 %977
        %979 = vrot.lane.b32.xlu0 %v961, 127
        %v980 = vpop.permute.xlu0 %979
        %981 = vrot.lane.b32.xlu0 %v962, 127
        %v982 = vpop.permute.xlu0 %981
        %986 = vrot.lane.b32.xlu0 %v712, 1
        %v987 = vpop.permute.xlu0 %986
        %988 = vrot.lane.b32.xlu0 %v713, 1
        %v989 = vpop.permute.xlu0 %988
        %990 = vrot.lane.b32.xlu0 %v714, 1
        %v991 = vpop.permute.xlu0 %990
        %995 = vrot.lane.b32.xlu0 %v712, 127
        %v996 = vpop.permute.xlu0 %995
        %997 = vrot.lane.b32.xlu0 %v713, 127
        %v998 = vpop.permute.xlu0 %997
        %999 = vrot.lane.b32.xlu0 %v714, 127
        %v1000 = vpop.permute.xlu0 %999
        %v1004 = vrot.slane %v712, 1
        %v1005 = vrot.slane %v713, 1
        %v1006 = vsel %vm442, %v1004, %v1005
        %v1007 = vrot.slane %v714, 1
        %v1008 = vsel %vm442, %v1005, %v1007
        %v1013 = vsel %vm442, %v1007, %v1004
        %1015 = vrot.lane.b32.xlu0 %v1006, 1
        %v1016 = vpop.permute.xlu0 %1015
        %1017 = vrot.lane.b32.xlu0 %v1008, 1
        %v1018 = vpop.permute.xlu0 %1017
        %1019 = vrot.lane.b32.xlu0 %v1013, 1
        %v1020 = vpop.permute.xlu0 %1019
        %1024 = vrot.lane.b32.xlu0 %v1006, 127
        %v1025 = vpop.permute.xlu0 %1024
        %1026 = vrot.lane.b32.xlu0 %v1008, 127
        %v1027 = vpop.permute.xlu0 %1026
        %1028 = vrot.lane.b32.xlu0 %v1013, 127
        %v1029 = vpop.permute.xlu0 %1028
        %v1034 = vrot.slane %v795, 7
        %v1038 = vrot.slane %v793, 7
        %v1039 = vrot.slane %v794, 7
        %v1040 = vsel %vm396, %v1038, %v1039
        %v1041 = vsel %vm396, %v1039, %v1034
        %v1045 = vsel %vm396, %v1034, %v1038
        %1047 = vrot.lane.b32.xlu0 %v1045, 1
        %v1048 = vpop.permute.xlu0 %1047
        %1049 = vrot.lane.b32.xlu0 %v1040, 1
        %v1050 = vpop.permute.xlu0 %1049
        %1051 = vrot.lane.b32.xlu0 %v1041, 1
        %v1052 = vpop.permute.xlu0 %1051
        %1056 = vrot.lane.b32.xlu0 %v1045, 127
        %v1057 = vpop.permute.xlu0 %1056
        %1058 = vrot.lane.b32.xlu0 %v1040, 127
        %v1059 = vpop.permute.xlu0 %1058
        %1060 = vrot.lane.b32.xlu0 %v1041, 127
        %v1061 = vpop.permute.xlu0 %1060
        %1065 = vrot.lane.b32.xlu0 %v793, 1
        %v1066 = vpop.permute.xlu0 %1065
        %1067 = vrot.lane.b32.xlu0 %v794, 1
        %v1068 = vpop.permute.xlu0 %1067
        %1069 = vrot.lane.b32.xlu0 %v795, 1
        %v1070 = vpop.permute.xlu0 %1069
        %1074 = vrot.lane.b32.xlu0 %v793, 127
        %v1075 = vpop.permute.xlu0 %1074
        %1076 = vrot.lane.b32.xlu0 %v794, 127
        %v1077 = vpop.permute.xlu0 %1076
        %1078 = vrot.lane.b32.xlu0 %v795, 127
        %v1079 = vpop.permute.xlu0 %1078
        %v1083 = vrot.slane %v793, 1
        %v1084 = vrot.slane %v794, 1
        %v1085 = vsel %vm442, %v1083, %v1084
        %v1086 = vrot.slane %v795, 1
        %v1087 = vsel %vm442, %v1084, %v1086
        %v1092 = vsel %vm442, %v1086, %v1083
        %1094 = vrot.lane.b32.xlu0 %v1085, 1
        %v1095 = vpop.permute.xlu0 %1094
        %1096 = vrot.lane.b32.xlu0 %v1087, 1
        %v1097 = vpop.permute.xlu0 %1096
        %1098 = vrot.lane.b32.xlu0 %v1092, 1
        %v1099 = vpop.permute.xlu0 %1098
        %1103 = vrot.lane.b32.xlu0 %v1085, 127
        %v1104 = vpop.permute.xlu0 %1103
        %1105 = vrot.lane.b32.xlu0 %v1087, 127
        %v1106 = vpop.permute.xlu0 %1105
        %1107 = vrot.lane.b32.xlu0 %v1092, 127
        %v1108 = vpop.permute.xlu0 %1107
        %s1112 = sld [smem:[#allocation10]]
        %v1113 = vstv %s1112
        %v1114 = vadd.f32 %v1113, 0.0
        %s1115 = sld [smem:[#allocation9]]
        %v1116 = vstv %s1115
        %v1117 = vmul.f32 %v1116, %v811
        %v1118 = vmul.f32 %v1116, %v813
        %v1119 = vmul.f32 %v1116, %v815
        %v1120 = vadd.f32 %v1114, %v1117
        %v1121 = vadd.f32 %v1114, %v1118
        %v1122 = vadd.f32 %v1114, %v1119
        %s1123 = sld [smem:[#allocation9 + $0x1]]
        %v1124 = vstv %s1123
        %v1125 = vmul.f32 %v1124, %v808
        %v1126 = vmul.f32 %v1124, %v803
        %v1127 = vmul.f32 %v1124, %v804
        %v1128 = vadd.f32 %v1120, %v1125
        %v1129 = vadd.f32 %v1121, %v1126
        %v1130 = vadd.f32 %v1122, %v1127
        %s1131 = sld [smem:[#allocation9 + $0x2]]
        %v1132 = vstv %s1131
        %v1133 = vmul.f32 %v1132, %v820
        %v1134 = vmul.f32 %v1132, %v822
        %v1135 = vmul.f32 %v1132, %v824
        %v1136 = vadd.f32 %v1128, %v1133
        %v1137 = vadd.f32 %v1129, %v1134
        %v1138 = vadd.f32 %v1130, %v1135
        %s1139 = sld [smem:[#allocation9 + $0x3]]
        %v1140 = vstv %s1139
        %v1141 = vmul.f32 %v1140, %v829
        %v1142 = vmul.f32 %v1140, %v831
        %v1143 = vmul.f32 %v1140, %v833
        %v1144 = vadd.f32 %v1136, %v1141
        %v1145 = vadd.f32 %v1137, %v1142
        %v1146 = vadd.f32 %v1138, %v1143
        %s1147 = sld [smem:[#allocation9 + $0x4]]
        %v1148 = vstv %s1147
        %v1149 = vmul.f32 %v1148, %v550
        %v1150 = vmul.f32 %v1148, %v551
        %v1151 = vmul.f32 %v1148, %v552
        %v1152 = vadd.f32 %v1144, %v1149
        %v1153 = vadd.f32 %v1145, %v1150
        %v1154 = vadd.f32 %v1146, %v1151
        %s1155 = sld [smem:[#allocation9 + $0x5]]
        %v1156 = vstv %s1155
        %v1157 = vmul.f32 %v1156, %v838
        %v1158 = vmul.f32 %v1156, %v840
        %v1159 = vmul.f32 %v1156, %v842
        %v1160 = vadd.f32 %v1152, %v1157
        %v1161 = vadd.f32 %v1153, %v1158
        %v1162 = vadd.f32 %v1154, %v1159
        %s1163 = sld [smem:[#allocation9 + $0x6]]
        %v1164 = vstv %s1163
        %v1165 = vmul.f32 %v1164, %v858
        %v1166 = vmul.f32 %v1164, %v860
        %v1167 = vmul.f32 %v1164, %v862
        %v1168 = vadd.f32 %v1160, %v1165
        %v1169 = vadd.f32 %v1161, %v1166
        %v1170 = vadd.f32 %v1162, %v1167
        %s1171 = sld [smem:[#allocation9 + $0x7]]
        %v1172 = vstv %s1171
        %v1173 = vmul.f32 %v1172, %v848
        %v1174 = vmul.f32 %v1172, %v850
        %v1175 = vmul.f32 %v1172, %v855
        %v1176 = vadd.f32 %v1168, %v1173
        %v1177 = vadd.f32 %v1169, %v1174
        %v1178 = vadd.f32 %v1170, %v1175
        %s1179 = sld [smem:[#allocation9 + $0x8]]
        %v1180 = vstv %s1179
        %v1181 = vmul.f32 %v1180, %v867
        %v1182 = vmul.f32 %v1180, %v869
        %v1183 = vmul.f32 %v1180, %v871
        %v1184 = vadd.f32 %v1176, %v1181
        %v1185 = vadd.f32 %v1177, %v1182
        %v1186 = vadd.f32 %v1178, %v1183
        %s1187 = sld [smem:[#allocation9 + $0x9]]
        %v1188 = vstv %s1187
        %v1189 = vmul.f32 %v1188, %v890
        %v1190 = vmul.f32 %v1188, %v892
        %v1191 = vmul.f32 %v1188, %v894
        %v1192 = vadd.f32 %v1184, %v1189
        %v1193 = vadd.f32 %v1185, %v1190
        %v1194 = vadd.f32 %v1186, %v1191
        %s1195 = sld [smem:[#allocation9 + $0xa]]
        %v1196 = vstv %s1195
        %v1197 = vmul.f32 %v1196, %v887
        %v1198 = vmul.f32 %v1196, %v882
        %v1199 = vmul.f32 %v1196, %v883
        %v1200 = vadd.f32 %v1192, %v1197
        %v1201 = vadd.f32 %v1193, %v1198
        %v1202 = vadd.f32 %v1194, %v1199
        %s1203 = sld [smem:[#allocation9 + $0xb]]
        %v1204 = vstv %s1203
        %v1205 = vmul.f32 %v1204, %v899
        %v1206 = vmul.f32 %v1204, %v901
        %v1207 = vmul.f32 %v1204, %v903
        %v1208 = vadd.f32 %v1200, %v1205
        %v1209 = vadd.f32 %v1201, %v1206
        %v1210 = vadd.f32 %v1202, %v1207
        %s1211 = sld [smem:[#allocation9 + $0xc]]
        %v1212 = vstv %s1211
        %v1213 = vmul.f32 %v1212, %v908
        %v1214 = vmul.f32 %v1212, %v910
        %v1215 = vmul.f32 %v1212, %v912
        %v1216 = vadd.f32 %v1208, %v1213
        %v1217 = vadd.f32 %v1209, %v1214
        %v1218 = vadd.f32 %v1210, %v1215
        %s1219 = sld [smem:[#allocation9 + $0xd]]
        %v1220 = vstv %s1219
        %v1221 = vmul.f32 %v1220, %v631
        %v1222 = vmul.f32 %v1220, %v632
        %v1223 = vmul.f32 %v1220, %v633
        %v1224 = vadd.f32 %v1216, %v1221
        %v1225 = vadd.f32 %v1217, %v1222
        %v1226 = vadd.f32 %v1218, %v1223
        %s1227 = sld [smem:[#allocation9 + $0xe]]
        %v1228 = vstv %s1227
        %v1229 = vmul.f32 %v1228, %v917
        %v1230 = vmul.f32 %v1228, %v919
        %v1231 = vmul.f32 %v1228, %v921
        %v1232 = vadd.f32 %v1224, %v1229
        %v1233 = vadd.f32 %v1225, %v1230
        %v1234 = vadd.f32 %v1226, %v1231
        %s1235 = sld [smem:[#allocation9 + $0xf]]
        %v1236 = vstv %s1235
        %v1237 = vmul.f32 %v1236, %v937
        %v1238 = vmul.f32 %v1236, %v939
        %v1239 = vmul.f32 %v1236, %v941
        %v1240 = vadd.f32 %v1232, %v1237
        %v1241 = vadd.f32 %v1233, %v1238
        %v1242 = vadd.f32 %v1234, %v1239
        %s1243 = sld [smem:[#allocation9 + $0x10]]
        %v1244 = vstv %s1243
        %v1245 = vmul.f32 %v1244, %v927
        %v1246 = vmul.f32 %v1244, %v929
        %v1247 = vmul.f32 %v1244, %v934
        %v1248 = vadd.f32 %v1240, %v1245
        %v1249 = vadd.f32 %v1241, %v1246
        %v1250 = vadd.f32 %v1242, %v1247
        %s1251 = sld [smem:[#allocation9 + $0x11]]
        %v1252 = vstv %s1251
        %v1253 = vmul.f32 %v1252, %v946
        %v1254 = vmul.f32 %v1252, %v948
        %v1255 = vmul.f32 %v1252, %v950
        %v1256 = vadd.f32 %v1248, %v1253
        %v1257 = vadd.f32 %v1249, %v1254
        %v1258 = vadd.f32 %v1250, %v1255
        %s1259 = sld [smem:[#allocation9 + $0x12]]
        %v1260 = vstv %s1259
        %v1261 = vmul.f32 %v1260, %v969
        %v1262 = vmul.f32 %v1260, %v971
        %v1263 = vmul.f32 %v1260, %v973
        %v1264 = vadd.f32 %v1256, %v1261
        %v1265 = vadd.f32 %v1257, %v1262
        %v1266 = vadd.f32 %v1258, %v1263
        %s1267 = sld [smem:[#allocation9 + $0x13]]
        %v1268 = vstv %s1267
        %v1269 = vmul.f32 %v1268, %v966
        %v1270 = vmul.f32 %v1268, %v961
        %v1271 = vmul.f32 %v1268, %v962
        %v1272 = vadd.f32 %v1264, %v1269
        %v1273 = vadd.f32 %v1265, %v1270
        %v1274 = vadd.f32 %v1266, %v1271
        %s1275 = sld [smem:[#allocation9 + $0x14]]
        %v1276 = vstv %s1275
        %v1277 = vmul.f32 %v1276, %v978
        %v1278 = vmul.f32 %v1276, %v980
        %v1279 = vmul.f32 %v1276, %v982
        %v1280 = vadd.f32 %v1272, %v1277
        %v1281 = vadd.f32 %v1273, %v1278
        %v1282 = vadd.f32 %v1274, %v1279
        %s1283 = sld [smem:[#allocation9 + $0x15]]
        %v1284 = vstv %s1283
        %v1285 = vmul.f32 %v1284, %v987
        %v1286 = vmul.f32 %v1284, %v989
        %v1287 = vmul.f32 %v1284, %v991
        %v1288 = vadd.f32 %v1280, %v1285
        %v1289 = vadd.f32 %v1281, %v1286
        %v1290 = vadd.f32 %v1282, %v1287
        %s1291 = sld [smem:[#allocation9 + $0x16]]
        %v1292 = vstv %s1291
        %v1293 = vmul.f32 %v1292, %v712
        %v1294 = vmul.f32 %v1292, %v713
        %v1295 = vmul.f32 %v1292, %v714
        %v1296 = vadd.f32 %v1288, %v1293
        %v1297 = vadd.f32 %v1289, %v1294
        %v1298 = vadd.f32 %v1290, %v1295
        %s1299 = sld [smem:[#allocation9 + $0x17]]
        %v1300 = vstv %s1299
        %v1301 = vmul.f32 %v1300, %v996
        %v1302 = vmul.f32 %v1300, %v998
        %v1303 = vmul.f32 %v1300, %v1000
        %v1304 = vadd.f32 %v1296, %v1301
        %v1305 = vadd.f32 %v1297, %v1302
        %v1306 = vadd.f32 %v1298, %v1303
        %s1307 = sld [smem:[#allocation9 + $0x18]]
        %v1308 = vstv %s1307
        %v1309 = vmul.f32 %v1308, %v1016
        %v1310 = vmul.f32 %v1308, %v1018
        %v1311 = vmul.f32 %v1308, %v1020
        %v1312 = vadd.f32 %v1304, %v1309
        %v1313 = vadd.f32 %v1305, %v1310
        %v1314 = vadd.f32 %v1306, %v1311
        %s1315 = sld [smem:[#allocation9 + $0x19]]
        %v1316 = vstv %s1315
        %v1317 = vmul.f32 %v1316, %v1006
        %v1318 = vmul.f32 %v1316, %v1008
        %v1319 = vmul.f32 %v1316, %v1013
        %v1320 = vadd.f32 %v1312, %v1317
        %v1321 = vadd.f32 %v1313, %v1318
        %v1322 = vadd.f32 %v1314, %v1319
        %s1323 = sld [smem:[#allocation9 + $0x1a]]
        %v1324 = vstv %s1323
        %v1325 = vmul.f32 %v1324, %v1025
        %v1326 = vmul.f32 %v1324, %v1027
        %v1327 = vmul.f32 %v1324, %v1029
        %v1328 = vadd.f32 %v1320, %v1325
        %v1329 = vadd.f32 %v1321, %v1326
        %v1330 = vadd.f32 %v1322, %v1327
        %s1331 = sld [smem:[#allocation9 + $0x1b]]
        %v1332 = vstv %s1331
        %v1333 = vmul.f32 %v1332, %v1048
        %v1334 = vmul.f32 %v1332, %v1050
        %v1335 = vmul.f32 %v1332, %v1052
        %v1336 = vadd.f32 %v1328, %v1333
        %v1337 = vadd.f32 %v1329, %v1334
        %v1338 = vadd.f32 %v1330, %v1335
        %s1339 = sld [smem:[#allocation9 + $0x1c]]
        %v1340 = vstv %s1339
        %v1341 = vmul.f32 %v1340, %v1045
        %v1342 = vmul.f32 %v1340, %v1040
        %v1343 = vmul.f32 %v1340, %v1041
        %v1344 = vadd.f32 %v1336, %v1341
        %v1345 = vadd.f32 %v1337, %v1342
        %v1346 = vadd.f32 %v1338, %v1343
        %s1347 = sld [smem:[#allocation9 + $0x1d]]
        %v1348 = vstv %s1347
        %v1349 = vmul.f32 %v1348, %v1057
        %v1350 = vmul.f32 %v1348, %v1059
        %v1351 = vmul.f32 %v1348, %v1061
        %v1352 = vadd.f32 %v1344, %v1349
        %v1353 = vadd.f32 %v1345, %v1350
        %v1354 = vadd.f32 %v1346, %v1351
        %s1355 = sld [smem:[#allocation9 + $0x1e]]
        %v1356 = vstv %s1355
        %v1357 = vmul.f32 %v1356, %v1066
        %v1358 = vmul.f32 %v1356, %v1068
        %v1359 = vmul.f32 %v1356, %v1070
        %v1360 = vadd.f32 %v1352, %v1357
        %v1361 = vadd.f32 %v1353, %v1358
        %v1362 = vadd.f32 %v1354, %v1359
        %s1363 = sld [smem:[#allocation9 + $0x1f]]
        %v1364 = vstv %s1363
        %v1365 = vmul.f32 %v1364, %v793
        %v1366 = vmul.f32 %v1364, %v794
        %v1367 = vmul.f32 %v1364, %v795
        %v1368 = vadd.f32 %v1360, %v1365
        %v1369 = vadd.f32 %v1361, %v1366
        %v1370 = vadd.f32 %v1362, %v1367
        %s1371 = sld [smem:[#allocation9 + $0x20]]
        %v1372 = vstv %s1371
        %v1373 = vmul.f32 %v1372, %v1075
        %v1374 = vmul.f32 %v1372, %v1077
        %v1375 = vmul.f32 %v1372, %v1079
        %v1376 = vadd.f32 %v1368, %v1373
        %v1377 = vadd.f32 %v1369, %v1374
        %v1378 = vadd.f32 %v1370, %v1375
        %s1379 = sld [smem:[#allocation9 + $0x21]]
        %v1380 = vstv %s1379
        %v1381 = vmul.f32 %v1380, %v1095
        %v1382 = vmul.f32 %v1380, %v1097
        %v1383 = vmul.f32 %v1380, %v1099
        %v1384 = vadd.f32 %v1376, %v1381
        %v1385 = vadd.f32 %v1377, %v1382
        %v1386 = vadd.f32 %v1378, %v1383
        %s1387 = sld [smem:[#allocation9 + $0x22]]
        %v1388 = vstv %s1387
        %v1389 = vmul.f32 %v1388, %v1085
        %v1390 = vmul.f32 %v1388, %v1087
        %v1391 = vmul.f32 %v1388, %v1092
        %v1392 = vadd.f32 %v1384, %v1389
        %v1393 = vadd.f32 %v1385, %v1390
        %v1394 = vadd.f32 %v1386, %v1391
        %s1395 = sld [smem:[#allocation9 + $0x23]]
        %v1396 = vstv %s1395
        %v1397 = vmul.f32 %v1396, %v1104
        %v1398 = vmul.f32 %v1396, %v1106
        %v1399 = vmul.f32 %v1396, %v1108
        %v1400 = vadd.f32 %v1392, %v1397
        %v1401 = vadd.f32 %v1393, %v1398
        %v1402 = vadd.f32 %v1394, %v1399
        %v1403 = vmax.f32 %v1400, 0.0
        %v1404 = vmax.f32 %v1401, 0.0
        %v1405 = vmax.f32 %v1402, 0.0
        %v1406 = vmul.f32 %v1403, %v388
        %v1407 = vmul.f32 %v1404, %v389
        %v1408 = vmul.f32 %v1405, %v390
        %s1409 = sld [smem:[#allocation10 + $0x1]]
        %v1410 = vstv %s1409
        %v1411 = vadd.f32 %v1410, 0.0
        %s1412 = sld [smem:[#allocation9 + $0x24]]
        %v1413 = vstv %s1412
        %v1414 = vmul.f32 %v1413, %v811
        %v1415 = vmul.f32 %v1413, %v813
        %v1416 = vmul.f32 %v1413, %v815
        %v1417 = vadd.f32 %v1411, %v1414
        %v1418 = vadd.f32 %v1411, %v1415
        %v1419 = vadd.f32 %v1411, %v1416
        %s1420 = sld [smem:[#allocation9 + $0x25]]
        %v1421 = vstv %s1420
        %v1422 = vmul.f32 %v1421, %v808
        %v1423 = vmul.f32 %v1421, %v803
        %v1424 = vmul.f32 %v1421, %v804
        %v1425 = vadd.f32 %v1417, %v1422
        %v1426 = vadd.f32 %v1418, %v1423
        %v1427 = vadd.f32 %v1419, %v1424
        %s1428 = sld [smem:[#allocation9 + $0x26]]
        %v1429 = vstv %s1428
        %v1430 = vmul.f32 %v1429, %v820
        %v1431 = vmul.f32 %v1429, %v822
        %v1432 = vmul.f32 %v1429, %v824
        %v1433 = vadd.f32 %v1425, %v1430
        %v1434 = vadd.f32 %v1426, %v1431
        %v1435 = vadd.f32 %v1427, %v1432
        %s1436 = sld [smem:[#allocation9 + $0x27]]
        %v1437 = vstv %s1436
        %v1438 = vmul.f32 %v1437, %v829
        %v1439 = vmul.f32 %v1437, %v831
        %v1440 = vmul.f32 %v1437, %v833
        %v1441 = vadd.f32 %v1433, %v1438
        %v1442 = vadd.f32 %v1434, %v1439
        %v1443 = vadd.f32 %v1435, %v1440
        %s1444 = sld [smem:[#allocation9 + $0x28]]
        %v1445 = vstv %s1444
        %v1446 = vmul.f32 %v1445, %v550
        %v1447 = vmul.f32 %v1445, %v551
        %v1448 = vmul.f32 %v1445, %v552
        %v1449 = vadd.f32 %v1441, %v1446
        %v1450 = vadd.f32 %v1442, %v1447
        %v1451 = vadd.f32 %v1443, %v1448
        %s1452 = sld [smem:[#allocation9 + $0x29]]
        %v1453 = vstv %s1452
        %v1454 = vmul.f32 %v1453, %v838
        %v1455 = vmul.f32 %v1453, %v840
        %v1456 = vmul.f32 %v1453, %v842
        %v1457 = vadd.f32 %v1449, %v1454
        %v1458 = vadd.f32 %v1450, %v1455
        %v1459 = vadd.f32 %v1451, %v1456
        %s1460 = sld [smem:[#allocation9 + $0x2a]]
        %v1461 = vstv %s1460
        %v1462 = vmul.f32 %v1461, %v858
        %v1463 = vmul.f32 %v1461, %v860
        %v1464 = vmul.f32 %v1461, %v862
        %v1465 = vadd.f32 %v1457, %v1462
        %v1466 = vadd.f32 %v1458, %v1463
        %v1467 = vadd.f32 %v1459, %v1464
        %s1468 = sld [smem:[#allocation9 + $0x2b]]
        %v1469 = vstv %s1468
        %v1470 = vmul.f32 %v1469, %v848
        %v1471 = vmul.f32 %v1469, %v850
        %v1472 = vmul.f32 %v1469, %v855
        %v1473 = vadd.f32 %v1465, %v1470
        %v1474 = vadd.f32 %v1466, %v1471
        %v1475 = vadd.f32 %v1467, %v1472
        %s1476 = sld [smem:[#allocation9 + $0x2c]]
        %v1477 = vstv %s1476
        %v1478 = vmul.f32 %v1477, %v867
        %v1479 = vmul.f32 %v1477, %v869
        %v1480 = vmul.f32 %v1477, %v871
        %v1481 = vadd.f32 %v1473, %v1478
        %v1482 = vadd.f32 %v1474, %v1479
        %v1483 = vadd.f32 %v1475, %v1480
        %s1484 = sld [smem:[#allocation9 + $0x2d]]
        %v1485 = vstv %s1484
        %v1486 = vmul.f32 %v1485, %v890
        %v1487 = vmul.f32 %v1485, %v892
        %v1488 = vmul.f32 %v1485, %v894
        %v1489 = vadd.f32 %v1481, %v1486
        %v1490 = vadd.f32 %v1482, %v1487
        %v1491 = vadd.f32 %v1483, %v1488
        %s1492 = sld [smem:[#allocation9 + $0x2e]]
        %v1493 = vstv %s1492
        %v1494 = vmul.f32 %v1493, %v887
        %v1495 = vmul.f32 %v1493, %v882
        %v1496 = vmul.f32 %v1493, %v883
        %v1497 = vadd.f32 %v1489, %v1494
        %v1498 = vadd.f32 %v1490, %v1495
        %v1499 = vadd.f32 %v1491, %v1496
        %s1500 = sld [smem:[#allocation9 + $0x2f]]
        %v1501 = vstv %s1500
        %v1502 = vmul.f32 %v1501, %v899
        %v1503 = vmul.f32 %v1501, %v901
        %v1504 = vmul.f32 %v1501, %v903
        %v1505 = vadd.f32 %v1497, %v1502
        %v1506 = vadd.f32 %v1498, %v1503
        %v1507 = vadd.f32 %v1499, %v1504
        %s1508 = sld [smem:[#allocation9 + $0x30]]
        %v1509 = vstv %s1508
        %v1510 = vmul.f32 %v1509, %v908
        %v1511 = vmul.f32 %v1509, %v910
        %v1512 = vmul.f32 %v1509, %v912
        %v1513 = vadd.f32 %v1505, %v1510
        %v1514 = vadd.f32 %v1506, %v1511
        %v1515 = vadd.f32 %v1507, %v1512
        %s1516 = sld [smem:[#allocation9 + $0x31]]
        %v1517 = vstv %s1516
        %v1518 = vmul.f32 %v1517, %v631
        %v1519 = vmul.f32 %v1517, %v632
        %v1520 = vmul.f32 %v1517, %v633
        %v1521 = vadd.f32 %v1513, %v1518
        %v1522 = vadd.f32 %v1514, %v1519
        %v1523 = vadd.f32 %v1515, %v1520
        %s1524 = sld [smem:[#allocation9 + $0x32]]
        %v1525 = vstv %s1524
        %v1526 = vmul.f32 %v1525, %v917
        %v1527 = vmul.f32 %v1525, %v919
        %v1528 = vmul.f32 %v1525, %v921
        %v1529 = vadd.f32 %v1521, %v1526
        %v1530 = vadd.f32 %v1522, %v1527
        %v1531 = vadd.f32 %v1523, %v1528
        %s1532 = sld [smem:[#allocation9 + $0x33]]
        %v1533 = vstv %s1532
        %v1534 = vmul.f32 %v1533, %v937
        %v1535 = vmul.f32 %v1533, %v939
        %v1536 = vmul.f32 %v1533, %v941
        %v1537 = vadd.f32 %v1529, %v1534
        %v1538 = vadd.f32 %v1530, %v1535
        %v1539 = vadd.f32 %v1531, %v1536
        %s1540 = sld [smem:[#allocation9 + $0x34]]
        %v1541 = vstv %s1540
        %v1542 = vmul.f32 %v1541, %v927
        %v1543 = vmul.f32 %v1541, %v929
        %v1544 = vmul.f32 %v1541, %v934
        %v1545 = vadd.f32 %v1537, %v1542
        %v1546 = vadd.f32 %v1538, %v1543
        %v1547 = vadd.f32 %v1539, %v1544
        %s1548 = sld [smem:[#allocation9 + $0x35]]
        %v1549 = vstv %s1548
        %v1550 = vmul.f32 %v1549, %v946
        %v1551 = vmul.f32 %v1549, %v948
        %v1552 = vmul.f32 %v1549, %v950
        %v1553 = vadd.f32 %v1545, %v1550
        %v1554 = vadd.f32 %v1546, %v1551
        %v1555 = vadd.f32 %v1547, %v1552
        %s1556 = sld [smem:[#allocation9 + $0x36]]
        %v1557 = vstv %s1556
        %v1558 = vmul.f32 %v1557, %v969
        %v1559 = vmul.f32 %v1557, %v971
        %v1560 = vmul.f32 %v1557, %v973
        %v1561 = vadd.f32 %v1553, %v1558
        %v1562 = vadd.f32 %v1554, %v1559
        %v1563 = vadd.f32 %v1555, %v1560
        %s1564 = sld [smem:[#allocation9 + $0x37]]
        %v1565 = vstv %s1564
        %v1566 = vmul.f32 %v1565, %v966
        %v1567 = vmul.f32 %v1565, %v961
        %v1568 = vmul.f32 %v1565, %v962
        %v1569 = vadd.f32 %v1561, %v1566
        %v1570 = vadd.f32 %v1562, %v1567
        %v1571 = vadd.f32 %v1563, %v1568
        %s1572 = sld [smem:[#allocation9 + $0x38]]
        %v1573 = vstv %s1572
        %v1574 = vmul.f32 %v1573, %v978
        %v1575 = vmul.f32 %v1573, %v980
        %v1576 = vmul.f32 %v1573, %v982
        %v1577 = vadd.f32 %v1569, %v1574
        %v1578 = vadd.f32 %v1570, %v1575
        %v1579 = vadd.f32 %v1571, %v1576
        %s1580 = sld [smem:[#allocation9 + $0x39]]
        %v1581 = vstv %s1580
        %v1582 = vmul.f32 %v1581, %v987
        %v1583 = vmul.f32 %v1581, %v989
        %v1584 = vmul.f32 %v1581, %v991
        %v1585 = vadd.f32 %v1577, %v1582
        %v1586 = vadd.f32 %v1578, %v1583
        %v1587 = vadd.f32 %v1579, %v1584
        %s1588 = sld [smem:[#allocation9 + $0x3a]]
        %v1589 = vstv %s1588
        %v1590 = vmul.f32 %v1589, %v712
        %v1591 = vmul.f32 %v1589, %v713
        %v1592 = vmul.f32 %v1589, %v714
        %v1593 = vadd.f32 %v1585, %v1590
        %v1594 = vadd.f32 %v1586, %v1591
        %v1595 = vadd.f32 %v1587, %v1592
        %s1596 = sld [smem:[#allocation9 + $0x3b]]
        %v1597 = vstv %s1596
        %v1598 = vmul.f32 %v1597, %v996
        %v1599 = vmul.f32 %v1597, %v998
        %v1600 = vmul.f32 %v1597, %v1000
        %v1601 = vadd.f32 %v1593, %v1598
        %v1602 = vadd.f32 %v1594, %v1599
        %v1603 = vadd.f32 %v1595, %v1600
        %s1604 = sld [smem:[#allocation9 + $0x3c]]
        %v1605 = vstv %s1604
        %v1606 = vmul.f32 %v1605, %v1016
        %v1607 = vmul.f32 %v1605, %v1018
        %v1608 = vmul.f32 %v1605, %v1020
        %v1609 = vadd.f32 %v1601, %v1606
        %v1610 = vadd.f32 %v1602, %v1607
        %v1611 = vadd.f32 %v1603, %v1608
        %s1612 = sld [smem:[#allocation9 + $0x3d]]
        %v1613 = vstv %s1612
        %v1614 = vmul.f32 %v1613, %v1006
        %v1615 = vmul.f32 %v1613, %v1008
        %v1616 = vmul.f32 %v1613, %v1013
        %v1617 = vadd.f32 %v1609, %v1614
        %v1618 = vadd.f32 %v1610, %v1615
        %v1619 = vadd.f32 %v1611, %v1616
        %s1620 = sld [smem:[#allocation9 + $0x3e]]
        %v1621 = vstv %s1620
        %v1622 = vmul.f32 %v1621, %v1025
        %v1623 = vmul.f32 %v1621, %v1027
        %v1624 = vmul.f32 %v1621, %v1029
        %v1625 = vadd.f32 %v1617, %v1622
        %v1626 = vadd.f32 %v1618, %v1623
        %v1627 = vadd.f32 %v1619, %v1624
        %s1628 = sld [smem:[#allocation9 + $0x3f]]
        %v1629 = vstv %s1628
        %v1630 = vmul.f32 %v1629, %v1048
        %v1631 = vmul.f32 %v1629, %v1050
        %v1632 = vmul.f32 %v1629, %v1052
        %v1633 = vadd.f32 %v1625, %v1630
        %v1634 = vadd.f32 %v1626, %v1631
        %v1635 = vadd.f32 %v1627, %v1632
        %s1636 = sld [smem:[#allocation9 + $0x40]]
        %v1637 = vstv %s1636
        %v1638 = vmul.f32 %v1637, %v1045
        %v1639 = vmul.f32 %v1637, %v1040
        %v1640 = vmul.f32 %v1637, %v1041
        %v1641 = vadd.f32 %v1633, %v1638
        %v1642 = vadd.f32 %v1634, %v1639
        %v1643 = vadd.f32 %v1635, %v1640
        %s1644 = sld [smem:[#allocation9 + $0x41]]
        %v1645 = vstv %s1644
        %v1646 = vmul.f32 %v1645, %v1057
        %v1647 = vmul.f32 %v1645, %v1059
        %v1648 = vmul.f32 %v1645, %v1061
        %v1649 = vadd.f32 %v1641, %v1646
        %v1650 = vadd.f32 %v1642, %v1647
        %v1651 = vadd.f32 %v1643, %v1648
        %s1652 = sld [smem:[#allocation9 + $0x42]]
        %v1653 = vstv %s1652
        %v1654 = vmul.f32 %v1653, %v1066
        %v1655 = vmul.f32 %v1653, %v1068
        %v1656 = vmul.f32 %v1653, %v1070
        %v1657 = vadd.f32 %v1649, %v1654
        %v1658 = vadd.f32 %v1650, %v1655
        %v1659 = vadd.f32 %v1651, %v1656
        %s1660 = sld [smem:[#allocation9 + $0x43]]
        %v1661 = vstv %s1660
        %v1662 = vmul.f32 %v1661, %v793
        %v1663 = vmul.f32 %v1661, %v794
        %v1664 = vmul.f32 %v1661, %v795
        %v1665 = vadd.f32 %v1657, %v1662
        %v1666 = vadd.f32 %v1658, %v1663
        %v1667 = vadd.f32 %v1659, %v1664
        %s1668 = sld [smem:[#allocation9 + $0x44]]
        %v1669 = vstv %s1668
        %v1670 = vmul.f32 %v1669, %v1075
        %v1671 = vmul.f32 %v1669, %v1077
        %v1672 = vmul.f32 %v1669, %v1079
        %v1673 = vadd.f32 %v1665, %v1670
        %v1674 = vadd.f32 %v1666, %v1671
        %v1675 = vadd.f32 %v1667, %v1672
        %s1676 = sld [smem:[#allocation9 + $0x45]]
        %v1677 = vstv %s1676
        %v1678 = vmul.f32 %v1677, %v1095
        %v1679 = vmul.f32 %v1677, %v1097
        %v1680 = vmul.f32 %v1677, %v1099
        %v1681 = vadd.f32 %v1673, %v1678
        %v1682 = vadd.f32 %v1674, %v1679
        %v1683 = vadd.f32 %v1675, %v1680
        %s1684 = sld [smem:[#allocation9 + $0x46]]
        %v1685 = vstv %s1684
        %v1686 = vmul.f32 %v1685, %v1085
        %v1687 = vmul.f32 %v1685, %v1087
        %v1688 = vmul.f32 %v1685, %v1092
        %v1689 = vadd.f32 %v1681, %v1686
        %v1690 = vadd.f32 %v1682, %v1687
        %v1691 = vadd.f32 %v1683, %v1688
        %s1692 = sld [smem:[#allocation9 + $0x47]]
        %v1693 = vstv %s1692
        %v1694 = vmul.f32 %v1693, %v1104
        %v1695 = vmul.f32 %v1693, %v1106
        %v1696 = vmul.f32 %v1693, %v1108
        %v1697 = vadd.f32 %v1689, %v1694
        %v1698 = vadd.f32 %v1690, %v1695
        %v1699 = vadd.f32 %v1691, %v1696
        %v1700 = vmax.f32 %v1697, 0.0
        %v1701 = vmax.f32 %v1698, 0.0
        %v1702 = vmax.f32 %v1699, 0.0
        %v1703 = vmul.f32 %v1700, %v388
        %v1704 = vmul.f32 %v1701, %v389
        %v1705 = vmul.f32 %v1702, %v390
        %s1706 = sld [smem:[#allocation10 + $0x2]]
        %v1707 = vstv %s1706
        %v1708 = vadd.f32 %v1707, 0.0
        %s1709 = sld [smem:[#allocation9 + $0x48]]
        %v1710 = vstv %s1709
        %v1711 = vmul.f32 %v1710, %v811
        %v1712 = vmul.f32 %v1710, %v813
        %v1713 = vmul.f32 %v1710, %v815
        %v1714 = vadd.f32 %v1708, %v1711
        %v1715 = vadd.f32 %v1708, %v1712
        %v1716 = vadd.f32 %v1708, %v1713
        %s1717 = sld [smem:[#allocation9 + $0x49]]
        %v1718 = vstv %s1717
        %v1719 = vmul.f32 %v1718, %v808
        %v1720 = vmul.f32 %v1718, %v803
        %v1721 = vmul.f32 %v1718, %v804
        %v1722 = vadd.f32 %v1714, %v1719
        %v1723 = vadd.f32 %v1715, %v1720
        %v1724 = vadd.f32 %v1716, %v1721
        %s1725 = sld [smem:[#allocation9 + $0x4a]]
        %v1726 = vstv %s1725
        %v1727 = vmul.f32 %v1726, %v820
        %v1728 = vmul.f32 %v1726, %v822
        %v1729 = vmul.f32 %v1726, %v824
        %v1730 = vadd.f32 %v1722, %v1727
        %v1731 = vadd.f32 %v1723, %v1728
        %v1732 = vadd.f32 %v1724, %v1729
        %s1733 = sld [smem:[#allocation9 + $0x4b]]
        %v1734 = vstv %s1733
        %v1735 = vmul.f32 %v1734, %v829
        %v1736 = vmul.f32 %v1734, %v831
        %v1737 = vmul.f32 %v1734, %v833
        %v1738 = vadd.f32 %v1730, %v1735
        %v1739 = vadd.f32 %v1731, %v1736
        %v1740 = vadd.f32 %v1732, %v1737
        %s1741 = sld [smem:[#allocation9 + $0x4c]]
        %v1742 = vstv %s1741
        %v1743 = vmul.f32 %v1742, %v550
        %v1744 = vmul.f32 %v1742, %v551
        %v1745 = vmul.f32 %v1742, %v552
        %v1746 = vadd.f32 %v1738, %v1743
        %v1747 = vadd.f32 %v1739, %v1744
        %v1748 = vadd.f32 %v1740, %v1745
        %s1749 = sld [smem:[#allocation9 + $0x4d]]
        %v1750 = vstv %s1749
        %v1751 = vmul.f32 %v1750, %v838
        %v1752 = vmul.f32 %v1750, %v840
        %v1753 = vmul.f32 %v1750, %v842
        %v1754 = vadd.f32 %v1746, %v1751
        %v1755 = vadd.f32 %v1747, %v1752
        %v1756 = vadd.f32 %v1748, %v1753
        %s1757 = sld [smem:[#allocation9 + $0x4e]]
        %v1758 = vstv %s1757
        %v1759 = vmul.f32 %v1758, %v858
        %v1760 = vmul.f32 %v1758, %v860
        %v1761 = vmul.f32 %v1758, %v862
        %v1762 = vadd.f32 %v1754, %v1759
        %v1763 = vadd.f32 %v1755, %v1760
        %v1764 = vadd.f32 %v1756, %v1761
        %s1765 = sld [smem:[#allocation9 + $0x4f]]
        %v1766 = vstv %s1765
        %v1767 = vmul.f32 %v1766, %v848
        %v1768 = vmul.f32 %v1766, %v850
        %v1769 = vmul.f32 %v1766, %v855
        %v1770 = vadd.f32 %v1762, %v1767
        %v1771 = vadd.f32 %v1763, %v1768
        %v1772 = vadd.f32 %v1764, %v1769
        %s1773 = sld [smem:[#allocation9 + $0x50]]
        %v1774 = vstv %s1773
        %v1775 = vmul.f32 %v1774, %v867
        %v1776 = vmul.f32 %v1774, %v869
        %v1777 = vmul.f32 %v1774, %v871
        %v1778 = vadd.f32 %v1770, %v1775
        %v1779 = vadd.f32 %v1771, %v1776
        %v1780 = vadd.f32 %v1772, %v1777
        %s1781 = sld [smem:[#allocation9 + $0x51]]
        %v1782 = vstv %s1781
        %v1783 = vmul.f32 %v1782, %v890
        %v1784 = vmul.f32 %v1782, %v892
        %v1785 = vmul.f32 %v1782, %v894
        %v1786 = vadd.f32 %v1778, %v1783
        %v1787 = vadd.f32 %v1779, %v1784
        %v1788 = vadd.f32 %v1780, %v1785
        %s1789 = sld [smem:[#allocation9 + $0x52]]
        %v1790 = vstv %s1789
        %v1791 = vmul.f32 %v1790, %v887
        %v1792 = vmul.f32 %v1790, %v882
        %v1793 = vmul.f32 %v1790, %v883
        %v1794 = vadd.f32 %v1786, %v1791
        %v1795 = vadd.f32 %v1787, %v1792
        %v1796 = vadd.f32 %v1788, %v1793
        %s1797 = sld [smem:[#allocation9 + $0x53]]
        %v1798 = vstv %s1797
        %v1799 = vmul.f32 %v1798, %v899
        %v1800 = vmul.f32 %v1798, %v901
        %v1801 = vmul.f32 %v1798, %v903
        %v1802 = vadd.f32 %v1794, %v1799
        %v1803 = vadd.f32 %v1795, %v1800
        %v1804 = vadd.f32 %v1796, %v1801
        %s1805 = sld [smem:[#allocation9 + $0x54]]
        %v1806 = vstv %s1805
        %v1807 = vmul.f32 %v1806, %v908
        %v1808 = vmul.f32 %v1806, %v910
        %v1809 = vmul.f32 %v1806, %v912
        %v1810 = vadd.f32 %v1802, %v1807
        %v1811 = vadd.f32 %v1803, %v1808
        %v1812 = vadd.f32 %v1804, %v1809
        %s1813 = sld [smem:[#allocation9 + $0x55]]
        %v1814 = vstv %s1813
        %v1815 = vmul.f32 %v1814, %v631
        %v1816 = vmul.f32 %v1814, %v632
        %v1817 = vmul.f32 %v1814, %v633
        %v1818 = vadd.f32 %v1810, %v1815
        %v1819 = vadd.f32 %v1811, %v1816
        %v1820 = vadd.f32 %v1812, %v1817
        %s1821 = sld [smem:[#allocation9 + $0x56]]
        %v1822 = vstv %s1821
        %v1823 = vmul.f32 %v1822, %v917
        %v1824 = vmul.f32 %v1822, %v919
        %v1825 = vmul.f32 %v1822, %v921
        %v1826 = vadd.f32 %v1818, %v1823
        %v1827 = vadd.f32 %v1819, %v1824
        %v1828 = vadd.f32 %v1820, %v1825
        %s1829 = sld [smem:[#allocation9 + $0x57]]
        %v1830 = vstv %s1829
        %v1831 = vmul.f32 %v1830, %v937
        %v1832 = vmul.f32 %v1830, %v939
        %v1833 = vmul.f32 %v1830, %v941
        %v1834 = vadd.f32 %v1826, %v1831
        %v1835 = vadd.f32 %v1827, %v1832
        %v1836 = vadd.f32 %v1828, %v1833
        %s1837 = sld [smem:[#allocation9 + $0x58]]
        %v1838 = vstv %s1837
        %v1839 = vmul.f32 %v1838, %v927
        %v1840 = vmul.f32 %v1838, %v929
        %v1841 = vmul.f32 %v1838, %v934
        %v1842 = vadd.f32 %v1834, %v1839
        %v1843 = vadd.f32 %v1835, %v1840
        %v1844 = vadd.f32 %v1836, %v1841
        %s1845 = sld [smem:[#allocation9 + $0x59]]
        %v1846 = vstv %s1845
        %v1847 = vmul.f32 %v1846, %v946
        %v1848 = vmul.f32 %v1846, %v948
        %v1849 = vmul.f32 %v1846, %v950
        %v1850 = vadd.f32 %v1842, %v1847
        %v1851 = vadd.f32 %v1843, %v1848
        %v1852 = vadd.f32 %v1844, %v1849
        %s1853 = sld [smem:[#allocation9 + $0x5a]]
        %v1854 = vstv %s1853
        %v1855 = vmul.f32 %v1854, %v969
        %v1856 = vmul.f32 %v1854, %v971
        %v1857 = vmul.f32 %v1854, %v973
        %v1858 = vadd.f32 %v1850, %v1855
        %v1859 = vadd.f32 %v1851, %v1856
        %v1860 = vadd.f32 %v1852, %v1857
        %s1861 = sld [smem:[#allocation9 + $0x5b]]
        %v1862 = vstv %s1861
        %v1863 = vmul.f32 %v1862, %v966
        %v1864 = vmul.f32 %v1862, %v961
        %v1865 = vmul.f32 %v1862, %v962
        %v1866 = vadd.f32 %v1858, %v1863
        %v1867 = vadd.f32 %v1859, %v1864
        %v1868 = vadd.f32 %v1860, %v1865
        %s1869 = sld [smem:[#allocation9 + $0x5c]]
        %v1870 = vstv %s1869
        %v1871 = vmul.f32 %v1870, %v978
        %v1872 = vmul.f32 %v1870, %v980
        %v1873 = vmul.f32 %v1870, %v982
        %v1874 = vadd.f32 %v1866, %v1871
        %v1875 = vadd.f32 %v1867, %v1872
        %v1876 = vadd.f32 %v1868, %v1873
        %s1877 = sld [smem:[#allocation9 + $0x5d]]
        %v1878 = vstv %s1877
        %v1879 = vmul.f32 %v1878, %v987
        %v1880 = vmul.f32 %v1878, %v989
        %v1881 = vmul.f32 %v1878, %v991
        %v1882 = vadd.f32 %v1874, %v1879
        %v1883 = vadd.f32 %v1875, %v1880
        %v1884 = vadd.f32 %v1876, %v1881
        %s1885 = sld [smem:[#allocation9 + $0x5e]]
        %v1886 = vstv %s1885
        %v1887 = vmul.f32 %v1886, %v712
        %v1888 = vmul.f32 %v1886, %v713
        %v1889 = vmul.f32 %v1886, %v714
        %v1890 = vadd.f32 %v1882, %v1887
        %v1891 = vadd.f32 %v1883, %v1888
        %v1892 = vadd.f32 %v1884, %v1889
        %s1893 = sld [smem:[#allocation9 + $0x5f]]
        %v1894 = vstv %s1893
        %v1895 = vmul.f32 %v1894, %v996
        %v1896 = vmul.f32 %v1894, %v998
        %v1897 = vmul.f32 %v1894, %v1000
        %v1898 = vadd.f32 %v1890, %v1895
        %v1899 = vadd.f32 %v1891, %v1896
        %v1900 = vadd.f32 %v1892, %v1897
        %s1901 = sld [smem:[#allocation9 + $0x60]]
        %v1902 = vstv %s1901
        %v1903 = vmul.f32 %v1902, %v1016
        %v1904 = vmul.f32 %v1902, %v1018
        %v1905 = vmul.f32 %v1902, %v1020
        %v1906 = vadd.f32 %v1898, %v1903
        %v1907 = vadd.f32 %v1899, %v1904
        %v1908 = vadd.f32 %v1900, %v1905
        %s1909 = sld [smem:[#allocation9 + $0x61]]
        %v1910 = vstv %s1909
        %v1911 = vmul.f32 %v1910, %v1006
        %v1912 = vmul.f32 %v1910, %v1008
        %v1913 = vmul.f32 %v1910, %v1013
        %v1914 = vadd.f32 %v1906, %v1911
        %v1915 = vadd.f32 %v1907, %v1912
        %v1916 = vadd.f32 %v1908, %v1913
        %s1917 = sld [smem:[#allocation9 + $0x62]]
        %v1918 = vstv %s1917
        %v1919 = vmul.f32 %v1918, %v1025
        %v1920 = vmul.f32 %v1918, %v1027
        %v1921 = vmul.f32 %v1918, %v1029
        %v1922 = vadd.f32 %v1914, %v1919
        %v1923 = vadd.f32 %v1915, %v1920
        %v1924 = vadd.f32 %v1916, %v1921
        %s1925 = sld [smem:[#allocation9 + $0x63]]
        %v1926 = vstv %s1925
        %v1927 = vmul.f32 %v1926, %v1048
        %v1928 = vmul.f32 %v1926, %v1050
        %v1929 = vmul.f32 %v1926, %v1052
        %v1930 = vadd.f32 %v1922, %v1927
        %v1931 = vadd.f32 %v1923, %v1928
        %v1932 = vadd.f32 %v1924, %v1929
        %s1933 = sld [smem:[#allocation9 + $0x64]]
        %v1934 = vstv %s1933
        %v1935 = vmul.f32 %v1934, %v1045
        %v1936 = vmul.f32 %v1934, %v1040
        %v1937 = vmul.f32 %v1934, %v1041
        %v1938 = vadd.f32 %v1930, %v1935
        %v1939 = vadd.f32 %v1931, %v1936
        %v1940 = vadd.f32 %v1932, %v1937
        %s1941 = sld [smem:[#allocation9 + $0x65]]
        %v1942 = vstv %s1941
        %v1943 = vmul.f32 %v1942, %v1057
        %v1944 = vmul.f32 %v1942, %v1059
        %v1945 = vmul.f32 %v1942, %v1061
        %v1946 = vadd.f32 %v1938, %v1943
        %v1947 = vadd.f32 %v1939, %v1944
        %v1948 = vadd.f32 %v1940, %v1945
        %s1949 = sld [smem:[#allocation9 + $0x66]]
        %v1950 = vstv %s1949
        %v1951 = vmul.f32 %v1950, %v1066
        %v1952 = vmul.f32 %v1950, %v1068
        %v1953 = vmul.f32 %v1950, %v1070
        %v1954 = vadd.f32 %v1946, %v1951
        %v1955 = vadd.f32 %v1947, %v1952
        %v1956 = vadd.f32 %v1948, %v1953
        %s1957 = sld [smem:[#allocation9 + $0x67]]
        %v1958 = vstv %s1957
        %v1959 = vmul.f32 %v1958, %v793
        %v1960 = vmul.f32 %v1958, %v794
        %v1961 = vmul.f32 %v1958, %v795
        %v1962 = vadd.f32 %v1954, %v1959
        %v1963 = vadd.f32 %v1955, %v1960
        %v1964 = vadd.f32 %v1956, %v1961
        %s1965 = sld [smem:[#allocation9 + $0x68]]
        %v1966 = vstv %s1965
        %v1967 = vmul.f32 %v1966, %v1075
        %v1968 = vmul.f32 %v1966, %v1077
        %v1969 = vmul.f32 %v1966, %v1079
        %v1970 = vadd.f32 %v1962, %v1967
        %v1971 = vadd.f32 %v1963, %v1968
        %v1972 = vadd.f32 %v1964, %v1969
        %s1973 = sld [smem:[#allocation9 + $0x69]]
        %v1974 = vstv %s1973
        %v1975 = vmul.f32 %v1974, %v1095
        %v1976 = vmul.f32 %v1974, %v1097
        %v1977 = vmul.f32 %v1974, %v1099
        %v1978 = vadd.f32 %v1970, %v1975
        %v1979 = vadd.f32 %v1971, %v1976
        %v1980 = vadd.f32 %v1972, %v1977
        %s1981 = sld [smem:[#allocation9 + $0x6a]]
        %v1982 = vstv %s1981
        %v1983 = vmul.f32 %v1982, %v1085
        %v1984 = vmul.f32 %v1982, %v1087
        %v1985 = vmul.f32 %v1982, %v1092
        %v1986 = vadd.f32 %v1978, %v1983
        %v1987 = vadd.f32 %v1979, %v1984
        %v1988 = vadd.f32 %v1980, %v1985
        %s1989 = sld [smem:[#allocation9 + $0x6b]]
        %v1990 = vstv %s1989
        %v1991 = vmul.f32 %v1990, %v1104
        %v1992 = vmul.f32 %v1990, %v1106
        %v1993 = vmul.f32 %v1990, %v1108
        %v1994 = vadd.f32 %v1986, %v1991
        %v1995 = vadd.f32 %v1987, %v1992
        %v1996 = vadd.f32 %v1988, %v1993
        %v1997 = vmax.f32 %v1994, 0.0
        %v1998 = vmax.f32 %v1995, 0.0
        %v1999 = vmax.f32 %v1996, 0.0
        %v2000 = vmul.f32 %v1997, %v388
        %v2001 = vmul.f32 %v1998, %v389
        %v2002 = vmul.f32 %v1999, %v390
        %s2003 = sld [smem:[#allocation10 + $0x3]]
        %v2004 = vstv %s2003
        %v2005 = vadd.f32 %v2004, 0.0
        %s2006 = sld [smem:[#allocation9 + $0x6c]]
        %v2007 = vstv %s2006
        %v2008 = vmul.f32 %v2007, %v811
        %v2009 = vmul.f32 %v2007, %v813
        %v2010 = vmul.f32 %v2007, %v815
        %v2011 = vadd.f32 %v2005, %v2008
        %v2012 = vadd.f32 %v2005, %v2009
        %v2013 = vadd.f32 %v2005, %v2010
        %s2014 = sld [smem:[#allocation9 + $0x6d]]
        %v2015 = vstv %s2014
        %v2016 = vmul.f32 %v2015, %v808
        %v2017 = vmul.f32 %v2015, %v803
        %v2018 = vmul.f32 %v2015, %v804
        %v2019 = vadd.f32 %v2011, %v2016
        %v2020 = vadd.f32 %v2012, %v2017
        %v2021 = vadd.f32 %v2013, %v2018
        %s2022 = sld [smem:[#allocation9 + $0x6e]]
        %v2023 = vstv %s2022
        %v2024 = vmul.f32 %v2023, %v820
        %v2025 = vmul.f32 %v2023, %v822
        %v2026 = vmul.f32 %v2023, %v824
        %v2027 = vadd.f32 %v2019, %v2024
        %v2028 = vadd.f32 %v2020, %v2025
        %v2029 = vadd.f32 %v2021, %v2026
        %s2030 = sld [smem:[#allocation9 + $0x6f]]
        %v2031 = vstv %s2030
        %v2032 = vmul.f32 %v2031, %v829
        %v2033 = vmul.f32 %v2031, %v831
        %v2034 = vmul.f32 %v2031, %v833
        %v2035 = vadd.f32 %v2027, %v2032
        %v2036 = vadd.f32 %v2028, %v2033
        %v2037 = vadd.f32 %v2029, %v2034
        %s2038 = sld [smem:[#allocation9 + $0x70]]
        %v2039 = vstv %s2038
        %v2040 = vmul.f32 %v2039, %v550
        %v2041 = vmul.f32 %v2039, %v551
        %v2042 = vmul.f32 %v2039, %v552
        %v2043 = vadd.f32 %v2035, %v2040
        %v2044 = vadd.f32 %v2036, %v2041
        %v2045 = vadd.f32 %v2037, %v2042
        %s2046 = sld [smem:[#allocation9 + $0x71]]
        %v2047 = vstv %s2046
        %v2048 = vmul.f32 %v2047, %v838
        %v2049 = vmul.f32 %v2047, %v840
        %v2050 = vmul.f32 %v2047, %v842
        %v2051 = vadd.f32 %v2043, %v2048
        %v2052 = vadd.f32 %v2044, %v2049
        %v2053 = vadd.f32 %v2045, %v2050
        %s2054 = sld [smem:[#allocation9 + $0x72]]
        %v2055 = vstv %s2054
        %v2056 = vmul.f32 %v2055, %v858
        %v2057 = vmul.f32 %v2055, %v860
        %v2058 = vmul.f32 %v2055, %v862
        %v2059 = vadd.f32 %v2051, %v2056
        %v2060 = vadd.f32 %v2052, %v2057
        %v2061 = vadd.f32 %v2053, %v2058
        %s2062 = sld [smem:[#allocation9 + $0x73]]
        %v2063 = vstv %s2062
        %v2064 = vmul.f32 %v2063, %v848
        %v2065 = vmul.f32 %v2063, %v850
        %v2066 = vmul.f32 %v2063, %v855
        %v2067 = vadd.f32 %v2059, %v2064
        %v2068 = vadd.f32 %v2060, %v2065
        %v2069 = vadd.f32 %v2061, %v2066
        %s2070 = sld [smem:[#allocation9 + $0x74]]
        %v2071 = vstv %s2070
        %v2072 = vmul.f32 %v2071, %v867
        %v2073 = vmul.f32 %v2071, %v869
        %v2074 = vmul.f32 %v2071, %v871
        %v2075 = vadd.f32 %v2067, %v2072
        %v2076 = vadd.f32 %v2068, %v2073
        %v2077 = vadd.f32 %v2069, %v2074
        %s2078 = sld [smem:[#allocation9 + $0x75]]
        %v2079 = vstv %s2078
        %v2080 = vmul.f32 %v2079, %v890
        %v2081 = vmul.f32 %v2079, %v892
        %v2082 = vmul.f32 %v2079, %v894
        %v2083 = vadd.f32 %v2075, %v2080
        %v2084 = vadd.f32 %v2076, %v2081
        %v2085 = vadd.f32 %v2077, %v2082
        %s2086 = sld [smem:[#allocation9 + $0x76]]
        %v2087 = vstv %s2086
        %v2088 = vmul.f32 %v2087, %v887
        %v2089 = vmul.f32 %v2087, %v882
        %v2090 = vmul.f32 %v2087, %v883
        %v2091 = vadd.f32 %v2083, %v2088
        %v2092 = vadd.f32 %v2084, %v2089
        %v2093 = vadd.f32 %v2085, %v2090
        %s2094 = sld [smem:[#allocation9 + $0x77]]
        %v2095 = vstv %s2094
        %v2096 = vmul.f32 %v2095, %v899
        %v2097 = vmul.f32 %v2095, %v901
        %v2098 = vmul.f32 %v2095, %v903
        %v2099 = vadd.f32 %v2091, %v2096
        %v2100 = vadd.f32 %v2092, %v2097
        %v2101 = vadd.f32 %v2093, %v2098
        %s2102 = sld [smem:[#allocation9 + $0x78]]
        %v2103 = vstv %s2102
        %v2104 = vmul.f32 %v2103, %v908
        %v2105 = vmul.f32 %v2103, %v910
        %v2106 = vmul.f32 %v2103, %v912
        %v2107 = vadd.f32 %v2099, %v2104
        %v2108 = vadd.f32 %v2100, %v2105
        %v2109 = vadd.f32 %v2101, %v2106
        %s2110 = sld [smem:[#allocation9 + $0x79]]
        %v2111 = vstv %s2110
        %v2112 = vmul.f32 %v2111, %v631
        %v2113 = vmul.f32 %v2111, %v632
        %v2114 = vmul.f32 %v2111, %v633
        %v2115 = vadd.f32 %v2107, %v2112
        %v2116 = vadd.f32 %v2108, %v2113
        %v2117 = vadd.f32 %v2109, %v2114
        %s2118 = sld [smem:[#allocation9 + $0x7a]]
        %v2119 = vstv %s2118
        %v2120 = vmul.f32 %v2119, %v917
        %v2121 = vmul.f32 %v2119, %v919
        %v2122 = vmul.f32 %v2119, %v921
        %v2123 = vadd.f32 %v2115, %v2120
        %v2124 = vadd.f32 %v2116, %v2121
        %v2125 = vadd.f32 %v2117, %v2122
        %s2126 = sld [smem:[#allocation9 + $0x7b]]
        %v2127 = vstv %s2126
        %v2128 = vmul.f32 %v2127, %v937
        %v2129 = vmul.f32 %v2127, %v939
        %v2130 = vmul.f32 %v2127, %v941
        %v2131 = vadd.f32 %v2123, %v2128
        %v2132 = vadd.f32 %v2124, %v2129
        %v2133 = vadd.f32 %v2125, %v2130
        %s2134 = sld [smem:[#allocation9 + $0x7c]]
        %v2135 = vstv %s2134
        %v2136 = vmul.f32 %v2135, %v927
        %v2137 = vmul.f32 %v2135, %v929
        %v2138 = vmul.f32 %v2135, %v934
        %v2139 = vadd.f32 %v2131, %v2136
        %v2140 = vadd.f32 %v2132, %v2137
        %v2141 = vadd.f32 %v2133, %v2138
        %s2142 = sld [smem:[#allocation9 + $0x7d]]
        %v2143 = vstv %s2142
        %v2144 = vmul.f32 %v2143, %v946
        %v2145 = vmul.f32 %v2143, %v948
        %v2146 = vmul.f32 %v2143, %v950
        %v2147 = vadd.f32 %v2139, %v2144
        %v2148 = vadd.f32 %v2140, %v2145
        %v2149 = vadd.f32 %v2141, %v2146
        %s2150 = sld [smem:[#allocation9 + $0x7e]]
        %v2151 = vstv %s2150
        %v2152 = vmul.f32 %v2151, %v969
        %v2153 = vmul.f32 %v2151, %v971
        %v2154 = vmul.f32 %v2151, %v973
        %v2155 = vadd.f32 %v2147, %v2152
        %v2156 = vadd.f32 %v2148, %v2153
        %v2157 = vadd.f32 %v2149, %v2154
        %s2158 = sld [smem:[#allocation9 + $0x7f]]
        %v2159 = vstv %s2158
        %v2160 = vmul.f32 %v2159, %v966
        %v2161 = vmul.f32 %v2159, %v961
        %v2162 = vmul.f32 %v2159, %v962
        %v2163 = vadd.f32 %v2155, %v2160
        %v2164 = vadd.f32 %v2156, %v2161
        %v2165 = vadd.f32 %v2157, %v2162
        %s2166 = sld [smem:[#allocation9 + $0x80]]
        %v2167 = vstv %s2166
        %v2168 = vmul.f32 %v2167, %v978
        %v2169 = vmul.f32 %v2167, %v980
        %v2170 = vmul.f32 %v2167, %v982
        %v2171 = vadd.f32 %v2163, %v2168
        %v2172 = vadd.f32 %v2164, %v2169
        %v2173 = vadd.f32 %v2165, %v2170
        %s2174 = sld [smem:[#allocation9 + $0x81]]
        %v2175 = vstv %s2174
        %v2176 = vmul.f32 %v2175, %v987
        %v2177 = vmul.f32 %v2175, %v989
        %v2178 = vmul.f32 %v2175, %v991
        %v2179 = vadd.f32 %v2171, %v2176
        %v2180 = vadd.f32 %v2172, %v2177
        %v2181 = vadd.f32 %v2173, %v2178
        %s2182 = sld [smem:[#allocation9 + $0x82]]
        %v2183 = vstv %s2182
        %v2184 = vmul.f32 %v2183, %v712
        %v2185 = vmul.f32 %v2183, %v713
        %v2186 = vmul.f32 %v2183, %v714
        %v2187 = vadd.f32 %v2179, %v2184
        %v2188 = vadd.f32 %v2180, %v2185
        %v2189 = vadd.f32 %v2181, %v2186
        %s2190 = sld [smem:[#allocation9 + $0x83]]
        %v2191 = vstv %s2190
        %v2192 = vmul.f32 %v2191, %v996
        %v2193 = vmul.f32 %v2191, %v998
        %v2194 = vmul.f32 %v2191, %v1000
        %v2195 = vadd.f32 %v2187, %v2192
        %v2196 = vadd.f32 %v2188, %v2193
        %v2197 = vadd.f32 %v2189, %v2194
        %s2198 = sld [smem:[#allocation9 + $0x84]]
        %v2199 = vstv %s2198
        %v2200 = vmul.f32 %v2199, %v1016
        %v2201 = vmul.f32 %v2199, %v1018
        %v2202 = vmul.f32 %v2199, %v1020
        %v2203 = vadd.f32 %v2195, %v2200
        %v2204 = vadd.f32 %v2196, %v2201
        %v2205 = vadd.f32 %v2197, %v2202
        %s2206 = sld [smem:[#allocation9 + $0x85]]
        %v2207 = vstv %s2206
        %v2208 = vmul.f32 %v2207, %v1006
        %v2209 = vmul.f32 %v2207, %v1008
        %v2210 = vmul.f32 %v2207, %v1013
        %v2211 = vadd.f32 %v2203, %v2208
        %v2212 = vadd.f32 %v2204, %v2209
        %v2213 = vadd.f32 %v2205, %v2210
        %s2214 = sld [smem:[#allocation9 + $0x86]]
        %v2215 = vstv %s2214
        %v2216 = vmul.f32 %v2215, %v1025
        %v2217 = vmul.f32 %v2215, %v1027
        %v2218 = vmul.f32 %v2215, %v1029
        %v2219 = vadd.f32 %v2211, %v2216
        %v2220 = vadd.f32 %v2212, %v2217
        %v2221 = vadd.f32 %v2213, %v2218
        %s2222 = sld [smem:[#allocation9 + $0x87]]
        %v2223 = vstv %s2222
        %v2224 = vmul.f32 %v2223, %v1048
        %v2225 = vmul.f32 %v2223, %v1050
        %v2226 = vmul.f32 %v2223, %v1052
        %v2227 = vadd.f32 %v2219, %v2224
        %v2228 = vadd.f32 %v2220, %v2225
        %v2229 = vadd.f32 %v2221, %v2226
        %s2230 = sld [smem:[#allocation9 + $0x88]]
        %v2231 = vstv %s2230
        %v2232 = vmul.f32 %v2231, %v1045
        %v2233 = vmul.f32 %v2231, %v1040
        %v2234 = vmul.f32 %v2231, %v1041
        %v2235 = vadd.f32 %v2227, %v2232
        %v2236 = vadd.f32 %v2228, %v2233
        %v2237 = vadd.f32 %v2229, %v2234
        %s2238 = sld [smem:[#allocation9 + $0x89]]
        %v2239 = vstv %s2238
        %v2240 = vmul.f32 %v2239, %v1057
        %v2241 = vmul.f32 %v2239, %v1059
        %v2242 = vmul.f32 %v2239, %v1061
        %v2243 = vadd.f32 %v2235, %v2240
        %v2244 = vadd.f32 %v2236, %v2241
        %v2245 = vadd.f32 %v2237, %v2242
        %s2246 = sld [smem:[#allocation9 + $0x8a]]
        %v2247 = vstv %s2246
        %v2248 = vmul.f32 %v2247, %v1066
        %v2249 = vmul.f32 %v2247, %v1068
        %v2250 = vmul.f32 %v2247, %v1070
        %v2251 = vadd.f32 %v2243, %v2248
        %v2252 = vadd.f32 %v2244, %v2249
        %v2253 = vadd.f32 %v2245, %v2250
        %s2254 = sld [smem:[#allocation9 + $0x8b]]
        %v2255 = vstv %s2254
        %v2256 = vmul.f32 %v2255, %v793
        %v2257 = vmul.f32 %v2255, %v794
        %v2258 = vmul.f32 %v2255, %v795
        %v2259 = vadd.f32 %v2251, %v2256
        %v2260 = vadd.f32 %v2252, %v2257
        %v2261 = vadd.f32 %v2253, %v2258
        %s2262 = sld [smem:[#allocation9 + $0x8c]]
        %v2263 = vstv %s2262
        %v2264 = vmul.f32 %v2263, %v1075
        %v2265 = vmul.f32 %v2263, %v1077
        %v2266 = vmul.f32 %v2263, %v1079
        %v2267 = vadd.f32 %v2259, %v2264
        %v2268 = vadd.f32 %v2260, %v2265
        %v2269 = vadd.f32 %v2261, %v2266
        %s2270 = sld [smem:[#allocation9 + $0x8d]]
        %v2271 = vstv %s2270
        %v2272 = vmul.f32 %v2271, %v1095
        %v2273 = vmul.f32 %v2271, %v1097
        %v2274 = vmul.f32 %v2271, %v1099
        %v2275 = vadd.f32 %v2267, %v2272
        %v2276 = vadd.f32 %v2268, %v2273
        %v2277 = vadd.f32 %v2269, %v2274
        %s2278 = sld [smem:[#allocation9 + $0x8e]]
        %v2279 = vstv %s2278
        %v2280 = vmul.f32 %v2279, %v1085
        %v2281 = vmul.f32 %v2279, %v1087
        %v2282 = vmul.f32 %v2279, %v1092
        %v2283 = vadd.f32 %v2275, %v2280
        %v2284 = vadd.f32 %v2276, %v2281
        %v2285 = vadd.f32 %v2277, %v2282
        %s2286 = sld [smem:[#allocation9 + $0x8f]]
        %v2287 = vstv %s2286
        %v2288 = vmul.f32 %v2287, %v1104
        %v2289 = vmul.f32 %v2287, %v1106
        %v2290 = vmul.f32 %v2287, %v1108
        %v2291 = vadd.f32 %v2283, %v2288
        %v2292 = vadd.f32 %v2284, %v2289
        %v2293 = vadd.f32 %v2285, %v2290
        %v2294 = vmax.f32 %v2291, 0.0
        %v2295 = vmax.f32 %v2292, 0.0
        %v2296 = vmax.f32 %v2293, 0.0
        %v2297 = vmul.f32 %v2294, %v388
        %v2298 = vmul.f32 %v2295, %v389
        %v2299 = vmul.f32 %v2296, %v390
        %v2301 = vrot.slane %v1408, 7
        %v2305 = vrot.slane %v1406, 7
        %v2306 = vrot.slane %v1407, 7
        %v2307 = vsel %vm396, %v2305, %v2306
        %v2308 = vsel %vm396, %v2306, %v2301
        %v2312 = vsel %vm396, %v2301, %v2305
        %2314 = vrot.lane.b32.xlu0 %v2312, 1
        %v2315 = vpop.permute.xlu0 %2314
        %2316 = vrot.lane.b32.xlu0 %v2307, 1
        %v2317 = vpop.permute.xlu0 %2316
        %2318 = vrot.lane.b32.xlu0 %v2308, 1
        %v2319 = vpop.permute.xlu0 %2318
        %2323 = vrot.lane.b32.xlu0 %v2312, 127
        %v2324 = vpop.permute.xlu0 %2323
        %2325 = vrot.lane.b32.xlu0 %v2307, 127
        %v2326 = vpop.permute.xlu0 %2325
        %2327 = vrot.lane.b32.xlu0 %v2308, 127
        %v2328 = vpop.permute.xlu0 %2327
        %2332 = vrot.lane.b32.xlu0 %v1406, 1
        %v2333 = vpop.permute.xlu0 %2332
        %2334 = vrot.lane.b32.xlu0 %v1407, 1
        %v2335 = vpop.permute.xlu0 %2334
        %2336 = vrot.lane.b32.xlu0 %v1408, 1
        %v2337 = vpop.permute.xlu0 %2336
        %2341 = vrot.lane.b32.xlu0 %v1406, 127
        %v2342 = vpop.permute.xlu0 %2341
        %2343 = vrot.lane.b32.xlu0 %v1407, 127
        %v2344 = vpop.permute.xlu0 %2343
        %2345 = vrot.lane.b32.xlu0 %v1408, 127
        %v2346 = vpop.permute.xlu0 %2345
        %v2350 = vrot.slane %v1406, 1
        %v2351 = vrot.slane %v1407, 1
        %v2352 = vsel %vm442, %v2350, %v2351
        %v2353 = vrot.slane %v1408, 1
        %v2354 = vsel %vm442, %v2351, %v2353
        %v2359 = vsel %vm442, %v2353, %v2350
        %2361 = vrot.lane.b32.xlu0 %v2352, 1
        %v2362 = vpop.permute.xlu0 %2361
        %2363 = vrot.lane.b32.xlu0 %v2354, 1
        %v2364 = vpop.permute.xlu0 %2363
        %2365 = vrot.lane.b32.xlu0 %v2359, 1
        %v2366 = vpop.permute.xlu0 %2365
        %2370 = vrot.lane.b32.xlu0 %v2352, 127
        %v2371 = vpop.permute.xlu0 %2370
        %2372 = vrot.lane.b32.xlu0 %v2354, 127
        %v2373 = vpop.permute.xlu0 %2372
        %2374 = vrot.lane.b32.xlu0 %v2359, 127
        %v2375 = vpop.permute.xlu0 %2374
        %v2380 = vrot.slane %v1705, 7
        %v2384 = vrot.slane %v1703, 7
        %v2385 = vrot.slane %v1704, 7
        %v2386 = vsel %vm396, %v2384, %v2385
        %v2387 = vsel %vm396, %v2385, %v2380
        %v2391 = vsel %vm396, %v2380, %v2384
        %2393 = vrot.lane.b32.xlu0 %v2391, 1
        %v2394 = vpop.permute.xlu0 %2393
        %2395 = vrot.lane.b32.xlu0 %v2386, 1
        %v2396 = vpop.permute.xlu0 %2395
        %2397 = vrot.lane.b32.xlu0 %v2387, 1
        %v2398 = vpop.permute.xlu0 %2397
        %2402 = vrot.lane.b32.xlu0 %v2391, 127
        %v2403 = vpop.permute.xlu0 %2402
        %2404 = vrot.lane.b32.xlu0 %v2386, 127
        %v2405 = vpop.permute.xlu0 %2404
        %2406 = vrot.lane.b32.xlu0 %v2387, 127
        %v2407 = vpop.permute.xlu0 %2406
        %2411 = vrot.lane.b32.xlu0 %v1703, 1
        %v2412 = vpop.permute.xlu0 %2411
        %2413 = vrot.lane.b32.xlu0 %v1704, 1
        %v2414 = vpop.permute.xlu0 %2413
        %2415 = vrot.lane.b32.xlu0 %v1705, 1
        %v2416 = vpop.permute.xlu0 %2415
        %2420 = vrot.lane.b32.xlu0 %v1703, 127
        %v2421 = vpop.permute.xlu0 %2420
        %2422 = vrot.lane.b32.xlu0 %v1704, 127
        %v2423 = vpop.permute.xlu0 %2422
        %2424 = vrot.lane.b32.xlu0 %v1705, 127
        %v2425 = vpop.permute.xlu0 %2424
        %v2429 = vrot.slane %v1703, 1
        %v2430 = vrot.slane %v1704, 1
        %v2431 = vsel %vm442, %v2429, %v2430
        %v2432 = vrot.slane %v1705, 1
        %v2433 = vsel %vm442, %v2430, %v2432
        %v2438 = vsel %vm442, %v2432, %v2429
        %2440 = vrot.lane.b32.xlu0 %v2431, 1
        %v2441 = vpop.permute.xlu0 %2440
        %2442 = vrot.lane.b32.xlu0 %v2433, 1
        %v2443 = vpop.permute.xlu0 %2442
        %2444 = vrot.lane.b32.xlu0 %v2438, 1
        %v2445 = vpop.permute.xlu0 %2444
        %2449 = vrot.lane.b32.xlu0 %v2431, 127
        %v2450 = vpop.permute.xlu0 %2449
        %2451 = vrot.lane.b32.xlu0 %v2433, 127
        %v2452 = vpop.permute.xlu0 %2451
        %2453 = vrot.lane.b32.xlu0 %v2438, 127
        %v2454 = vpop.permute.xlu0 %2453
        %v2459 = vrot.slane %v2002, 7
        %v2463 = vrot.slane %v2000, 7
        %v2464 = vrot.slane %v2001, 7
        %v2465 = vsel %vm396, %v2463, %v2464
        %v2466 = vsel %vm396, %v2464, %v2459
        %v2470 = vsel %vm396, %v2459, %v2463
        %2472 = vrot.lane.b32.xlu0 %v2470, 1
        %v2473 = vpop.permute.xlu0 %2472
        %2474 = vrot.lane.b32.xlu0 %v2465, 1
        %v2475 = vpop.permute.xlu0 %2474
        %2476 = vrot.lane.b32.xlu0 %v2466, 1
        %v2477 = vpop.permute.xlu0 %2476
        %2481 = vrot.lane.b32.xlu0 %v2470, 127
        %v2482 = vpop.permute.xlu0 %2481
        %2483 = vrot.lane.b32.xlu0 %v2465, 127
        %v2484 = vpop.permute.xlu0 %2483
        %2485 = vrot.lane.b32.xlu0 %v2466, 127
        %v2486 = vpop.permute.xlu0 %2485
        %2490 = vrot.lane.b32.xlu0 %v2000, 1
        %v2491 = vpop.permute.xlu0 %2490
        %2492 = vrot.lane.b32.xlu0 %v2001, 1
        %v2493 = vpop.permute.xlu0 %2492
        %2494 = vrot.lane.b32.xlu0 %v2002, 1
        %v2495 = vpop.permute.xlu0 %2494
        %2499 = vrot.lane.b32.xlu0 %v2000, 127
        %v2500 = vpop.permute.xlu0 %2499
        %2501 = vrot.lane.b32.xlu0 %v2001, 127
        %v2502 = vpop.permute.xlu0 %2501
        %2503 = vrot.lane.b32.xlu0 %v2002, 127
        %v2504 = vpop.permute.xlu0 %2503
        %v2508 = vrot.slane %v2000, 1
        %v2509 = vrot.slane %v2001, 1
        %v2510 = vsel %vm442, %v2508, %v2509
        %v2511 = vrot.slane %v2002, 1
        %v2512 = vsel %vm442, %v2509, %v2511
        %v2517 = vsel %vm442, %v2511, %v2508
        %2519 = vrot.lane.b32.xlu0 %v2510, 1
        %v2520 = vpop.permute.xlu0 %2519
        %2521 = vrot.lane.b32.xlu0 %v2512, 1
        %v2522 = vpop.permute.xlu0 %2521
        %2523 = vrot.lane.b32.xlu0 %v2517, 1
        %v2524 = vpop.permute.xlu0 %2523
        %2528 = vrot.lane.b32.xlu0 %v2510, 127
        %v2529 = vpop.permute.xlu0 %2528
        %2530 = vrot.lane.b32.xlu0 %v2512, 127
        %v2531 = vpop.permute.xlu0 %2530
        %2532 = vrot.lane.b32.xlu0 %v2517, 127
        %v2533 = vpop.permute.xlu0 %2532
        %v2538 = vrot.slane %v2299, 7
        %v2542 = vrot.slane %v2297, 7
        %v2543 = vrot.slane %v2298, 7
        %v2544 = vsel %vm396, %v2542, %v2543
        %v2545 = vsel %vm396, %v2543, %v2538
        %v2549 = vsel %vm396, %v2538, %v2542
        %2551 = vrot.lane.b32.xlu0 %v2549, 1
        %v2552 = vpop.permute.xlu0 %2551
        %2553 = vrot.lane.b32.xlu0 %v2544, 1
        %v2554 = vpop.permute.xlu0 %2553
        %2555 = vrot.lane.b32.xlu0 %v2545, 1
        %v2556 = vpop.permute.xlu0 %2555
        %2560 = vrot.lane.b32.xlu0 %v2549, 127
        %v2561 = vpop.permute.xlu0 %2560
        %2562 = vrot.lane.b32.xlu0 %v2544, 127
        %v2563 = vpop.permute.xlu0 %2562
        %2564 = vrot.lane.b32.xlu0 %v2545, 127
        %v2565 = vpop.permute.xlu0 %2564
        %2569 = vrot.lane.b32.xlu0 %v2297, 1
        %v2570 = vpop.permute.xlu0 %2569
        %2571 = vrot.lane.b32.xlu0 %v2298, 1
        %v2572 = vpop.permute.xlu0 %2571
        %2573 = vrot.lane.b32.xlu0 %v2299, 1
        %v2574 = vpop.permute.xlu0 %2573
        %2578 = vrot.lane.b32.xlu0 %v2297, 127
        %v2579 = vpop.permute.xlu0 %2578
        %2580 = vrot.lane.b32.xlu0 %v2298, 127
        %v2581 = vpop.permute.xlu0 %2580
        %2582 = vrot.lane.b32.xlu0 %v2299, 127
        %v2583 = vpop.permute.xlu0 %2582
        %v2587 = vrot.slane %v2297, 1
        %v2588 = vrot.slane %v2298, 1
        %v2589 = vsel %vm442, %v2587, %v2588
        %v2590 = vrot.slane %v2299, 1
        %v2591 = vsel %vm442, %v2588, %v2590
        %v2596 = vsel %vm442, %v2590, %v2587
        %2598 = vrot.lane.b32.xlu0 %v2589, 1
        %v2599 = vpop.permute.xlu0 %2598
        %2600 = vrot.lane.b32.xlu0 %v2591, 1
        %v2601 = vpop.permute.xlu0 %2600
        %2602 = vrot.lane.b32.xlu0 %v2596, 1
        %v2603 = vpop.permute.xlu0 %2602
        %2607 = vrot.lane.b32.xlu0 %v2589, 127
        %v2608 = vpop.permute.xlu0 %2607
        %2609 = vrot.lane.b32.xlu0 %v2591, 127
        %v2610 = vpop.permute.xlu0 %2609
        %2611 = vrot.lane.b32.xlu0 %v2596, 127
        %v2612 = vpop.permute.xlu0 %2611
        %s2616 = sld [smem:[#allocation2]]
        %v2617 = vstv %s2616
        %v2618 = vadd.f32 %v2617, 0.0
        %s2619 = sld [smem:[#allocation12]]
        %v2620 = vstv %s2619
        %v2621 = vmul.f32 %v2620, %v2315
        %v2622 = vmul.f32 %v2620, %v2317
        %v2623 = vmul.f32 %v2620, %v2319
        %v2624 = vadd.f32 %v2618, %v2621
        %v2625 = vadd.f32 %v2618, %v2622
        %v2626 = vadd.f32 %v2618, %v2623
        %s2627 = sld [smem:[#allocation12 + $0x1]]
        %v2628 = vstv %s2627
        %v2629 = vmul.f32 %v2628, %v2312
        %v2630 = vmul.f32 %v2628, %v2307
        %v2631 = vmul.f32 %v2628, %v2308
        %v2632 = vadd.f32 %v2624, %v2629
        %v2633 = vadd.f32 %v2625, %v2630
        %v2634 = vadd.f32 %v2626, %v2631
        %s2635 = sld [smem:[#allocation12 + $0x2]]
        %v2636 = vstv %s2635
        %v2637 = vmul.f32 %v2636, %v2324
        %v2638 = vmul.f32 %v2636, %v2326
        %v2639 = vmul.f32 %v2636, %v2328
        %v2640 = vadd.f32 %v2632, %v2637
        %v2641 = vadd.f32 %v2633, %v2638
        %v2642 = vadd.f32 %v2634, %v2639
        %s2643 = sld [smem:[#allocation12 + $0x3]]
        %v2644 = vstv %s2643
        %v2645 = vmul.f32 %v2644, %v2333
        %v2646 = vmul.f32 %v2644, %v2335
        %v2647 = vmul.f32 %v2644, %v2337
        %v2648 = vadd.f32 %v2640, %v2645
        %v2649 = vadd.f32 %v2641, %v2646
        %v2650 = vadd.f32 %v2642, %v2647
        %s2651 = sld [smem:[#allocation12 + $0x4]]
        %v2652 = vstv %s2651
        %v2653 = vmul.f32 %v2652, %v1406
        %v2654 = vmul.f32 %v2652, %v1407
        %v2655 = vmul.f32 %v2652, %v1408
        %v2656 = vadd.f32 %v2648, %v2653
        %v2657 = vadd.f32 %v2649, %v2654
        %v2658 = vadd.f32 %v2650, %v2655
        %s2659 = sld [smem:[#allocation12 + $0x5]]
        %v2660 = vstv %s2659
        %v2661 = vmul.f32 %v2660, %v2342
        %v2662 = vmul.f32 %v2660, %v2344
        %v2663 = vmul.f32 %v2660, %v2346
        %v2664 = vadd.f32 %v2656, %v2661
        %v2665 = vadd.f32 %v2657, %v2662
        %v2666 = vadd.f32 %v2658, %v2663
        %s2667 = sld [smem:[#allocation12 + $0x6]]
        %v2668 = vstv %s2667
        %v2669 = vmul.f32 %v2668, %v2362
        %v2670 = vmul.f32 %v2668, %v2364
        %v2671 = vmul.f32 %v2668, %v2366
        %v2672 = vadd.f32 %v2664, %v2669
        %v2673 = vadd.f32 %v2665, %v2670
        %v2674 = vadd.f32 %v2666, %v2671
        %s2675 = sld [smem:[#allocation12 + $0x7]]
        %v2676 = vstv %s2675
        %v2677 = vmul.f32 %v2676, %v2352
        %v2678 = vmul.f32 %v2676, %v2354
        %v2679 = vmul.f32 %v2676, %v2359
        %v2680 = vadd.f32 %v2672, %v2677
        %v2681 = vadd.f32 %v2673, %v2678
        %v2682 = vadd.f32 %v2674, %v2679
        %s2683 = sld [smem:[#allocation12 + $0x8]]
        %v2684 = vstv %s2683
        %v2685 = vmul.f32 %v2684, %v2371
        %v2686 = vmul.f32 %v2684, %v2373
        %v2687 = vmul.f32 %v2684, %v2375
        %v2688 = vadd.f32 %v2680, %v2685
        %v2689 = vadd.f32 %v2681, %v2686
        %v2690 = vadd.f32 %v2682, %v2687
        %s2691 = sld [smem:[#allocation12 + $0x9]]
        %v2692 = vstv %s2691
        %v2693 = vmul.f32 %v2692, %v2394
        %v2694 = vmul.f32 %v2692, %v2396
        %v2695 = vmul.f32 %v2692, %v2398
        %v2696 = vadd.f32 %v2688, %v2693
        %v2697 = vadd.f32 %v2689, %v2694
        %v2698 = vadd.f32 %v2690, %v2695
        %s2699 = sld [smem:[#allocation12 + $0xa]]
        %v2700 = vstv %s2699
        %v2701 = vmul.f32 %v2700, %v2391
        %v2702 = vmul.f32 %v2700, %v2386
        %v2703 = vmul.f32 %v2700, %v2387
        %v2704 = vadd.f32 %v2696, %v2701
        %v2705 = vadd.f32 %v2697, %v2702
        %v2706 = vadd.f32 %v2698, %v2703
        %s2707 = sld [smem:[#allocation12 + $0xb]]
        %v2708 = vstv %s2707
        %v2709 = vmul.f32 %v2708, %v2403
        %v2710 = vmul.f32 %v2708, %v2405
        %v2711 = vmul.f32 %v2708, %v2407
        %v2712 = vadd.f32 %v2704, %v2709
        %v2713 = vadd.f32 %v2705, %v2710
        %v2714 = vadd.f32 %v2706, %v2711
        %s2715 = sld [smem:[#allocation12 + $0xc]]
        %v2716 = vstv %s2715
        %v2717 = vmul.f32 %v2716, %v2412
        %v2718 = vmul.f32 %v2716, %v2414
        %v2719 = vmul.f32 %v2716, %v2416
        %v2720 = vadd.f32 %v2712, %v2717
        %v2721 = vadd.f32 %v2713, %v2718
        %v2722 = vadd.f32 %v2714, %v2719
        %s2723 = sld [smem:[#allocation12 + $0xd]]
        %v2724 = vstv %s2723
        %v2725 = vmul.f32 %v2724, %v1703
        %v2726 = vmul.f32 %v2724, %v1704
        %v2727 = vmul.f32 %v2724, %v1705
        %v2728 = vadd.f32 %v2720, %v2725
        %v2729 = vadd.f32 %v2721, %v2726
        %v2730 = vadd.f32 %v2722, %v2727
        %s2731 = sld [smem:[#allocation12 + $0xe]]
        %v2732 = vstv %s2731
        %v2733 = vmul.f32 %v2732, %v2421
        %v2734 = vmul.f32 %v2732, %v2423
        %v2735 = vmul.f32 %v2732, %v2425
        %v2736 = vadd.f32 %v2728, %v2733
        %v2737 = vadd.f32 %v2729, %v2734
        %v2738 = vadd.f32 %v2730, %v2735
        %s2739 = sld [smem:[#allocation12 + $0xf]]
        %v2740 = vstv %s2739
        %v2741 = vmul.f32 %v2740, %v2441
        %v2742 = vmul.f32 %v2740, %v2443
        %v2743 = vmul.f32 %v2740, %v2445
        %v2744 = vadd.f32 %v2736, %v2741
        %v2745 = vadd.f32 %v2737, %v2742
        %v2746 = vadd.f32 %v2738, %v2743
        %s2747 = sld [smem:[#allocation12 + $0x10]]
        %v2748 = vstv %s2747
        %v2749 = vmul.f32 %v2748, %v2431
        %v2750 = vmul.f32 %v2748, %v2433
        %v2751 = vmul.f32 %v2748, %v2438
        %v2752 = vadd.f32 %v2744, %v2749
        %v2753 = vadd.f32 %v2745, %v2750
        %v2754 = vadd.f32 %v2746, %v2751
        %s2755 = sld [smem:[#allocation12 + $0x11]]
        %v2756 = vstv %s2755
        %v2757 = vmul.f32 %v2756, %v2450
        %v2758 = vmul.f32 %v2756, %v2452
        %v2759 = vmul.f32 %v2756, %v2454
        %v2760 = vadd.f32 %v2752, %v2757
        %v2761 = vadd.f32 %v2753, %v2758
        %v2762 = vadd.f32 %v2754, %v2759
        %s2763 = sld [smem:[#allocation12 + $0x12]]
        %v2764 = vstv %s2763
        %v2765 = vmul.f32 %v2764, %v2473
        %v2766 = vmul.f32 %v2764, %v2475
        %v2767 = vmul.f32 %v2764, %v2477
        %v2768 = vadd.f32 %v2760, %v2765
        %v2769 = vadd.f32 %v2761, %v2766
        %v2770 = vadd.f32 %v2762, %v2767
        %s2771 = sld [smem:[#allocation12 + $0x13]]
        %v2772 = vstv %s2771
        %v2773 = vmul.f32 %v2772, %v2470
        %v2774 = vmul.f32 %v2772, %v2465
        %v2775 = vmul.f32 %v2772, %v2466
        %v2776 = vadd.f32 %v2768, %v2773
        %v2777 = vadd.f32 %v2769, %v2774
        %v2778 = vadd.f32 %v2770, %v2775
        %s2779 = sld [smem:[#allocation12 + $0x14]]
        %v2780 = vstv %s2779
        %v2781 = vmul.f32 %v2780, %v2482
        %v2782 = vmul.f32 %v2780, %v2484
        %v2783 = vmul.f32 %v2780, %v2486
        %v2784 = vadd.f32 %v2776, %v2781
        %v2785 = vadd.f32 %v2777, %v2782
        %v2786 = vadd.f32 %v2778, %v2783
        %s2787 = sld [smem:[#allocation12 + $0x15]]
        %v2788 = vstv %s2787
        %v2789 = vmul.f32 %v2788, %v2491
        %v2790 = vmul.f32 %v2788, %v2493
        %v2791 = vmul.f32 %v2788, %v2495
        %v2792 = vadd.f32 %v2784, %v2789
        %v2793 = vadd.f32 %v2785, %v2790
        %v2794 = vadd.f32 %v2786, %v2791
        %s2795 = sld [smem:[#allocation12 + $0x16]]
        %v2796 = vstv %s2795
        %v2797 = vmul.f32 %v2796, %v2000
        %v2798 = vmul.f32 %v2796, %v2001
        %v2799 = vmul.f32 %v2796, %v2002
        %v2800 = vadd.f32 %v2792, %v2797
        %v2801 = vadd.f32 %v2793, %v2798
        %v2802 = vadd.f32 %v2794, %v2799
        %s2803 = sld [smem:[#allocation12 + $0x17]]
        %v2804 = vstv %s2803
        %v2805 = vmul.f32 %v2804, %v2500
        %v2806 = vmul.f32 %v2804, %v2502
        %v2807 = vmul.f32 %v2804, %v2504
        %v2808 = vadd.f32 %v2800, %v2805
        %v2809 = vadd.f32 %v2801, %v2806
        %v2810 = vadd.f32 %v2802, %v2807
        %s2811 = sld [smem:[#allocation12 + $0x18]]
        %v2812 = vstv %s2811
        %v2813 = vmul.f32 %v2812, %v2520
        %v2814 = vmul.f32 %v2812, %v2522
        %v2815 = vmul.f32 %v2812, %v2524
        %v2816 = vadd.f32 %v2808, %v2813
        %v2817 = vadd.f32 %v2809, %v2814
        %v2818 = vadd.f32 %v2810, %v2815
        %s2819 = sld [smem:[#allocation12 + $0x19]]
        %v2820 = vstv %s2819
        %v2821 = vmul.f32 %v2820, %v2510
        %v2822 = vmul.f32 %v2820, %v2512
        %v2823 = vmul.f32 %v2820, %v2517
        %v2824 = vadd.f32 %v2816, %v2821
        %v2825 = vadd.f32 %v2817, %v2822
        %v2826 = vadd.f32 %v2818, %v2823
        %s2827 = sld [smem:[#allocation12 + $0x1a]]
        %v2828 = vstv %s2827
        %v2829 = vmul.f32 %v2828, %v2529
        %v2830 = vmul.f32 %v2828, %v2531
        %v2831 = vmul.f32 %v2828, %v2533
        %v2832 = vadd.f32 %v2824, %v2829
        %v2833 = vadd.f32 %v2825, %v2830
        %v2834 = vadd.f32 %v2826, %v2831
        %s2835 = sld [smem:[#allocation12 + $0x1b]]
        %v2836 = vstv %s2835
        %v2837 = vmul.f32 %v2836, %v2552
        %v2838 = vmul.f32 %v2836, %v2554
        %v2839 = vmul.f32 %v2836, %v2556
        %v2840 = vadd.f32 %v2832, %v2837
        %v2841 = vadd.f32 %v2833, %v2838
        %v2842 = vadd.f32 %v2834, %v2839
        %s2843 = sld [smem:[#allocation12 + $0x1c]]
        %v2844 = vstv %s2843
        %v2845 = vmul.f32 %v2844, %v2549
        %v2846 = vmul.f32 %v2844, %v2544
        %v2847 = vmul.f32 %v2844, %v2545
        %v2848 = vadd.f32 %v2840, %v2845
        %v2849 = vadd.f32 %v2841, %v2846
        %v2850 = vadd.f32 %v2842, %v2847
        %s2851 = sld [smem:[#allocation12 + $0x1d]]
        %v2852 = vstv %s2851
        %v2853 = vmul.f32 %v2852, %v2561
        %v2854 = vmul.f32 %v2852, %v2563
        %v2855 = vmul.f32 %v2852, %v2565
        %v2856 = vadd.f32 %v2848, %v2853
        %v2857 = vadd.f32 %v2849, %v2854
        %v2858 = vadd.f32 %v2850, %v2855
        %s2859 = sld [smem:[#allocation12 + $0x1e]]
        %v2860 = vstv %s2859
        %v2861 = vmul.f32 %v2860, %v2570
        %v2862 = vmul.f32 %v2860, %v2572
        %v2863 = vmul.f32 %v2860, %v2574
        %v2864 = vadd.f32 %v2856, %v2861
        %v2865 = vadd.f32 %v2857, %v2862
        %v2866 = vadd.f32 %v2858, %v2863
        %s2867 = sld [smem:[#allocation12 + $0x1f]]
        %v2868 = vstv %s2867
        %v2869 = vmul.f32 %v2868, %v2297
        %v2870 = vmul.f32 %v2868, %v2298
        %v2871 = vmul.f32 %v2868, %v2299
        %v2872 = vadd.f32 %v2864, %v2869
        %v2873 = vadd.f32 %v2865, %v2870
        %v2874 = vadd.f32 %v2866, %v2871
        %s2875 = sld [smem:[#allocation12 + $0x20]]
        %v2876 = vstv %s2875
        %v2877 = vmul.f32 %v2876, %v2579
        %v2878 = vmul.f32 %v2876, %v2581
        %v2879 = vmul.f32 %v2876, %v2583
        %v2880 = vadd.f32 %v2872, %v2877
        %v2881 = vadd.f32 %v2873, %v2878
        %v2882 = vadd.f32 %v2874, %v2879
        %s2883 = sld [smem:[#allocation12 + $0x21]]
        %v2884 = vstv %s2883
        %v2885 = vmul.f32 %v2884, %v2599
        %v2886 = vmul.f32 %v2884, %v2601
        %v2887 = vmul.f32 %v2884, %v2603
        %v2888 = vadd.f32 %v2880, %v2885
        %v2889 = vadd.f32 %v2881, %v2886
        %v2890 = vadd.f32 %v2882, %v2887
        %s2891 = sld [smem:[#allocation12 + $0x22]]
        %v2892 = vstv %s2891
        %v2893 = vmul.f32 %v2892, %v2589
        %v2894 = vmul.f32 %v2892, %v2591
        %v2895 = vmul.f32 %v2892, %v2596
        %v2896 = vadd.f32 %v2888, %v2893
        %v2897 = vadd.f32 %v2889, %v2894
        %v2898 = vadd.f32 %v2890, %v2895
        %s2899 = sld [smem:[#allocation12 + $0x23]]
        %v2900 = vstv %s2899
        %v2901 = vmul.f32 %v2900, %v2608
        %v2902 = vmul.f32 %v2900, %v2610
        %v2903 = vmul.f32 %v2900, %v2612
        %v2904 = vadd.f32 %v2896, %v2901
        %v2905 = vadd.f32 %v2897, %v2902
        %v2906 = vadd.f32 %v2898, %v2903
        %v2907 = vmax.f32 %v2904, 0.0
        %v2908 = vmax.f32 %v2905, 0.0
        %v2909 = vmax.f32 %v2906, 0.0
        %v2910 = vadd.f32 %v2907, %v362
        %v2911 = vadd.f32 %v2908, %v363
        %v2912 = vadd.f32 %v2909, %v364
        %2913 = vst [vmem:[%s361] sm:$0xff] %v2910
        %2914 = vst [vmem:[%s361 + $0x8] sm:$0xff] %v2911
        %2915 = vst [vmem:[%s361 + $0x10] sm:$0xff] %v2912
        %s2916 = sand.u32 %s188, 1
        %s2917 = scalar_lea.sflag [#allocation5], %s2916
        %s2918 = sand.u32 %s188, 1
        %s2919 = smul.addr %s2918, 24
        %s2920 = scalar_lea.vmem [#allocation14], %s2919
        // Predicated region
        $region73: #{tpu_custom_call.1} parent=47 // pred_check
          %p2921 = pneg %p198
        $region74: #{tpu_custom_call.1} parent=47 // pred_check_branch
          %2923 = sbr.rel (%p2921) target = $region76
        $region75: #{tpu_custom_call.1} parent=47 // pred_region
          %s2925 = ssub.s32 384, 384
          %2926 = vsyncadd %s2917, %s2925
          %s2927 = smul.addr %s28, 3
          %s2928 = smul.addr %s2927, 128
          %s2929 = scalar_lea.hbm %s7, %s2928
          %s2930 = sshll.u32 %s2920, 4
          %s2931 = int_to_ptr.vmem [resolvable:$true] %s2930
          %2936 = dma.vmem_to_hbm [thread:$0]  %s2931, 384, %s2929, %s2917, 128, 128, 8
        $region76: #{tpu_custom_call.1} parent=47 // pred_fallthru
          _
      $region48: #{tpu_custom_call.1} parent=5 // pred_fallthru
        _
      %p2937 = scmp.le.s32.totalorder 2, %s23
      // Predicated region
      $region77: #{tpu_custom_call.1} parent=5 // pred_check
        %p2938 = pneg %p2937
      $region78: #{tpu_custom_call.1} parent=5 // pred_check_branch
        %2940 = sbr.rel (%p2938) target = $region80
      $region79: #{tpu_custom_call.1} parent=5 // pred_region
        %s2941 = ssub.s32 %s23, 2
        // Predicated region
        $region81: #{tpu_custom_call.1} parent=79 // pred_check
          %p2942 = pneg %p204
        $region82: #{tpu_custom_call.1} parent=79 // pred_check_branch
          %2944 = sbr.rel (%p2942) target = $region84
        $region83: #{tpu_custom_call.1} parent=79 // pred_region
          %s2945 = sand.u32 %s189, 1
          %s2946 = scalar_lea.sflag [#allocation5], %s2945
          %s2947 = sand.u32 %s189, 1
          %s2948 = smul.addr %s2947, 24
          %s2949 = scalar_lea.vmem [#allocation14], %s2948
          %2950 = dma.done %s2946, 384
        $region84: #{tpu_custom_call.1} parent=79 // pred_fallthru
          _
      $region80: #{tpu_custom_call.1} parent=5 // pred_fallthru
        _
    $region6: #{tpu_custom_call.1} parent=1 // loop_footer
      %s27 = sadd.s32 1, %s23
    $region7: #{tpu_custom_call.1} parent=1 // loop_footer_branch
      %22 = sbr.rel target = $region3
    $region8: #{tpu_custom_call.1} parent=1 // loop_exit
      _
    %2951 = vsyncpa [#allocation4], 1
    %s2952 = scalar_lea.sflag [#allocation4], 1
    %2953 = vsyncpa %s2952, 1
    %2954 = vsyncpa [#allocation5], 1
    %s2955 = scalar_lea.sflag [#allocation5], 1
    %2956 = vsyncpa %s2955, 1
    %2957 = vsyncpa [#allocation6], 1
    %s2958 = scalar_lea.sflag [#allocation6], 1
    %2959 = vsyncpa %s2958, 1
    %2960 = vsyncpa [#allocation8], 1
    %2961 = vsyncpa [#allocation11], 1

</llo_original>
